<compile_context>
chip_gen: v7x
topology: tpu7x:2x2x1
jax: 0.10.0
libtpu: 0.0.40
codegen_flags: <defaults>
</compile_context>

<pallas_src>
import numpy as np
import jax
import jax.numpy as jnp
from jax import lax
from jax.experimental import pallas as pl
from jax.experimental.pallas import tpu as pltpu


# ---------------------------------------------------------------------------
# Tile-size selection: largest divisor of H whose per-step working set fits a
# VMEM budget; prefer >= 2 row tiles per image (v7x megacore balance).
# ---------------------------------------------------------------------------
def _pick_row_tile(H, W, cin, cmid, cout, budget_bytes=2 * 1024 * 1024):
    def step_bytes(th):
        s_in = (th + 4) * (W + 2) * cin * 2          # input halo tile (bf16)
        s_c1 = (th + 2) * (W + 2) * cmid * 2         # conv1 window scratch
        s_k1 = (th + 2) * W * 9 * cin * 2            # im2col 1 (bf16)
        s_k2 = th * W * 9 * cmid * 2                 # im2col 2 (bf16)
        s_out = 4 * cout * th * W * 4                # output tile (f32)
        return 2 * (s_in + s_out) + s_c1 + s_k1 + s_k2   # 2x double buffering

    divisors = [t for t in range(1, H + 1) if H % t == 0]
    fitting = [t for t in divisors if step_bytes(t) <= budget_bytes] or [1]
    best = max(fitting)
    if best == H and H > 1:
        smaller = [t for t in fitting if t <= H // 2]
        if smaller and max(smaller) * 8 >= H:      # don't collapse to tiny tiles
            best = max(smaller)
    return best


# ---------------------------------------------------------------------------
# Fused kernel: conv3x3+ReLU -> conv3x3+ReLU -> ConvTranspose2d(2,2,s=2)
# ---------------------------------------------------------------------------
def _make_fused_kernel(TH, W, Cin, Cmid, Cout, n_tiles):
    TH2 = TH + 2   # conv1 rows computed per tile (one halo row each side)

    def kernel(x_ref, w1_ref, b1_ref, w2_ref, b2_ref, wu_ref, bu_ref,
               o_ref, c1p_ref, col1_ref, col2_ref):
        # x_ref : (1, TH+4, W+2, Cin) bf16 halo tile (input reflect-padded,
        #         boundary rows duplicated by the wrapper -> uniform indexing)
        # o_ref : (1, 4*Cout, TH*W)   f32, rows packed (ky, kx, cout)

        # ---- conv1 (3x3 'same', reflect) + ReLU over TH+2 rows --------------
        for t in range(9):
            dy, dx = t // 3, t % 3
            col1_ref[:, t * Cin:(t + 1) * Cin] = (
                x_ref[0, dy:dy + TH2, dx:dx + W, :].reshape(TH2 * W, Cin))
        c1 = jnp.dot(col1_ref[...], w1_ref[...],
                     preferred_element_type=jnp.float32)            # (TH2*W, Cmid)
        c1 = jnp.maximum(c1 + b1_ref[...], 0.0).astype(jnp.bfloat16)
        c1 = c1.reshape(TH2, W, Cmid)

        # ---- build conv2's input window: conv1 output, reflect-padded -------
        j = pl.program_id(0) % n_tiles
        c1p_ref[:, 1:W + 1, :] = c1
        # reflect the conv1-output ROWS at the image top / bottom only
        @pl.when(j == 0)
        def _():
            c1p_ref[0:1, 1:W + 1, :] = c1[2:3]            # conv1 row -1 == row 1
        @pl.when(j == n_tiles - 1)
        def _():
            c1p_ref[TH2 - 1:TH2, 1:W + 1, :] = c1[TH - 1:TH]   # row H == row H-2
        # reflect the conv1-output COLUMNS (every tile)
        c1p_ref[:, 0:1, :] = c1p_ref[:, 2:3, :]
        c1p_ref[:, W + 1:W + 2, :] = c1p_ref[:, W - 1:W, :]

        # ---- conv2 (3x3 'same', reflect) + ReLU over TH rows ----------------
        for t in range(9):
            dy, dx = t // 3, t % 3
            col2_ref[:, t * Cmid:(t + 1) * Cmid] = (
                c1p_ref[dy:dy + TH, dx:dx + W, :].reshape(TH * W, Cmid))
        c2 = jnp.dot(col2_ref[...], w2_ref[...],
                     preferred_element_type=jnp.float32)            # (TH*W, Cmid)
        c2 = jnp.maximum(c2 + b2_ref[...], 0.0).astype(jnp.bfloat16)

        # ---- ConvTranspose2d(2,2,stride=2): one lane-dense nt matmul --------
        acc = lax.dot_general(wu_ref[...], c2,
                              dimension_numbers=(((1,), (1,)), ((), ())),
                              preferred_element_type=jnp.float32)   # (4Cout, TH*W)
        o_ref[0] = acc + bu_ref[...]

    return kernel


# ---------------------------------------------------------------------------
# Wrapper: NCHW in / NCHW out, single fused pallas_call over row tiles.
# ---------------------------------------------------------------------------
def up_forward(params, x_nchw):
    w1, b1 = params["w1"], params["b1"]
    w2, b2 = params["w2"], params["b2"]
    wu, bu = params["wu"], params["bu"]

    B, Cin, H, W = x_nchw.shape
    Cmid = w1.shape[0]
    Cout = wu.shape[1]

    TH = _pick_row_tile(H, W, Cin, Cmid, Cout)
    n = H // TH

    # NCHW -> NHWC, bf16, reflect pad by 1 (conv1's 'same' reflect padding).
    x = jnp.transpose(x_nchw, (0, 2, 3, 1)).astype(jnp.bfloat16)
    xp = jnp.pad(x, ((0, 0), (1, 1), (1, 1), (0, 0)), mode="reflect")

    # Overlapping halo row tiles: tile j row t -> xp row clip(j*TH - 1 + t).
    # Clipped (duplicated) boundary rows give garbage conv1 halo rows that are
    # replaced in-kernel by the proper reflection, so all tiles index uniformly.
    # TODO(synk): move these overlapping windows into the BlockSpec to drop
    # this wrapper-side gather of the (small, Cin-channel) input.
    row_idx = np.clip(np.arange(n)[:, None] * TH - 1
                      + np.arange(TH + 4)[None, :], 0, H + 1)       # (n, TH+4)
    tiles = xp[:, row_idx].reshape(B * n, TH + 4, W + 2, Cin)

    # Packed bf16 MXU weights, f32 biases.
    w1p = jnp.transpose(w1, (2, 3, 1, 0)).reshape(9 * Cin, Cmid).astype(jnp.bfloat16)
    w2p = jnp.transpose(w2, (2, 3, 1, 0)).reshape(9 * Cmid, Cmid).astype(jnp.bfloat16)
    wup = jnp.transpose(wu, (2, 3, 1, 0)).reshape(4 * Cout, Cmid).astype(jnp.bfloat16)
    b1p = b1.reshape(1, Cmid).astype(jnp.float32)
    b2p = b2.reshape(1, Cmid).astype(jnp.float32)
    bup = jnp.tile(bu, 4).reshape(4 * Cout, 1).astype(jnp.float32)

    flops = 2 * B * H * W * (9 * Cin * Cmid + 9 * Cmid * Cmid + Cmid * 4 * Cout)
    bytes_accessed = (tiles.size * 2 + w1p.size * 2 + w2p.size * 2 + wup.size * 2
                      + (b1p.size + b2p.size + bup.size) * 4
                      + B * n * 4 * Cout * TH * W * 4)
    cost = pl.CostEstimate(flops=flops, transcendentals=0,
                           bytes_accessed=bytes_accessed)

    kernel = _make_fused_kernel(TH, W, Cin, Cmid, Cout, n)

    y = pl.pallas_call(
        kernel,
        out_shape=jax.ShapeDtypeStruct((B * n, 4 * Cout, TH * W), jnp.float32),
        grid=(B * n,),
        in_specs=[
            pl.BlockSpec((1, TH + 4, W + 2, Cin), lambda i: (i, 0, 0, 0)),
            pl.BlockSpec((9 * Cin, Cmid), lambda i: (0, 0)),
            pl.BlockSpec((1, Cmid), lambda i: (0, 0)),
            pl.BlockSpec((9 * Cmid, Cmid), lambda i: (0, 0)),
            pl.BlockSpec((1, Cmid), lambda i: (0, 0)),
            pl.BlockSpec((4 * Cout, Cmid), lambda i: (0, 0)),
            pl.BlockSpec((4 * Cout, 1), lambda i: (0, 0)),
        ],
        out_specs=pl.BlockSpec((1, 4 * Cout, TH * W), lambda i: (i, 0, 0)),
        scratch_shapes=[
            pltpu.VMEM((TH + 2, W + 2, Cmid), jnp.bfloat16),   # conv1 window
            pltpu.VMEM(((TH + 2) * W, 9 * Cin), jnp.bfloat16),  # im2col conv1
            pltpu.VMEM((TH * W, 9 * Cmid), jnp.bfloat16),       # im2col conv2
        ],
        compiler_params=pltpu.CompilerParams(
            dimension_semantics=("parallel",),
            vmem_limit_bytes=32 * 1024 * 1024),
        cost_estimate=cost,
    )(tiles, w1p, b1p, w2p, b2p, wup, bup)

    # Sub-pixel interleave (ky, kx) + NCHW in ONE rearrangement.
    # TODO(synk): write NCHW (Cout, 2*TH, 2*W) blocks in-kernel to remove this
    # last HBM pass over the output tensor.
    y = y.reshape(B, n, 2, 2, Cout, TH, W)
    y = jnp.transpose(y, (0, 4, 1, 5, 2, 6, 3)).reshape(B, Cout, 2 * H, 2 * W)
    return y


# ---------------------------------------------------------------------------
# Parameters (matching the PyTorch module layouts) and a pure-JAX reference.
# ---------------------------------------------------------------------------
def init_params(key, c_in, c_mid, c_out):
    ks = jax.random.split(key, 6)
    s = 0.1
    return {
        "w1": s * jax.random.normal(ks[0], (c_mid, c_in, 3, 3), jnp.float32),
        "b1": s * jax.random.normal(ks[1], (c_mid,), jnp.float32),
        "w2": s * jax.random.normal(ks[2], (c_mid, c_mid, 3, 3), jnp.float32),
        "b2": s * jax.random.normal(ks[3], (c_mid,), jnp.float32),
        "wu": s * jax.random.normal(ks[4], (c_mid, c_out, 2, 2), jnp.float32),
        "bu": s * jax.random.normal(ks[5], (c_out,), jnp.float32),
    }


def _ref_conv3x3_relu(x, w_oihw, b):
    xp = jnp.pad(x, ((0, 0), (1, 1), (1, 1), (0, 0)), mode="reflect")
    w = jnp.transpose(w_oihw, (2, 3, 1, 0))
    y = lax.conv_general_dilated(xp, w, (1, 1), "VALID",
                                 dimension_numbers=("NHWC", "HWIO", "NHWC"))
    return jnp.maximum(y + b[None, None, None, :], 0.0)


def _ref_upconv(x, w_iokk, b):
    B, H, W, _ = x.shape
    Cout = w_iokk.shape[1]
    y = jnp.einsum("nijc,cokl->nikjlo", x, w_iokk)          # (B,H,2,W,2,Cout)
    return y.reshape(B, 2 * H, 2 * W, Cout) + b[None, None, None, :]


def ref_forward(params, x_nchw):
    x = jnp.transpose(x_nchw, (0, 2, 3, 1))
    h = _ref_conv3x3_relu(x, params["w1"], params["b1"])
    h = _ref_conv3x3_relu(h, params["w2"], params["b2"])
    up = _ref_upconv(h, params["wu"], params["bu"])
    return jnp.transpose(up, (0, 3, 1, 2))


if __name__ == "__main__":
    key = jax.random.PRNGKey(0)
    kx, kp = jax.random.split(key)
    B, C_in, C_mid, C_out, H, W = 2, 4, 8, 4, 16, 16
    x = jax.random.normal(kx, (B, C_in, H, W), jnp.float32)
    params = init_params(kp, C_in, C_mid, C_out)

    out = jax.jit(up_forward)(params, x)
    jax.block_until_ready(out)

    out_ref = ref_forward(params, x)
    assert out.shape == (B, C_out, 2 * H, 2 * W), out.shape
    err = float(jnp.max(jnp.abs(out - out_ref)))
    assert jnp.allclose(out, out_ref, atol=2e-2, rtol=2e-2), err

    print("KERNEL_OK")
</pallas_src>

<mosaic_0001>
module attributes {stable_mosaic.version = 11 : i64} {
  func.func @kernel(%arg0: i32, %arg1: memref<1x12x18x4xbf16, #tpu.memory_space<vmem>>, %arg2: memref<36x8xbf16, #tpu.memory_space<vmem>>, %arg3: memref<1x8xf32, #tpu.memory_space<vmem>>, %arg4: memref<72x8xbf16, #tpu.memory_space<vmem>>, %arg5: memref<1x8xf32, #tpu.memory_space<vmem>>, %arg6: memref<16x8xbf16, #tpu.memory_space<vmem>>, %arg7: memref<16x1xf32, #tpu.memory_space<vmem>>, %arg8: memref<1x16x128xf32, #tpu.memory_space<vmem>>, %arg9: memref<10x18x8xbf16, #tpu.memory_space<vmem>>, %arg10: memref<160x36xbf16, #tpu.memory_space<vmem>>, %arg11: memref<128x72xbf16, #tpu.memory_space<vmem>>) attributes {dimension_semantics = [#tpu.dimension_semantics<parallel>], iteration_bounds = array<i64: 4>, scalar_prefetch = 0 : i64, scratch_operands = 3 : i64, tpu.core_type = #tpu.core_type<tc>, window_params = [{transform_indices = @transform_0, window_bounds = array<i64: 1, 12, 18, 4>}, {pipeline_mode = #tpu.pipeline_mode<synchronous>, transform_indices = @transform_1, window_bounds = array<i64: 36, 8>}, {pipeline_mode = #tpu.pipeline_mode<synchronous>, transform_indices = @transform_2, window_bounds = array<i64: 1, 8>}, {pipeline_mode = #tpu.pipeline_mode<synchronous>, transform_indices = @transform_3, window_bounds = array<i64: 72, 8>}, {pipeline_mode = #tpu.pipeline_mode<synchronous>, transform_indices = @transform_4, window_bounds = array<i64: 1, 8>}, {pipeline_mode = #tpu.pipeline_mode<synchronous>, transform_indices = @transform_5, window_bounds = array<i64: 16, 8>}, {pipeline_mode = #tpu.pipeline_mode<synchronous>, transform_indices = @transform_6, window_bounds = array<i64: 16, 1>}, {transform_indices = @transform_7, window_bounds = array<i64: 1, 16, 128>}]} {
    %c0 = arith.constant 0 : index
    %c0_0 = arith.constant 0 : index
    %c0_1 = arith.constant 0 : index
    %c0_2 = arith.constant 0 : index
    %0 = vector.load %arg1[%c0, %c0_0, %c0_1, %c0_2] : memref<1x12x18x4xbf16, #tpu.memory_space<vmem>>, vector<1x10x16x4xbf16>
    %1 = vector.shape_cast %0 : vector<1x10x16x4xbf16> to vector<10x16x4xbf16>
    %2 = vector.shape_cast %1 : vector<10x16x4xbf16> to vector<160x4xbf16>
    %c0_3 = arith.constant 0 : index
    %c0_4 = arith.constant 0 : index
    %3 = vector.load %arg10[%c0_3, %c0_4] : memref<160x36xbf16, #tpu.memory_space<vmem>>, vector<160x4xbf16>
    tpu.vector_store %arg10[%c0_3, %c0_4], %2 {strides = array<i32>} : memref<160x36xbf16, #tpu.memory_space<vmem>>, vector<160x4xbf16>,
    %c0_5 = arith.constant 0 : index
    %c0_6 = arith.constant 0 : index
    %c1 = arith.constant 1 : index
    %c0_7 = arith.constant 0 : index
    %4 = vector.load %arg1[%c0_5, %c0_6, %c1, %c0_7] : memref<1x12x18x4xbf16, #tpu.memory_space<vmem>>, vector<1x10x16x4xbf16>
    %5 = vector.shape_cast %4 : vector<1x10x16x4xbf16> to vector<10x16x4xbf16>
    %6 = vector.shape_cast %5 : vector<10x16x4xbf16> to vector<160x4xbf16>
    %c0_8 = arith.constant 0 : index
    %c4 = arith.constant 4 : index
    %7 = vector.load %arg10[%c0_8, %c4] : memref<160x36xbf16, #tpu.memory_space<vmem>>, vector<160x4xbf16>
    tpu.vector_store %arg10[%c0_8, %c4], %6 {strides = array<i32>} : memref<160x36xbf16, #tpu.memory_space<vmem>>, vector<160x4xbf16>,
    %c0_9 = arith.constant 0 : index
    %c0_10 = arith.constant 0 : index
    %c2 = arith.constant 2 : index
    %c0_11 = arith.constant 0 : index
    %8 = vector.load %arg1[%c0_9, %c0_10, %c2, %c0_11] : memref<1x12x18x4xbf16, #tpu.memory_space<vmem>>, vector<1x10x16x4xbf16>
    %9 = vector.shape_cast %8 : vector<1x10x16x4xbf16> to vector<10x16x4xbf16>
    %10 = vector.shape_cast %9 : vector<10x16x4xbf16> to vector<160x4xbf16>
    %c0_12 = arith.constant 0 : index
    %c8 = arith.constant 8 : index
    %11 = vector.load %arg10[%c0_12, %c8] : memref<160x36xbf16, #tpu.memory_space<vmem>>, vector<160x4xbf16>
    tpu.vector_store %arg10[%c0_12, %c8], %10 {strides = array<i32>} : memref<160x36xbf16, #tpu.memory_space<vmem>>, vector<160x4xbf16>,
    %c0_13 = arith.constant 0 : index
    %c1_14 = arith.constant 1 : index
    %c0_15 = arith.constant 0 : index
    %c0_16 = arith.constant 0 : index
    %12 = vector.load %arg1[%c0_13, %c1_14, %c0_15, %c0_16] : memref<1x12x18x4xbf16, #tpu.memory_space<vmem>>, vector<1x10x16x4xbf16>
    %13 = vector.shape_cast %12 : vector<1x10x16x4xbf16> to vector<10x16x4xbf16>
    %14 = vector.shape_cast %13 : vector<10x16x4xbf16> to vector<160x4xbf16>
    %c0_17 = arith.constant 0 : index
    %c12 = arith.constant 12 : index
    %15 = vector.load %arg10[%c0_17, %c12] : memref<160x36xbf16, #tpu.memory_space<vmem>>, vector<160x4xbf16>
    tpu.vector_store %arg10[%c0_17, %c12], %14 {strides = array<i32>} : memref<160x36xbf16, #tpu.memory_space<vmem>>, vector<160x4xbf16>,
    %c0_18 = arith.constant 0 : index
    %c1_19 = arith.constant 1 : index
    %c1_20 = arith.constant 1 : index
    %c0_21 = arith.constant 0 : index
    %16 = vector.load %arg1[%c0_18, %c1_19, %c1_20, %c0_21] : memref<1x12x18x4xbf16, #tpu.memory_space<vmem>>, vector<1x10x16x4xbf16>
    %17 = vector.shape_cast %16 : vector<1x10x16x4xbf16> to vector<10x16x4xbf16>
    %18 = vector.shape_cast %17 : vector<10x16x4xbf16> to vector<160x4xbf16>
    %c0_22 = arith.constant 0 : index
    %c16 = arith.constant 16 : index
    %19 = vector.load %arg10[%c0_22, %c16] : memref<160x36xbf16, #tpu.memory_space<vmem>>, vector<160x4xbf16>
    tpu.vector_store %arg10[%c0_22, %c16], %18 {strides = array<i32>} : memref<160x36xbf16, #tpu.memory_space<vmem>>, vector<160x4xbf16>,
    %c0_23 = arith.constant 0 : index
    %c1_24 = arith.constant 1 : index
    %c2_25 = arith.constant 2 : index
    %c0_26 = arith.constant 0 : index
    %20 = vector.load %arg1[%c0_23, %c1_24, %c2_25, %c0_26] : memref<1x12x18x4xbf16, #tpu.memory_space<vmem>>, vector<1x10x16x4xbf16>
    %21 = vector.shape_cast %20 : vector<1x10x16x4xbf16> to vector<10x16x4xbf16>
    %22 = vector.shape_cast %21 : vector<10x16x4xbf16> to vector<160x4xbf16>
    %c0_27 = arith.constant 0 : index
    %c20 = arith.constant 20 : index
    %23 = vector.load %arg10[%c0_27, %c20] : memref<160x36xbf16, #tpu.memory_space<vmem>>, vector<160x4xbf16>
    tpu.vector_store %arg10[%c0_27, %c20], %22 {strides = array<i32>} : memref<160x36xbf16, #tpu.memory_space<vmem>>, vector<160x4xbf16>,
    %c0_28 = arith.constant 0 : index
    %c2_29 = arith.constant 2 : index
    %c0_30 = arith.constant 0 : index
    %c0_31 = arith.constant 0 : index
    %24 = vector.load %arg1[%c0_28, %c2_29, %c0_30, %c0_31] : memref<1x12x18x4xbf16, #tpu.memory_space<vmem>>, vector<1x10x16x4xbf16>
    %25 = vector.shape_cast %24 : vector<1x10x16x4xbf16> to vector<10x16x4xbf16>
    %26 = vector.shape_cast %25 : vector<10x16x4xbf16> to vector<160x4xbf16>
    %c0_32 = arith.constant 0 : index
    %c24 = arith.constant 24 : index
    %27 = vector.load %arg10[%c0_32, %c24] : memref<160x36xbf16, #tpu.memory_space<vmem>>, vector<160x4xbf16>
    tpu.vector_store %arg10[%c0_32, %c24], %26 {strides = array<i32>} : memref<160x36xbf16, #tpu.memory_space<vmem>>, vector<160x4xbf16>,
    %c0_33 = arith.constant 0 : index
    %c2_34 = arith.constant 2 : index
    %c1_35 = arith.constant 1 : index
    %c0_36 = arith.constant 0 : index
    %28 = vector.load %arg1[%c0_33, %c2_34, %c1_35, %c0_36] : memref<1x12x18x4xbf16, #tpu.memory_space<vmem>>, vector<1x10x16x4xbf16>
    %29 = vector.shape_cast %28 : vector<1x10x16x4xbf16> to vector<10x16x4xbf16>
    %30 = vector.shape_cast %29 : vector<10x16x4xbf16> to vector<160x4xbf16>
    %c0_37 = arith.constant 0 : index
    %c28 = arith.constant 28 : index
    %31 = vector.load %arg10[%c0_37, %c28] : memref<160x36xbf16, #tpu.memory_space<vmem>>, vector<160x4xbf16>
    tpu.vector_store %arg10[%c0_37, %c28], %30 {strides = array<i32>} : memref<160x36xbf16, #tpu.memory_space<vmem>>, vector<160x4xbf16>,
    %c0_38 = arith.constant 0 : index
    %c2_39 = arith.constant 2 : index
    %c2_40 = arith.constant 2 : index
    %c0_41 = arith.constant 0 : index
    %32 = vector.load %arg1[%c0_38, %c2_39, %c2_40, %c0_41] : memref<1x12x18x4xbf16, #tpu.memory_space<vmem>>, vector<1x10x16x4xbf16>
    %33 = vector.shape_cast %32 : vector<1x10x16x4xbf16> to vector<10x16x4xbf16>
    %34 = vector.shape_cast %33 : vector<10x16x4xbf16> to vector<160x4xbf16>
    %c0_42 = arith.constant 0 : index
    %c32 = arith.constant 32 : index
    %35 = vector.load %arg10[%c0_42, %c32] : memref<160x36xbf16, #tpu.memory_space<vmem>>, vector<160x4xbf16>
    tpu.vector_store %arg10[%c0_42, %c32], %34 {strides = array<i32>} : memref<160x36xbf16, #tpu.memory_space<vmem>>, vector<160x4xbf16>,
    %c0_43 = arith.constant 0 : index
    %c0_44 = arith.constant 0 : index
    %36 = vector.load %arg10[%c0_43, %c0_44] : memref<160x36xbf16, #tpu.memory_space<vmem>>, vector<160x36xbf16>
    %c0_45 = arith.constant 0 : index
    %c0_46 = arith.constant 0 : index
    %37 = vector.load %arg2[%c0_45, %c0_46] : memref<36x8xbf16, #tpu.memory_space<vmem>>, vector<36x8xbf16>
    %cst = arith.constant dense<0.000000e+00> : vector<160x8xf32>
    %38 = tpu.matmul %36, %37, %cst {dimension_numbers = #tpu.dot_dimension_numbers<[1], [0], [0], [1], [0, 0, 1, 1], [], []>} : vector<160x36xbf16>, vector<36x8xbf16>, vector<160x8xf32> -> vector<160x8xf32>
    %c0_47 = arith.constant 0 : index
    %c0_48 = arith.constant 0 : index
    %39 = vector.load %arg3[%c0_47, %c0_48] : memref<1x8xf32, #tpu.memory_space<vmem>>, vector<1x8xf32>
    %40 = vector.broadcast %39 : vector<1x8xf32> to vector<160x8xf32>
    %41 = arith.addf %38, %40 : vector<160x8xf32>
    %cst_49 = arith.constant 0.000000e+00 : f32
    %42 = vector.broadcast %cst_49 : f32 to vector<160x8xf32>
    %43 = arith.maximumf %41, %42 : vector<160x8xf32>
    %44 = arith.truncf %43 : vector<160x8xf32> to vector<160x8xbf16>
    %45 = vector.shape_cast %44 : vector<160x8xbf16> to vector<10x16x8xbf16>
    %c2_i32 = arith.constant 2 : i32
    %c0_i32 = arith.constant 0 : i32
    %46 = arith.cmpi eq, %c2_i32, %c0_i32 : i32
    %c1_i32 = arith.constant 1 : i32
    %47 = arith.select %46, %c1_i32, %c2_i32 : i32
    %48 = arith.remsi %arg0, %47 : i32
    %c0_i32_50 = arith.constant 0 : i32
    %49 = arith.cmpi ne, %48, %c0_i32_50 : i32
    %c0_i32_51 = arith.constant 0 : i32
    %50 = arith.cmpi slt, %48, %c0_i32_51 : i32
    %c0_i32_52 = arith.constant 0 : i32
    %51 = arith.cmpi slt, %47, %c0_i32_52 : i32
    %52 = arith.xori %50, %51 : i1
    %53 = arith.andi %52, %49 : i1
    %54 = arith.addi %48, %47 : i32
    %55 = arith.select %53, %54, %48 : i32
    %c0_53 = arith.constant 0 : index
    %c1_54 = arith.constant 1 : index
    %c0_55 = arith.constant 0 : index
    %56 = vector.load %arg9[%c0_53, %c1_54, %c0_55] : memref<10x18x8xbf16, #tpu.memory_space<vmem>>, vector<10x16x8xbf16>
    tpu.vector_store %arg9[%c0_53, %c1_54, %c0_55], %45 {strides = array<i32>} : memref<10x18x8xbf16, #tpu.memory_space<vmem>>, vector<10x16x8xbf16>,
    %c0_i32_56 = arith.constant 0 : i32
    %57 = arith.cmpi eq, %55, %c0_i32_56 : i32
    %58 = arith.extui %57 : i1 to i32
    %c0_i32_57 = arith.constant 0 : i32
    %59 = arith.cmpi ne, %58, %c0_i32_57 : i32
    scf.if %59 {
      %111 = vector.extract_strided_slice %45 {offsets = [2, 0, 0], sizes = [1, 16, 8], strides = [1, 1, 1]} : vector<10x16x8xbf16> to vector<1x16x8xbf16>
      %c0_127 = arith.constant 0 : index
      %c1_128 = arith.constant 1 : index
      %c0_129 = arith.constant 0 : index
      %112 = vector.load %arg9[%c0_127, %c1_128, %c0_129] : memref<10x18x8xbf16, #tpu.memory_space<vmem>>, vector<1x16x8xbf16>
      tpu.vector_store %arg9[%c0_127, %c1_128, %c0_129], %111 {strides = array<i32>} : memref<10x18x8xbf16, #tpu.memory_space<vmem>>, vector<1x16x8xbf16>,
    } else {
    }
    %c1_i32_58 = arith.constant 1 : i32
    %60 = arith.cmpi eq, %55, %c1_i32_58 : i32
    %61 = arith.extui %60 : i1 to i32
    %c0_i32_59 = arith.constant 0 : i32
    %62 = arith.cmpi ne, %61, %c0_i32_59 : i32
    scf.if %62 {
      %111 = vector.extract_strided_slice %45 {offsets = [7, 0, 0], sizes = [1, 16, 8], strides = [1, 1, 1]} : vector<10x16x8xbf16> to vector<1x16x8xbf16>
      %c9 = arith.constant 9 : index
      %c1_127 = arith.constant 1 : index
      %c0_128 = arith.constant 0 : index
      %112 = vector.load %arg9[%c9, %c1_127, %c0_128] : memref<10x18x8xbf16, #tpu.memory_space<vmem>>, vector<1x16x8xbf16>
      tpu.vector_store %arg9[%c9, %c1_127, %c0_128], %111 {strides = array<i32>} : memref<10x18x8xbf16, #tpu.memory_space<vmem>>, vector<1x16x8xbf16>,
    } else {
    }
    %c0_60 = arith.constant 0 : index
    %c2_61 = arith.constant 2 : index
    %c0_62 = arith.constant 0 : index
    %63 = vector.load %arg9[%c0_60, %c2_61, %c0_62] : memref<10x18x8xbf16, #tpu.memory_space<vmem>>, vector<10x1x8xbf16>
    %c0_63 = arith.constant 0 : index
    %c0_64 = arith.constant 0 : index
    %c0_65 = arith.constant 0 : index
    %64 = vector.load %arg9[%c0_63, %c0_64, %c0_65] : memref<10x18x8xbf16, #tpu.memory_space<vmem>>, vector<10x1x8xbf16>
    tpu.vector_store %arg9[%c0_63, %c0_64, %c0_65], %63 {strides = array<i32>} : memref<10x18x8xbf16, #tpu.memory_space<vmem>>, vector<10x1x8xbf16>,
    %c0_66 = arith.constant 0 : index
    %c15 = arith.constant 15 : index
    %c0_67 = arith.constant 0 : index
    %65 = vector.load %arg9[%c0_66, %c15, %c0_67] : memref<10x18x8xbf16, #tpu.memory_space<vmem>>, vector<10x1x8xbf16>
    %c0_68 = arith.constant 0 : index
    %c17 = arith.constant 17 : index
    %c0_69 = arith.constant 0 : index
    %66 = vector.load %arg9[%c0_68, %c17, %c0_69] : memref<10x18x8xbf16, #tpu.memory_space<vmem>>, vector<10x1x8xbf16>
    tpu.vector_store %arg9[%c0_68, %c17, %c0_69], %65 {strides = array<i32>} : memref<10x18x8xbf16, #tpu.memory_space<vmem>>, vector<10x1x8xbf16>,
    %c0_70 = arith.constant 0 : index
    %c0_71 = arith.constant 0 : index
    %c0_72 = arith.constant 0 : index
    %67 = vector.load %arg9[%c0_70, %c0_71, %c0_72] : memref<10x18x8xbf16, #tpu.memory_space<vmem>>, vector<8x16x8xbf16>
    %68 = vector.shape_cast %67 : vector<8x16x8xbf16> to vector<128x8xbf16>
    %c0_73 = arith.constant 0 : index
    %c0_74 = arith.constant 0 : index
    %69 = vector.load %arg11[%c0_73, %c0_74] : memref<128x72xbf16, #tpu.memory_space<vmem>>, vector<128x8xbf16>
    tpu.vector_store %arg11[%c0_73, %c0_74], %68 {strides = array<i32>} : memref<128x72xbf16, #tpu.memory_space<vmem>>, vector<128x8xbf16>,
    %c0_75 = arith.constant 0 : index
    %c1_76 = arith.constant 1 : index
    %c0_77 = arith.constant 0 : index
    %70 = vector.load %arg9[%c0_75, %c1_76, %c0_77] : memref<10x18x8xbf16, #tpu.memory_space<vmem>>, vector<8x16x8xbf16>
    %71 = vector.shape_cast %70 : vector<8x16x8xbf16> to vector<128x8xbf16>
    %c0_78 = arith.constant 0 : index
    %c8_79 = arith.constant 8 : index
    %72 = vector.load %arg11[%c0_78, %c8_79] : memref<128x72xbf16, #tpu.memory_space<vmem>>, vector<128x8xbf16>
    tpu.vector_store %arg11[%c0_78, %c8_79], %71 {strides = array<i32>} : memref<128x72xbf16, #tpu.memory_space<vmem>>, vector<128x8xbf16>,
    %c0_80 = arith.constant 0 : index
    %c2_81 = arith.constant 2 : index
    %c0_82 = arith.constant 0 : index
    %73 = vector.load %arg9[%c0_80, %c2_81, %c0_82] : memref<10x18x8xbf16, #tpu.memory_space<vmem>>, vector<8x16x8xbf16>
    %74 = vector.shape_cast %73 : vector<8x16x8xbf16> to vector<128x8xbf16>
    %c0_83 = arith.constant 0 : index
    %c16_84 = arith.constant 16 : index
    %75 = vector.load %arg11[%c0_83, %c16_84] : memref<128x72xbf16, #tpu.memory_space<vmem>>, vector<128x8xbf16>
    tpu.vector_store %arg11[%c0_83, %c16_84], %74 {strides = array<i32>} : memref<128x72xbf16, #tpu.memory_space<vmem>>, vector<128x8xbf16>,
    %c1_85 = arith.constant 1 : index
    %c0_86 = arith.constant 0 : index
    %c0_87 = arith.constant 0 : index
    %76 = vector.load %arg9[%c1_85, %c0_86, %c0_87] : memref<10x18x8xbf16, #tpu.memory_space<vmem>>, vector<8x16x8xbf16>
    %77 = vector.shape_cast %76 : vector<8x16x8xbf16> to vector<128x8xbf16>
    %c0_88 = arith.constant 0 : index
    %c24_89 = arith.constant 24 : index
    %78 = vector.load %arg11[%c0_88, %c24_89] : memref<128x72xbf16, #tpu.memory_space<vmem>>, vector<128x8xbf16>
    tpu.vector_store %arg11[%c0_88, %c24_89], %77 {strides = array<i32>} : memref<128x72xbf16, #tpu.memory_space<vmem>>, vector<128x8xbf16>,
    %c1_90 = arith.constant 1 : index
    %c1_91 = arith.constant 1 : index
    %c0_92 = arith.constant 0 : index
    %79 = vector.load %arg9[%c1_90, %c1_91, %c0_92] : memref<10x18x8xbf16, #tpu.memory_space<vmem>>, vector<8x16x8xbf16>
    %80 = vector.shape_cast %79 : vector<8x16x8xbf16> to vector<128x8xbf16>
    %c0_93 = arith.constant 0 : index
    %c32_94 = arith.constant 32 : index
    %81 = vector.load %arg11[%c0_93, %c32_94] : memref<128x72xbf16, #tpu.memory_space<vmem>>, vector<128x8xbf16>
    tpu.vector_store %arg11[%c0_93, %c32_94], %80 {strides = array<i32>} : memref<128x72xbf16, #tpu.memory_space<vmem>>, vector<128x8xbf16>,
    %c1_95 = arith.constant 1 : index
    %c2_96 = arith.constant 2 : index
    %c0_97 = arith.constant 0 : index
    %82 = vector.load %arg9[%c1_95, %c2_96, %c0_97] : memref<10x18x8xbf16, #tpu.memory_space<vmem>>, vector<8x16x8xbf16>
    %83 = vector.shape_cast %82 : vector<8x16x8xbf16> to vector<128x8xbf16>
    %c0_98 = arith.constant 0 : index
    %c40 = arith.constant 40 : index
    %84 = vector.load %arg11[%c0_98, %c40] : memref<128x72xbf16, #tpu.memory_space<vmem>>, vector<128x8xbf16>
    tpu.vector_store %arg11[%c0_98, %c40], %83 {strides = array<i32>} : memref<128x72xbf16, #tpu.memory_space<vmem>>, vector<128x8xbf16>,
    %c2_99 = arith.constant 2 : index
    %c0_100 = arith.constant 0 : index
    %c0_101 = arith.constant 0 : index
    %85 = vector.load %arg9[%c2_99, %c0_100, %c0_101] : memref<10x18x8xbf16, #tpu.memory_space<vmem>>, vector<8x16x8xbf16>
    %86 = vector.shape_cast %85 : vector<8x16x8xbf16> to vector<128x8xbf16>
    %c0_102 = arith.constant 0 : index
    %c48 = arith.constant 48 : index
    %87 = vector.load %arg11[%c0_102, %c48] : memref<128x72xbf16, #tpu.memory_space<vmem>>, vector<128x8xbf16>
    tpu.vector_store %arg11[%c0_102, %c48], %86 {strides = array<i32>} : memref<128x72xbf16, #tpu.memory_space<vmem>>, vector<128x8xbf16>,
    %c2_103 = arith.constant 2 : index
    %c1_104 = arith.constant 1 : index
    %c0_105 = arith.constant 0 : index
    %88 = vector.load %arg9[%c2_103, %c1_104, %c0_105] : memref<10x18x8xbf16, #tpu.memory_space<vmem>>, vector<8x16x8xbf16>
    %89 = vector.shape_cast %88 : vector<8x16x8xbf16> to vector<128x8xbf16>
    %c0_106 = arith.constant 0 : index
    %c56 = arith.constant 56 : index
    %90 = vector.load %arg11[%c0_106, %c56] : memref<128x72xbf16, #tpu.memory_space<vmem>>, vector<128x8xbf16>
    tpu.vector_store %arg11[%c0_106, %c56], %89 {strides = array<i32>} : memref<128x72xbf16, #tpu.memory_space<vmem>>, vector<128x8xbf16>,
    %c2_107 = arith.constant 2 : index
    %c2_108 = arith.constant 2 : index
    %c0_109 = arith.constant 0 : index
    %91 = vector.load %arg9[%c2_107, %c2_108, %c0_109] : memref<10x18x8xbf16, #tpu.memory_space<vmem>>, vector<8x16x8xbf16>
    %92 = vector.shape_cast %91 : vector<8x16x8xbf16> to vector<128x8xbf16>
    %c0_110 = arith.constant 0 : index
    %c64 = arith.constant 64 : index
    %93 = vector.load %arg11[%c0_110, %c64] : memref<128x72xbf16, #tpu.memory_space<vmem>>, vector<128x8xbf16>
    tpu.vector_store %arg11[%c0_110, %c64], %92 {strides = array<i32>} : memref<128x72xbf16, #tpu.memory_space<vmem>>, vector<128x8xbf16>,
    %c0_111 = arith.constant 0 : index
    %c0_112 = arith.constant 0 : index
    %94 = vector.load %arg11[%c0_111, %c0_112] : memref<128x72xbf16, #tpu.memory_space<vmem>>, vector<128x72xbf16>
    %c0_113 = arith.constant 0 : index
    %c0_114 = arith.constant 0 : index
    %95 = vector.load %arg4[%c0_113, %c0_114] : memref<72x8xbf16, #tpu.memory_space<vmem>>, vector<72x8xbf16>
    %cst_115 = arith.constant dense<0.000000e+00> : vector<128x8xf32>
    %96 = tpu.matmul %94, %95, %cst_115 {dimension_numbers = #tpu.dot_dimension_numbers<[1], [0], [0], [1], [0, 0, 1, 1], [], []>} : vector<128x72xbf16>, vector<72x8xbf16>, vector<128x8xf32> -> vector<128x8xf32>
    %c0_116 = arith.constant 0 : index
    %c0_117 = arith.constant 0 : index
    %97 = vector.load %arg5[%c0_116, %c0_117] : memref<1x8xf32, #tpu.memory_space<vmem>>, vector<1x8xf32>
    %98 = vector.broadcast %97 : vector<1x8xf32> to vector<128x8xf32>
    %99 = arith.addf %96, %98 : vector<128x8xf32>
    %cst_118 = arith.constant 0.000000e+00 : f32
    %100 = vector.broadcast %cst_118 : f32 to vector<128x8xf32>
    %101 = arith.maximumf %99, %100 : vector<128x8xf32>
    %102 = arith.truncf %101 : vector<128x8xf32> to vector<128x8xbf16>
    %c0_119 = arith.constant 0 : index
    %c0_120 = arith.constant 0 : index
    %103 = vector.load %arg6[%c0_119, %c0_120] : memref<16x8xbf16, #tpu.memory_space<vmem>>, vector<16x8xbf16>
    %cst_121 = arith.constant dense<0.000000e+00> : vector<16x128xf32>
    %104 = tpu.matmul %103, %102, %cst_121 {dimension_numbers = #tpu.dot_dimension_numbers<[1], [1], [0], [0], [0, 0, 1, 0], [], []>} : vector<16x8xbf16>, vector<128x8xbf16>, vector<16x128xf32> -> vector<16x128xf32>
    %c0_122 = arith.constant 0 : index
    %c0_123 = arith.constant 0 : index
    %105 = vector.load %arg7[%c0_122, %c0_123] : memref<16x1xf32, #tpu.memory_space<vmem>>, vector<16x1xf32>
    %106 = vector.broadcast %105 : vector<16x1xf32> to vector<16x128xf32>
    %107 = arith.addf %104, %106 : vector<16x128xf32>
    %c0_124 = arith.constant 0 : index
    %c0_125 = arith.constant 0 : index
    %c0_126 = arith.constant 0 : index
    %108 = vector.load %arg8[%c0_124, %c0_125, %c0_126] : memref<1x16x128xf32, #tpu.memory_space<vmem>>, vector<1x16x128xf32>
    %109 = vector.shape_cast %108 : vector<1x16x128xf32> to vector<16x128xf32>
    %110 = vector.shape_cast %107 : vector<16x128xf32> to vector<1x16x128xf32>
    tpu.vector_store %arg8[%c0_124, %c0_125, %c0_126], %110 {strides = array<i32>} : memref<1x16x128xf32, #tpu.memory_space<vmem>>, vector<1x16x128xf32>,
    return
  }
  func.func @transform_0(%arg0: i32) -> (i32, i32, i32, i32) {
    %c0_i32 = arith.constant 0 : i32
    %c0_i32_0 = arith.constant 0 : i32
    %c0_i32_1 = arith.constant 0 : i32
    %c0_i32_2 = arith.constant 0 : i32
    return %arg0, %c0_i32, %c0_i32_0, %c0_i32_1 : i32, i32, i32, i32
  }
  func.func @transform_1(%arg0: i32) -> (i32, i32) {
    %c0_i32 = arith.constant 0 : i32
    %c0_i32_0 = arith.constant 0 : i32
    %c0_i32_1 = arith.constant 0 : i32
    return %c0_i32, %c0_i32_0 : i32, i32
  }
  func.func @transform_2(%arg0: i32) -> (i32, i32) {
    %c0_i32 = arith.constant 0 : i32
    %c0_i32_0 = arith.constant 0 : i32
    %c0_i32_1 = arith.constant 0 : i32
    return %c0_i32, %c0_i32_0 : i32, i32
  }
  func.func @transform_3(%arg0: i32) -> (i32, i32) {
    %c0_i32 = arith.constant 0 : i32
    %c0_i32_0 = arith.constant 0 : i32
    %c0_i32_1 = arith.constant 0 : i32
    return %c0_i32, %c0_i32_0 : i32, i32
  }
  func.func @transform_4(%arg0: i32) -> (i32, i32) {
    %c0_i32 = arith.constant 0 : i32
    %c0_i32_0 = arith.constant 0 : i32
    %c0_i32_1 = arith.constant 0 : i32
    return %c0_i32, %c0_i32_0 : i32, i32
  }
  func.func @transform_5(%arg0: i32) -> (i32, i32) {
    %c0_i32 = arith.constant 0 : i32
    %c0_i32_0 = arith.constant 0 : i32
    %c0_i32_1 = arith.constant 0 : i32
    return %c0_i32, %c0_i32_0 : i32, i32
  }
  func.func @transform_6(%arg0: i32) -> (i32, i32) {
    %c0_i32 = arith.constant 0 : i32
    %c0_i32_0 = arith.constant 0 : i32
    %c0_i32_1 = arith.constant 0 : i32
    return %c0_i32, %c0_i32_0 : i32, i32
  }
  func.func @transform_7(%arg0: i32) -> (i32, i32, i32) {
    %c0_i32 = arith.constant 0 : i32
    %c0_i32_0 = arith.constant 0 : i32
    %c0_i32_1 = arith.constant 0 : i32
    return %arg0, %c0_i32, %c0_i32_0 : i32, i32, i32
  }
}

</mosaic_0001>

<llo_original>
// kernel: tile.8
$region0: #{tile.8}
  #allocation0 [shape = 's32[1]{0}', space=sflag, size = 0x4, scoped, tag = 'scoped memory for tile.8']
  %s0 = inlined_call_operand.vmem [shape: f32[4], index: 0, kind: input, shape index: {}]
  %s1 = inlined_call_operand.vmem [shape: f32[4,4], index: 1, kind: output, shape index: {}]
  // Predicated region
  $region2: #{tile.8} parent=0 // pred_check
    _
  $region3: #{tile.8} parent=0 // pred_check_branch
    %3 = sbr.rel (0) target = $region5
  $region4: #{tile.8} parent=0 // pred_region
    _
  $region5: #{tile.8} parent=0 // pred_fallthru
    _
  %v4 = vld [vmem:[%s0] ss:$0 sm:$0xff]
  %5 = vst [vmem:[%s1] sm:$0xf] %v4

// kernel: tile.0
$region0: #{tile.0}
  %s0 = inlined_call_operand.vmem [shape: f32[4,4], index: 0, kind: input, shape index: {}]
  %s1 = inlined_call_operand.vmem [shape: f32[16,1], index: 1, kind: output, shape index: {}]
  $region1: #{tile.0} parent=0
    #allocation0 [shape = 'u8[4096]{0}', space=vmem, size = 0x1000, scoped, tag = 'scoped mem for input reshape']
    %s3 = sshllo.u32 0, 4
    %v4 = vld [vmem:[%s0] sm:%s3]
    %5 = vst [vmem:[#allocation0] sm:%s3] %v4
    %v6 = vld [vmem:[#allocation0] sm:$0xf]
    %vm7 = vcmask 7168
    %8 = vst.msk [vmem:[%s1] ss:$4 sm:$0xf] %vm7, %v6
    %v9 = vld [vmem:[#allocation0] sm:$0xf]
    %10 = vrot.lane.b32.xlu0 %v9, 127
    %v11 = vpop.permute.xlu0 %10
    %vm12 = vcmask 7168
    %s13 = scalar_lea.vmem %s1, 1
    %14 = vst.msk [vmem:[%s13] ss:$4 sm:$0xf] %vm12, %v11
    %v15 = vld [vmem:[#allocation0] sm:$0xf]
    %16 = vrot.lane.b32.xlu0 %v15, 126
    %v17 = vpop.permute.xlu0 %16
    %vm18 = vcmask 7168
    %s19 = scalar_lea.vmem %s1, 2
    %20 = vst.msk [vmem:[%s19] ss:$4 sm:$0xf] %vm18, %v17
    %v21 = vld [vmem:[#allocation0] sm:$0xf]
    %22 = vrot.lane.b32.xlu0 %v21, 125
    %v23 = vpop.permute.xlu0 %22
    %vm24 = vcmask 7168
    %s25 = scalar_lea.vmem %s1, 3
    %26 = vst.msk [vmem:[%s25] ss:$4 sm:$0xf] %vm24, %v23

// kernel: up_forward.1
$region0: #{up_forward.1}
  #allocation0 [shape = 'u32[]', space=smem, size = 0x4, offset = 0x4, fixed_abs, tag = 'smem constant byte address 0x4 - core index']
  #allocation1 [shape = 'u32[144,128]{1,0:T(1,128)}', space=vmem, size = 0x12000, scoped, tag = 'internal scratch']
  #allocation2 [shape = 'bf16[10,18,8]{2,1,0:T(8,128)(2,1)}', space=vmem, size = 0xf000, scoped, tag = 'scratch operand']
  #allocation3 [shape = 'bf16[160,36]{1,0:T(16,128)(2,1)}', space=vmem, size = 0xa000, scoped, tag = 'scratch operand']
  #allocation4 [shape = 'bf16[128,72]{1,0:T(16,128)(2,1)}', space=vmem, size = 0x8000, scoped, tag = 'scratch operand']
  %s0 = inlined_call_operand.vmem [shape: bf16[4,12,18,4], index: 0, kind: input, shape index: {}]
  %s1 = inlined_call_operand.vmem [shape: bf16[36,8], index: 1, kind: input, shape index: {}]
  %s2 = inlined_call_operand.vmem [shape: f32[1,8], index: 2, kind: input, shape index: {}]
  %s3 = inlined_call_operand.vmem [shape: bf16[72,8], index: 3, kind: input, shape index: {}]
  %s4 = inlined_call_operand.vmem [shape: f32[1,8], index: 4, kind: input, shape index: {}]
  %s5 = inlined_call_operand.vmem [shape: bf16[16,8], index: 5, kind: input, shape index: {}]
  %s6 = inlined_call_operand.vmem [shape: f32[16,1], index: 6, kind: input, shape index: {}]
  %s7 = inlined_call_operand.vmem [shape: f32[4,16,128], index: 7, kind: output, shape index: {}]
  %s8 = sld [smem:[#allocation0]]
  $region69: #{up_forward.1} parent=0
    _
  %s10 = ssub.s32 1, %s8
  %s11 = scalar_select 0, %s10, %s8
  loop: start=0, step=1, limit=6
  $region2: #{up_forward.1} parent=0 // loop_pre_header
    _
  $region3: #{up_forward.1} parent=0 // loop_header
    %s13 = sphi 0, %s17
    %p14 = scmp.ge.s32.totalorder %s13, 6
    %s23 = sphi 0, %s25
    %s26 = sphi 0, %s23
    %s27 = sphi 0, %s26
    %s43 = sphi 0, %s27
    %s47 = sphi 0, %s47
    %s49 = sphi 0, %s47
    %s50 = sphi 0, %s49
    %s64 = sphi 0, %s50
    %s68 = sphi 0, %s68
    %s70 = sphi 0, %s68
    %s71 = sphi 0, %s70
    %s85 = sphi 0, %s71
    %s89 = sphi 0, %s89
    %s91 = sphi 0, %s89
    %s92 = sphi 0, %s91
    %s106 = sphi 0, %s92
    %s110 = sphi 0, %s110
    %s112 = sphi 0, %s110
    %s113 = sphi 0, %s112
    %s127 = sphi 0, %s113
    %s131 = sphi 0, %s131
    %s133 = sphi 0, %s131
    %s134 = sphi 0, %s133
    %s148 = sphi 0, %s134
    %s152 = sphi 0, %s152
    %s154 = sphi 0, %s152
    %s155 = sphi 0, %s154
    %s169 = sphi 0, %s155
    %s175 = sphi 0, %s177
    %s178 = sphi 0, %s175
    %s179 = sphi 0, %s178
    %s195 = sphi 0, %s179
  $region4: #{up_forward.1} parent=0 // loop_header_branch
    %16 = sbr.rel (%p14) target = $region8
  $region5: #{up_forward.1} parent=0 // loop_body
    %s18 = ssub.s32 %s13, 1
    %s19 = ssub.s32 %s13, 2
    %s20 = sadd.s32 %s13, 1
    %s21 = ssub.s32 %s13, %s20
    %p22 = scmp.eq.s32.totalorder %s21, 0
    %s24 = sadd.s32 %s23, 1
    %s25 = scalar_select %p22, %s23, %s24
    %p28 = pneg %p22
    %p29 = scmp.eq.s32.totalorder %s13, 3
    %p30 = por %p28, %p29
    %p31 = scmp.ne.s32.totalorder %s23, %s26
    %p32 = scmp.eq.s32.totalorder %s13, 0
    %p33 = por %p31, %p32
    %p34 = scmp.ne.s32.totalorder %s23, %s26
    %p35 = scmp.eq.s32.totalorder %s18, 3
    %p36 = por %p34, %p35
    %p37 = scmp.ne.s32.totalorder %s26, %s27
    %p38 = scmp.eq.s32.totalorder %s18, 0
    %p39 = por %p37, %p38
    %p40 = scmp.ne.s32.totalorder %s26, %s27
    %p41 = scmp.eq.s32.totalorder %s19, 3
    %p42 = por %p40, %p41
    %p44 = scmp.ne.s32.totalorder %s27, %s43
    %p45 = scmp.eq.s32.totalorder %s19, 0
    %p46 = por %p44, %p45
    %s48 = sadd.s32 %s47, 1
    %p51 = scmp.eq.s32.totalorder %s13, 3
    %p52 = scmp.ne.s32.totalorder %s47, %s49
    %p53 = scmp.eq.s32.totalorder %s13, 0
    %p54 = por %p52, %p53
    %p55 = scmp.ne.s32.totalorder %s47, %s49
    %p56 = scmp.eq.s32.totalorder %s18, 3
    %p57 = por %p55, %p56
    %p58 = scmp.ne.s32.totalorder %s49, %s50
    %p59 = scmp.eq.s32.totalorder %s18, 0
    %p60 = por %p58, %p59
    %p61 = scmp.ne.s32.totalorder %s49, %s50
    %p62 = scmp.eq.s32.totalorder %s19, 3
    %p63 = por %p61, %p62
    %p65 = scmp.ne.s32.totalorder %s50, %s64
    %p66 = scmp.eq.s32.totalorder %s19, 0
    %p67 = por %p65, %p66
    %s69 = sadd.s32 %s68, 1
    %p72 = scmp.eq.s32.totalorder %s13, 3
    %p73 = scmp.ne.s32.totalorder %s68, %s70
    %p74 = scmp.eq.s32.totalorder %s13, 0
    %p75 = por %p73, %p74
    %p76 = scmp.ne.s32.totalorder %s68, %s70
    %p77 = scmp.eq.s32.totalorder %s18, 3
    %p78 = por %p76, %p77
    %p79 = scmp.ne.s32.totalorder %s70, %s71
    %p80 = scmp.eq.s32.totalorder %s18, 0
    %p81 = por %p79, %p80
    %p82 = scmp.ne.s32.totalorder %s70, %s71
    %p83 = scmp.eq.s32.totalorder %s19, 3
    %p84 = por %p82, %p83
    %p86 = scmp.ne.s32.totalorder %s71, %s85
    %p87 = scmp.eq.s32.totalorder %s19, 0
    %p88 = por %p86, %p87
    %s90 = sadd.s32 %s89, 1
    %p93 = scmp.eq.s32.totalorder %s13, 3
    %p94 = scmp.ne.s32.totalorder %s89, %s91
    %p95 = scmp.eq.s32.totalorder %s13, 0
    %p96 = por %p94, %p95
    %p97 = scmp.ne.s32.totalorder %s89, %s91
    %p98 = scmp.eq.s32.totalorder %s18, 3
    %p99 = por %p97, %p98
    %p100 = scmp.ne.s32.totalorder %s91, %s92
    %p101 = scmp.eq.s32.totalorder %s18, 0
    %p102 = por %p100, %p101
    %p103 = scmp.ne.s32.totalorder %s91, %s92
    %p104 = scmp.eq.s32.totalorder %s19, 3
    %p105 = por %p103, %p104
    %p107 = scmp.ne.s32.totalorder %s92, %s106
    %p108 = scmp.eq.s32.totalorder %s19, 0
    %p109 = por %p107, %p108
    %s111 = sadd.s32 %s110, 1
    %p114 = scmp.eq.s32.totalorder %s13, 3
    %p115 = scmp.ne.s32.totalorder %s110, %s112
    %p116 = scmp.eq.s32.totalorder %s13, 0
    %p117 = por %p115, %p116
    %p118 = scmp.ne.s32.totalorder %s110, %s112
    %p119 = scmp.eq.s32.totalorder %s18, 3
    %p120 = por %p118, %p119
    %p121 = scmp.ne.s32.totalorder %s112, %s113
    %p122 = scmp.eq.s32.totalorder %s18, 0
    %p123 = por %p121, %p122
    %p124 = scmp.ne.s32.totalorder %s112, %s113
    %p125 = scmp.eq.s32.totalorder %s19, 3
    %p126 = por %p124, %p125
    %p128 = scmp.ne.s32.totalorder %s113, %s127
    %p129 = scmp.eq.s32.totalorder %s19, 0
    %p130 = por %p128, %p129
    %s132 = sadd.s32 %s131, 1
    %p135 = scmp.eq.s32.totalorder %s13, 3
    %p136 = scmp.ne.s32.totalorder %s131, %s133
    %p137 = scmp.eq.s32.totalorder %s13, 0
    %p138 = por %p136, %p137
    %p139 = scmp.ne.s32.totalorder %s131, %s133
    %p140 = scmp.eq.s32.totalorder %s18, 3
    %p141 = por %p139, %p140
    %p142 = scmp.ne.s32.totalorder %s133, %s134
    %p143 = scmp.eq.s32.totalorder %s18, 0
    %p144 = por %p142, %p143
    %p145 = scmp.ne.s32.totalorder %s133, %s134
    %p146 = scmp.eq.s32.totalorder %s19, 3
    %p147 = por %p145, %p146
    %p149 = scmp.ne.s32.totalorder %s134, %s148
    %p150 = scmp.eq.s32.totalorder %s19, 0
    %p151 = por %p149, %p150
    %s153 = sadd.s32 %s152, 1
    %p156 = scmp.eq.s32.totalorder %s13, 3
    %p157 = scmp.ne.s32.totalorder %s152, %s154
    %p158 = scmp.eq.s32.totalorder %s13, 0
    %p159 = por %p157, %p158
    %p160 = scmp.ne.s32.totalorder %s152, %s154
    %p161 = scmp.eq.s32.totalorder %s18, 3
    %p162 = por %p160, %p161
    %p163 = scmp.ne.s32.totalorder %s154, %s155
    %p164 = scmp.eq.s32.totalorder %s18, 0
    %p165 = por %p163, %p164
    %p166 = scmp.ne.s32.totalorder %s154, %s155
    %p167 = scmp.eq.s32.totalorder %s19, 3
    %p168 = por %p166, %p167
    %p170 = scmp.ne.s32.totalorder %s155, %s169
    %p171 = scmp.eq.s32.totalorder %s19, 0
    %p172 = por %p170, %p171
    %s173 = ssub.s32 %s13, %s20
    %p174 = scmp.eq.s32.totalorder %s173, 0
    %s176 = sadd.s32 %s175, 1
    %s177 = scalar_select %p174, %s175, %s176
    %p180 = pneg %p174
    %p181 = scmp.eq.s32.totalorder %s13, 3
    %p182 = por %p180, %p181
    %p183 = scmp.ne.s32.totalorder %s175, %s178
    %p184 = scmp.eq.s32.totalorder %s13, 0
    %p185 = por %p183, %p184
    %p186 = scmp.ne.s32.totalorder %s175, %s178
    %p187 = scmp.eq.s32.totalorder %s18, 3
    %p188 = por %p186, %p187
    %p189 = scmp.ne.s32.totalorder %s178, %s179
    %p190 = scmp.eq.s32.totalorder %s18, 0
    %p191 = por %p189, %p190
    %p192 = scmp.ne.s32.totalorder %s178, %s179
    %p193 = scmp.eq.s32.totalorder %s19, 3
    %p194 = por %p192, %p193
    %p196 = scmp.ne.s32.totalorder %s179, %s195
    %p197 = scmp.eq.s32.totalorder %s19, 0
    %p198 = por %p196, %p197
    %p199 = scmp.le.s32.totalorder 1, %s13
    %p200 = scmp.lt.s32.totalorder %s13, 5
    %p201 = pnand %p199, %p200
    %p202 = pneg %p201
    // Predicated region
    $region9: #{up_forward.1} parent=5 // pred_check
      _
    $region10: #{up_forward.1} parent=5 // pred_check_branch
      %204 = sbr.rel (%p201) target = $region12
    $region11: #{up_forward.1} parent=5 // pred_region
      %s205 = ssub.s32 %s13, 1
      // Predicated region
      $region13: #{up_forward.1} parent=11 // pred_check
        %p206 = pneg %p60
      $region14: #{up_forward.1} parent=11 // pred_check_branch
        %208 = sbr.rel (%p206) target = $region16
      $region15: #{up_forward.1} parent=11 // pred_region
        _
      $region16: #{up_forward.1} parent=11 // pred_fallthru
        _
      // Predicated region
      $region17: #{up_forward.1} parent=11 // pred_check
        %p209 = pneg %p81
      $region18: #{up_forward.1} parent=11 // pred_check_branch
        %211 = sbr.rel (%p209) target = $region20
      $region19: #{up_forward.1} parent=11 // pred_region
        _
      $region20: #{up_forward.1} parent=11 // pred_fallthru
        _
      // Predicated region
      $region21: #{up_forward.1} parent=11 // pred_check
        %p212 = pneg %p102
      $region22: #{up_forward.1} parent=11 // pred_check_branch
        %214 = sbr.rel (%p212) target = $region24
      $region23: #{up_forward.1} parent=11 // pred_region
        _
      $region24: #{up_forward.1} parent=11 // pred_fallthru
        _
      // Predicated region
      $region25: #{up_forward.1} parent=11 // pred_check
        %p215 = pneg %p123
      $region26: #{up_forward.1} parent=11 // pred_check_branch
        %217 = sbr.rel (%p215) target = $region28
      $region27: #{up_forward.1} parent=11 // pred_region
        _
      $region28: #{up_forward.1} parent=11 // pred_fallthru
        _
      // Predicated region
      $region29: #{up_forward.1} parent=11 // pred_check
        %p218 = pneg %p144
      $region30: #{up_forward.1} parent=11 // pred_check_branch
        %220 = sbr.rel (%p218) target = $region32
      $region31: #{up_forward.1} parent=11 // pred_region
        _
      $region32: #{up_forward.1} parent=11 // pred_fallthru
        _
      // Predicated region
      $region33: #{up_forward.1} parent=11 // pred_check
        %p221 = pneg %p165
      $region34: #{up_forward.1} parent=11 // pred_check_branch
        %223 = sbr.rel (%p221) target = $region36
      $region35: #{up_forward.1} parent=11 // pred_region
        _
      $region36: #{up_forward.1} parent=11 // pred_fallthru
        _
    $region12: #{up_forward.1} parent=5 // pred_fallthru
      _
    %p224 = scmp.lt.s32.totalorder %s13, 4
    // Predicated region
    $region37: #{up_forward.1} parent=5 // pred_check
      %p225 = pneg %p224
    $region38: #{up_forward.1} parent=5 // pred_check_branch
      %227 = sbr.rel (%p225) target = $region40
    $region39: #{up_forward.1} parent=5 // pred_region
      // Predicated region
      $region41: #{up_forward.1} parent=39 // pred_check
        %p228 = pneg %p33
      $region42: #{up_forward.1} parent=39 // pred_check_branch
        %230 = sbr.rel (%p228) target = $region44
      $region43: #{up_forward.1} parent=39 // pred_region
        %p231 = scmp.lt.s32.totalorder %s13, 3
        %s232 = scalar_select %p231, %s13, 3
        %s233 = smul.addr %s232, 36
        %s234 = smul.addr %s233, 4
        %s235 = scalar_lea.vmem %s0, %s234
      $region44: #{up_forward.1} parent=39 // pred_fallthru
        _
    $region40: #{up_forward.1} parent=5 // pred_fallthru
      _
    %p236 = scmp.le.s32.totalorder 1, %s13
    %p237 = scmp.lt.s32.totalorder %s13, 5
    %p238 = pnand %p236, %p237
    %p239 = pneg %p238
    // Predicated region
    $region45: #{up_forward.1} parent=5 // pred_check
      _
    $region46: #{up_forward.1} parent=5 // pred_check_branch
      %241 = sbr.rel (%p238) target = $region48
    $region47: #{up_forward.1} parent=5 // pred_region
      %s242 = ssub.s32 %s13, 1
      %p243 = scmp.lt.s32.totalorder %s18, 3
      %s244 = scalar_select %p243, %s18, 3
      %s245 = smul.addr %s244, 36
      %s246 = smul.addr %s245, 4
      %s247 = scalar_lea.vmem %s0, %s246
      %p248 = pneg %p39
      %p249 = pneg %p36
      %p250 = pneg %p60
      %p251 = pneg %p57
      %p252 = pneg %p81
      %p253 = pneg %p78
      %p254 = pneg %p102
      %p255 = pneg %p99
      %p256 = pneg %p123
      %p257 = pneg %p120
      %p258 = pneg %p144
      %p259 = pneg %p141
      %p260 = pneg %p165
      %p261 = pneg %p162
      %p262 = pneg %p191
      %p263 = pneg %p188
      %p264 = scmp.lt.s32.totalorder %s18, 3
      %s265 = scalar_select %p264, %s18, 3
      %s266 = smul.addr %s265, 2
      %s267 = smul.addr %s266, 8
      %s268 = scalar_lea.vmem %s7, %s267
      %p269 = scmp.lt.s32.totalorder %s18, 3
      %s270 = scalar_select %p269, %s18, 3
      %s271 = smul.addr %s270, 36
      %s272 = smul.addr %s271, 4
      %s273 = scalar_lea.vmem %s0, %s272
      %p274 = scmp.lt.s32.totalorder %s18, 3
      %s275 = scalar_select %p274, %s18, 3
      %s276 = smul.addr %s275, 2
      %s277 = smul.addr %s276, 8
      %s278 = scalar_lea.vmem %s7, %s277
      %v280 = vld [vmem:[%s273] sm:$0xf]
      %v281 = vld [vmem:[%s273 + $0x4] sm:$0xf]
      %v282 = vld [vmem:[%s273 + $0xc] sm:$0xf]
      %v283 = vld [vmem:[%s273 + $0x10] sm:$0xf]
      %v284 = vld [vmem:[%s273 + $0x18] sm:$0xf]
      %v285 = vld [vmem:[%s273 + $0x1c] sm:$0xf]
      %v286 = vld [vmem:[%s273 + $0x24] sm:$0xf]
      %v287 = vld [vmem:[%s273 + $0x28] sm:$0xf]
      %v288 = vld [vmem:[%s273 + $0x30] sm:$0xf]
      %v289 = vld [vmem:[%s273 + $0x34] sm:$0xf]
      %v290 = vld [vmem:[%s273 + $0x3c] sm:$0xf]
      %v291 = vld [vmem:[%s273 + $0x40] sm:$0xf]
      %v292 = vld [vmem:[%s273 + $0x48] sm:$0xf]
      %v293 = vld [vmem:[%s273 + $0x4c] sm:$0xf]
      %v294 = vld [vmem:[%s273 + $0x54] sm:$0xf]
      %v295 = vld [vmem:[%s273 + $0x58] sm:$0xf]
      %v296 = vld [vmem:[%s273 + $0x60] sm:$0xf]
      %v297 = vld [vmem:[%s273 + $0x64] sm:$0xf]
      %v298 = vld [vmem:[%s273 + $0x6c] sm:$0xf]
      %v299 = vld [vmem:[%s273 + $0x70] sm:$0xf]
      %v320 = vunpack.c.l.b16 %v280
      %v321 = vunpack.c.l.b16 %v281
      %v322 = vunpack.c.l.b16 %v282
      %v323 = vunpack.c.l.b16 %v283
      %v324 = vunpack.c.l.b16 %v284
      %v325 = vunpack.c.l.b16 %v285
      %v326 = vunpack.c.l.b16 %v286
      %v327 = vunpack.c.l.b16 %v287
      %v328 = vunpack.c.l.b16 %v288
      %v329 = vunpack.c.l.b16 %v289
      %v330 = vunpack.c.l.b16 %v290
      %v331 = vunpack.c.l.b16 %v291
      %v332 = vunpack.c.l.b16 %v292
      %v333 = vunpack.c.l.b16 %v293
      %v334 = vunpack.c.l.b16 %v294
      %v335 = vunpack.c.l.b16 %v295
      %v336 = vunpack.c.l.b16 %v296
      %v337 = vunpack.c.l.b16 %v297
      %v338 = vunpack.c.l.b16 %v298
      %v339 = vunpack.c.l.b16 %v299
      %v340 = vpack.c.b16 %v321, %v320
      %v341 = vpack.c.b16 %v323, %v322
      %v342 = vpack.c.b16 %v325, %v324
      %v343 = vpack.c.b16 %v327, %v326
      %v344 = vpack.c.b16 %v329, %v328
      %v345 = vpack.c.b16 %v331, %v330
      %v346 = vpack.c.b16 %v333, %v332
      %v347 = vpack.c.b16 %v335, %v334
      %v348 = vpack.c.b16 %v337, %v336
      %v349 = vpack.c.b16 %v339, %v338
      %vm360 = vcmask 31744
      %361 = vst.msk [vmem:[#allocation3] sm:$0xff] %vm360, %v340
      %362 = vst.msk [vmem:[#allocation3 + $0x8] sm:$0xff] %vm360, %v341
      %363 = vst.msk [vmem:[#allocation3 + $0x10] sm:$0xff] %vm360, %v342
      %364 = vst.msk [vmem:[#allocation3 + $0x18] sm:$0xff] %vm360, %v343
      %365 = vst.msk [vmem:[#allocation3 + $0x20] sm:$0xff] %vm360, %v344
      %366 = vst.msk [vmem:[#allocation3 + $0x28] sm:$0xff] %vm360, %v345
      %367 = vst.msk [vmem:[#allocation3 + $0x30] sm:$0xff] %vm360, %v346
      %368 = vst.msk [vmem:[#allocation3 + $0x38] sm:$0xff] %vm360, %v347
      %369 = vst.msk [vmem:[#allocation3 + $0x40] sm:$0xff] %vm360, %v348
      %370 = vst.msk [vmem:[#allocation3 + $0x48] sm:$0xff] %vm360, %v349
      %v371 = vld [vmem:[%s273] sm:$0xf]
      %v372 = vld [vmem:[%s273 + $0x4] sm:$0xf]
      %v373 = vld [vmem:[%s273 + $0x8] sm:$0x1]
      %v374 = vld [vmem:[%s273 + $0xc] sm:$0xf]
      %v375 = vld [vmem:[%s273 + $0x10] sm:$0xf]
      %v376 = vld [vmem:[%s273 + $0x14] sm:$0x1]
      %v377 = vld [vmem:[%s273 + $0x18] sm:$0xf]
      %v378 = vld [vmem:[%s273 + $0x1c] sm:$0xf]
      %v379 = vld [vmem:[%s273 + $0x20] sm:$0x1]
      %v380 = vld [vmem:[%s273 + $0x24] sm:$0xf]
      %v381 = vld [vmem:[%s273 + $0x28] sm:$0xf]
      %v382 = vld [vmem:[%s273 + $0x2c] sm:$0x1]
      %v383 = vld [vmem:[%s273 + $0x30] sm:$0xf]
      %v384 = vld [vmem:[%s273 + $0x34] sm:$0xf]
      %v385 = vld [vmem:[%s273 + $0x38] sm:$0x1]
      %v386 = vld [vmem:[%s273 + $0x3c] sm:$0xf]
      %v387 = vld [vmem:[%s273 + $0x40] sm:$0xf]
      %v388 = vld [vmem:[%s273 + $0x44] sm:$0x1]
      %v389 = vld [vmem:[%s273 + $0x48] sm:$0xf]
      %v390 = vld [vmem:[%s273 + $0x4c] sm:$0xf]
      %v391 = vld [vmem:[%s273 + $0x50] sm:$0x1]
      %v392 = vld [vmem:[%s273 + $0x54] sm:$0xf]
      %v393 = vld [vmem:[%s273 + $0x58] sm:$0xf]
      %v394 = vld [vmem:[%s273 + $0x5c] sm:$0x1]
      %v395 = vld [vmem:[%s273 + $0x60] sm:$0xf]
      %v396 = vld [vmem:[%s273 + $0x64] sm:$0xf]
      %v397 = vld [vmem:[%s273 + $0x68] sm:$0x1]
      %v398 = vld [vmem:[%s273 + $0x6c] sm:$0xf]
      %v399 = vld [vmem:[%s273 + $0x70] sm:$0xf]
      %v400 = vld [vmem:[%s273 + $0x74] sm:$0x1]
      %vm401 = vsmask.f32 3328
      %vm402 = vsmask.f32 7440
      %vm403 = vmor %vm401, %vm402
      %v405 = vshrl.u32 %v371, 16
      %v407 = vrot.slane %v405, 4
      %v408 = vshll.u32 %v371, 16
      %v410 = vrot.slane %v408, 5
      %v411 = vor.u32 %v407, %v410
      %v412 = vrot.slane %v411, 4
      %v414 = vshll.u32 %v372, 16
      %v416 = vrot.slane %v414, 5
      %v417 = vsel %vm403, %v412, %v416
      %v418 = vshrl.u32 %v372, 16
      %v420 = vrot.slane %v418, 4
      %v421 = vor.u32 %v420, %v416
      %v422 = vrot.slane %v421, 4
      %v424 = vshll.u32 %v373, 16
      %v426 = vrot.slane %v424, 5
      %v427 = vsel %vm403, %v422, %v426
      %v429 = vshrl.u32 %v374, 16
      %v431 = vrot.slane %v429, 4
      %v432 = vshll.u32 %v374, 16
      %v434 = vrot.slane %v432, 5
      %v435 = vor.u32 %v431, %v434
      %v436 = vrot.slane %v435, 4
      %v438 = vshll.u32 %v375, 16
      %v440 = vrot.slane %v438, 5
      %v441 = vsel %vm403, %v436, %v440
      %v442 = vshrl.u32 %v375, 16
      %v444 = vrot.slane %v442, 4
      %v445 = vor.u32 %v444, %v440
      %v446 = vrot.slane %v445, 4
      %v448 = vshll.u32 %v376, 16
      %v450 = vrot.slane %v448, 5
      %v451 = vsel %vm403, %v446, %v450
      %v453 = vshrl.u32 %v377, 16
      %v455 = vrot.slane %v453, 4
      %v456 = vshll.u32 %v377, 16
      %v458 = vrot.slane %v456, 5
      %v459 = vor.u32 %v455, %v458
      %v460 = vrot.slane %v459, 4
      %v462 = vshll.u32 %v378, 16
      %v464 = vrot.slane %v462, 5
      %v465 = vsel %vm403, %v460, %v464
      %v466 = vshrl.u32 %v378, 16
      %v468 = vrot.slane %v466, 4
      %v469 = vor.u32 %v468, %v464
      %v470 = vrot.slane %v469, 4
      %v472 = vshll.u32 %v379, 16
      %v474 = vrot.slane %v472, 5
      %v475 = vsel %vm403, %v470, %v474
      %v477 = vshrl.u32 %v380, 16
      %v479 = vrot.slane %v477, 4
      %v480 = vshll.u32 %v380, 16
      %v482 = vrot.slane %v480, 5
      %v483 = vor.u32 %v479, %v482
      %v484 = vrot.slane %v483, 4
      %v486 = vshll.u32 %v381, 16
      %v488 = vrot.slane %v486, 5
      %v489 = vsel %vm403, %v484, %v488
      %v490 = vshrl.u32 %v381, 16
      %v492 = vrot.slane %v490, 4
      %v493 = vor.u32 %v492, %v488
      %v494 = vrot.slane %v493, 4
      %v496 = vshll.u32 %v382, 16
      %v498 = vrot.slane %v496, 5
      %v499 = vsel %vm403, %v494, %v498
      %v501 = vshrl.u32 %v383, 16
      %v503 = vrot.slane %v501, 4
      %v504 = vshll.u32 %v383, 16
      %v506 = vrot.slane %v504, 5
      %v507 = vor.u32 %v503, %v506
      %v508 = vrot.slane %v507, 4
      %v510 = vshll.u32 %v384, 16
      %v512 = vrot.slane %v510, 5
      %v513 = vsel %vm403, %v508, %v512
      %v514 = vshrl.u32 %v384, 16
      %v516 = vrot.slane %v514, 4
      %v517 = vor.u32 %v516, %v512
      %v518 = vrot.slane %v517, 4
      %v520 = vshll.u32 %v385, 16
      %v522 = vrot.slane %v520, 5
      %v523 = vsel %vm403, %v518, %v522
      %v525 = vshrl.u32 %v386, 16
      %v527 = vrot.slane %v525, 4
      %v528 = vshll.u32 %v386, 16
      %v530 = vrot.slane %v528, 5
      %v531 = vor.u32 %v527, %v530
      %v532 = vrot.slane %v531, 4
      %v534 = vshll.u32 %v387, 16
      %v536 = vrot.slane %v534, 5
      %v537 = vsel %vm403, %v532, %v536
      %v538 = vshrl.u32 %v387, 16
      %v540 = vrot.slane %v538, 4
      %v541 = vor.u32 %v540, %v536
      %v542 = vrot.slane %v541, 4
      %v544 = vshll.u32 %v388, 16
      %v546 = vrot.slane %v544, 5
      %v547 = vsel %vm403, %v542, %v546
      %v549 = vshrl.u32 %v389, 16
      %v551 = vrot.slane %v549, 4
      %v552 = vshll.u32 %v389, 16
      %v554 = vrot.slane %v552, 5
      %v555 = vor.u32 %v551, %v554
      %v556 = vrot.slane %v555, 4
      %v558 = vshll.u32 %v390, 16
      %v560 = vrot.slane %v558, 5
      %v561 = vsel %vm403, %v556, %v560
      %v562 = vshrl.u32 %v390, 16
      %v564 = vrot.slane %v562, 4
      %v565 = vor.u32 %v564, %v560
      %v566 = vrot.slane %v565, 4
      %v568 = vshll.u32 %v391, 16
      %v570 = vrot.slane %v568, 5
      %v571 = vsel %vm403, %v566, %v570
      %v573 = vshrl.u32 %v392, 16
      %v575 = vrot.slane %v573, 4
      %v576 = vshll.u32 %v392, 16
      %v578 = vrot.slane %v576, 5
      %v579 = vor.u32 %v575, %v578
      %v580 = vrot.slane %v579, 4
      %v582 = vshll.u32 %v393, 16
      %v584 = vrot.slane %v582, 5
      %v585 = vsel %vm403, %v580, %v584
      %v586 = vshrl.u32 %v393, 16
      %v588 = vrot.slane %v586, 4
      %v589 = vor.u32 %v588, %v584
      %v590 = vrot.slane %v589, 4
      %v592 = vshll.u32 %v394, 16
      %v594 = vrot.slane %v592, 5
      %v595 = vsel %vm403, %v590, %v594
      %v597 = vshrl.u32 %v395, 16
      %v599 = vrot.slane %v597, 4
      %v600 = vshll.u32 %v395, 16
      %v602 = vrot.slane %v600, 5
      %v603 = vor.u32 %v599, %v602
      %v604 = vrot.slane %v603, 4
      %v606 = vshll.u32 %v396, 16
      %v608 = vrot.slane %v606, 5
      %v609 = vsel %vm403, %v604, %v608
      %v610 = vshrl.u32 %v396, 16
      %v612 = vrot.slane %v610, 4
      %v613 = vor.u32 %v612, %v608
      %v614 = vrot.slane %v613, 4
      %v616 = vshll.u32 %v397, 16
      %v618 = vrot.slane %v616, 5
      %v619 = vsel %vm403, %v614, %v618
      %v621 = vshrl.u32 %v398, 16
      %v623 = vrot.slane %v621, 4
      %v624 = vshll.u32 %v398, 16
      %v626 = vrot.slane %v624, 5
      %v627 = vor.u32 %v623, %v626
      %v628 = vrot.slane %v627, 4
      %v630 = vshll.u32 %v399, 16
      %v632 = vrot.slane %v630, 5
      %v633 = vsel %vm403, %v628, %v632
      %v634 = vshrl.u32 %v399, 16
      %v636 = vrot.slane %v634, 4
      %v637 = vor.u32 %v636, %v632
      %v638 = vrot.slane %v637, 4
      %v640 = vshll.u32 %v400, 16
      %v642 = vrot.slane %v640, 5
      %v643 = vsel %vm403, %v638, %v642
      %v644 = vunpack.c.l.b16 %v417
      %v645 = vunpack.c.l.b16 %v427
      %v646 = vunpack.c.l.b16 %v441
      %v647 = vunpack.c.l.b16 %v451
      %v648 = vunpack.c.l.b16 %v465
      %v649 = vunpack.c.l.b16 %v475
      %v650 = vunpack.c.l.b16 %v489
      %v651 = vunpack.c.l.b16 %v499
      %v652 = vunpack.c.l.b16 %v513
      %v653 = vunpack.c.l.b16 %v523
      %v654 = vunpack.c.l.b16 %v537
      %v655 = vunpack.c.l.b16 %v547
      %v656 = vunpack.c.l.b16 %v561
      %v657 = vunpack.c.l.b16 %v571
      %v658 = vunpack.c.l.b16 %v585
      %v659 = vunpack.c.l.b16 %v595
      %v660 = vunpack.c.l.b16 %v609
      %v661 = vunpack.c.l.b16 %v619
      %v662 = vunpack.c.l.b16 %v633
      %v663 = vunpack.c.l.b16 %v643
      %v664 = vpack.c.b16 %v645, %v644
      %v665 = vpack.c.b16 %v647, %v646
      %v666 = vpack.c.b16 %v649, %v648
      %v667 = vpack.c.b16 %v651, %v650
      %v668 = vpack.c.b16 %v653, %v652
      %v669 = vpack.c.b16 %v655, %v654
      %v670 = vpack.c.b16 %v657, %v656
      %v671 = vpack.c.b16 %v659, %v658
      %v672 = vpack.c.b16 %v661, %v660
      %v673 = vpack.c.b16 %v663, %v662
      %674 = vrot.lane.b32.xlu0 %v664, 4
      %v675 = vpop.permute.xlu0 %674
      %676 = vrot.lane.b32.xlu0 %v665, 4
      %v677 = vpop.permute.xlu0 %676
      %678 = vrot.lane.b32.xlu0 %v666, 4
      %v679 = vpop.permute.xlu0 %678
      %680 = vrot.lane.b32.xlu0 %v667, 4
      %v681 = vpop.permute.xlu0 %680
      %682 = vrot.lane.b32.xlu0 %v668, 4
      %v683 = vpop.permute.xlu0 %682
      %684 = vrot.lane.b32.xlu0 %v669, 4
      %v685 = vpop.permute.xlu0 %684
      %686 = vrot.lane.b32.xlu0 %v670, 4
      %v687 = vpop.permute.xlu0 %686
      %688 = vrot.lane.b32.xlu0 %v671, 4
      %v689 = vpop.permute.xlu0 %688
      %690 = vrot.lane.b32.xlu0 %v672, 4
      %v691 = vpop.permute.xlu0 %690
      %692 = vrot.lane.b32.xlu0 %v673, 4
      %v693 = vpop.permute.xlu0 %692
      %vm704 = vcmask 64544
      %705 = vst.msk [vmem:[#allocation3] sm:$0xff] %vm704, %v675
      %706 = vst.msk [vmem:[#allocation3 + $0x8] sm:$0xff] %vm704, %v677
      %707 = vst.msk [vmem:[#allocation3 + $0x10] sm:$0xff] %vm704, %v679
      %708 = vst.msk [vmem:[#allocation3 + $0x18] sm:$0xff] %vm704, %v681
      %709 = vst.msk [vmem:[#allocation3 + $0x20] sm:$0xff] %vm704, %v683
      %710 = vst.msk [vmem:[#allocation3 + $0x28] sm:$0xff] %vm704, %v685
      %711 = vst.msk [vmem:[#allocation3 + $0x30] sm:$0xff] %vm704, %v687
      %712 = vst.msk [vmem:[#allocation3 + $0x38] sm:$0xff] %vm704, %v689
      %713 = vst.msk [vmem:[#allocation3 + $0x40] sm:$0xff] %vm704, %v691
      %714 = vst.msk [vmem:[#allocation3 + $0x48] sm:$0xff] %vm704, %v693
      %v715 = vld [vmem:[%s273] sm:$0xe]
      %v716 = vld [vmem:[%s273 + $0x4] sm:$0xf]
      %v717 = vld [vmem:[%s273 + $0x8] sm:$0x1]
      %v718 = vld [vmem:[%s273 + $0xc] sm:$0xe]
      %v719 = vld [vmem:[%s273 + $0x10] sm:$0xf]
      %v720 = vld [vmem:[%s273 + $0x14] sm:$0x1]
      %v721 = vld [vmem:[%s273 + $0x18] sm:$0xe]
      %v722 = vld [vmem:[%s273 + $0x1c] sm:$0xf]
      %v723 = vld [vmem:[%s273 + $0x20] sm:$0x1]
      %v724 = vld [vmem:[%s273 + $0x24] sm:$0xe]
      %v725 = vld [vmem:[%s273 + $0x28] sm:$0xf]
      %v726 = vld [vmem:[%s273 + $0x2c] sm:$0x1]
      %v727 = vld [vmem:[%s273 + $0x30] sm:$0xe]
      %v728 = vld [vmem:[%s273 + $0x34] sm:$0xf]
      %v729 = vld [vmem:[%s273 + $0x38] sm:$0x1]
      %v730 = vld [vmem:[%s273 + $0x3c] sm:$0xe]
      %v731 = vld [vmem:[%s273 + $0x40] sm:$0xf]
      %v732 = vld [vmem:[%s273 + $0x44] sm:$0x1]
      %v733 = vld [vmem:[%s273 + $0x48] sm:$0xe]
      %v734 = vld [vmem:[%s273 + $0x4c] sm:$0xf]
      %v735 = vld [vmem:[%s273 + $0x50] sm:$0x1]
      %v736 = vld [vmem:[%s273 + $0x54] sm:$0xe]
      %v737 = vld [vmem:[%s273 + $0x58] sm:$0xf]
      %v738 = vld [vmem:[%s273 + $0x5c] sm:$0x1]
      %v739 = vld [vmem:[%s273 + $0x60] sm:$0xe]
      %v740 = vld [vmem:[%s273 + $0x64] sm:$0xf]
      %v741 = vld [vmem:[%s273 + $0x68] sm:$0x1]
      %v742 = vld [vmem:[%s273 + $0x6c] sm:$0xe]
      %v743 = vld [vmem:[%s273 + $0x70] sm:$0xf]
      %v744 = vld [vmem:[%s273 + $0x74] sm:$0x1]
      %vm775 = vcmask 1042432
      %vm776 = vcmask 1046532
      %vm777 = vmor %vm775, %vm776
      %v778 = vrot.slane %v715, 5
      %v779 = vrot.slane %v778, 4
      %v780 = vrot.slane %v716, 5
      %v781 = vsel %vm777, %v779, %v780
      %v782 = vrot.slane %v780, 4
      %v783 = vrot.slane %v717, 5
      %v784 = vsel %vm777, %v782, %v783
      %v785 = vrot.slane %v718, 5
      %v786 = vrot.slane %v785, 4
      %v787 = vrot.slane %v719, 5
      %v788 = vsel %vm777, %v786, %v787
      %v789 = vrot.slane %v787, 4
      %v790 = vrot.slane %v720, 5
      %v791 = vsel %vm777, %v789, %v790
      %v792 = vrot.slane %v721, 5
      %v793 = vrot.slane %v792, 4
      %v794 = vrot.slane %v722, 5
      %v795 = vsel %vm777, %v793, %v794
      %v796 = vrot.slane %v794, 4
      %v797 = vrot.slane %v723, 5
      %v798 = vsel %vm777, %v796, %v797
      %v799 = vrot.slane %v724, 5
      %v800 = vrot.slane %v799, 4
      %v801 = vrot.slane %v725, 5
      %v802 = vsel %vm777, %v800, %v801
      %v803 = vrot.slane %v801, 4
      %v804 = vrot.slane %v726, 5
      %v805 = vsel %vm777, %v803, %v804
      %v806 = vrot.slane %v727, 5
      %v807 = vrot.slane %v806, 4
      %v808 = vrot.slane %v728, 5
      %v809 = vsel %vm777, %v807, %v808
      %v810 = vrot.slane %v808, 4
      %v811 = vrot.slane %v729, 5
      %v812 = vsel %vm777, %v810, %v811
      %v813 = vrot.slane %v730, 5
      %v814 = vrot.slane %v813, 4
      %v815 = vrot.slane %v731, 5
      %v816 = vsel %vm777, %v814, %v815
      %v817 = vrot.slane %v815, 4
      %v818 = vrot.slane %v732, 5
      %v819 = vsel %vm777, %v817, %v818
      %v820 = vrot.slane %v733, 5
      %v821 = vrot.slane %v820, 4
      %v822 = vrot.slane %v734, 5
      %v823 = vsel %vm777, %v821, %v822
      %v824 = vrot.slane %v822, 4
      %v825 = vrot.slane %v735, 5
      %v826 = vsel %vm777, %v824, %v825
      %v827 = vrot.slane %v736, 5
      %v828 = vrot.slane %v827, 4
      %v829 = vrot.slane %v737, 5
      %v830 = vsel %vm777, %v828, %v829
      %v831 = vrot.slane %v829, 4
      %v832 = vrot.slane %v738, 5
      %v833 = vsel %vm777, %v831, %v832
      %v834 = vrot.slane %v739, 5
      %v835 = vrot.slane %v834, 4
      %v836 = vrot.slane %v740, 5
      %v837 = vsel %vm777, %v835, %v836
      %v838 = vrot.slane %v836, 4
      %v839 = vrot.slane %v741, 5
      %v840 = vsel %vm777, %v838, %v839
      %v841 = vrot.slane %v742, 5
      %v842 = vrot.slane %v841, 4
      %v843 = vrot.slane %v743, 5
      %v844 = vsel %vm777, %v842, %v843
      %v845 = vrot.slane %v843, 4
      %v846 = vrot.slane %v744, 5
      %v847 = vsel %vm777, %v845, %v846
      %v848 = vunpack.c.l.b16 %v781
      %v849 = vunpack.c.l.b16 %v784
      %v850 = vunpack.c.l.b16 %v788
      %v851 = vunpack.c.l.b16 %v791
      %v852 = vunpack.c.l.b16 %v795
      %v853 = vunpack.c.l.b16 %v798
      %v854 = vunpack.c.l.b16 %v802
      %v855 = vunpack.c.l.b16 %v805
      %v856 = vunpack.c.l.b16 %v809
      %v857 = vunpack.c.l.b16 %v812
      %v858 = vunpack.c.l.b16 %v816
      %v859 = vunpack.c.l.b16 %v819
      %v860 = vunpack.c.l.b16 %v823
      %v861 = vunpack.c.l.b16 %v826
      %v862 = vunpack.c.l.b16 %v830
      %v863 = vunpack.c.l.b16 %v833
      %v864 = vunpack.c.l.b16 %v837
      %v865 = vunpack.c.l.b16 %v840
      %v866 = vunpack.c.l.b16 %v844
      %v867 = vunpack.c.l.b16 %v847
      %v868 = vpack.c.b16 %v849, %v848
      %v869 = vpack.c.b16 %v851, %v850
      %v870 = vpack.c.b16 %v853, %v852
      %v871 = vpack.c.b16 %v855, %v854
      %v872 = vpack.c.b16 %v857, %v856
      %v873 = vpack.c.b16 %v859, %v858
      %v874 = vpack.c.b16 %v861, %v860
      %v875 = vpack.c.b16 %v863, %v862
      %v876 = vpack.c.b16 %v865, %v864
      %v877 = vpack.c.b16 %v867, %v866
      %878 = vrot.lane.b32.xlu0 %v868, 8
      %v879 = vpop.permute.xlu0 %878
      %880 = vrot.lane.b32.xlu0 %v869, 8
      %v881 = vpop.permute.xlu0 %880
      %882 = vrot.lane.b32.xlu0 %v870, 8
      %v883 = vpop.permute.xlu0 %882
      %884 = vrot.lane.b32.xlu0 %v871, 8
      %v885 = vpop.permute.xlu0 %884
      %886 = vrot.lane.b32.xlu0 %v872, 8
      %v887 = vpop.permute.xlu0 %886
      %888 = vrot.lane.b32.xlu0 %v873, 8
      %v889 = vpop.permute.xlu0 %888
      %890 = vrot.lane.b32.xlu0 %v874, 8
      %v891 = vpop.permute.xlu0 %890
      %892 = vrot.lane.b32.xlu0 %v875, 8
      %v893 = vpop.permute.xlu0 %892
      %894 = vrot.lane.b32.xlu0 %v876, 8
      %v895 = vpop.permute.xlu0 %894
      %896 = vrot.lane.b32.xlu0 %v877, 8
      %v897 = vpop.permute.xlu0 %896
      %vm908 = vcmask 97344
      %909 = vst.msk [vmem:[#allocation3] sm:$0xff] %vm908, %v879
      %910 = vst.msk [vmem:[#allocation3 + $0x8] sm:$0xff] %vm908, %v881
      %911 = vst.msk [vmem:[#allocation3 + $0x10] sm:$0xff] %vm908, %v883
      %912 = vst.msk [vmem:[#allocation3 + $0x18] sm:$0xff] %vm908, %v885
      %913 = vst.msk [vmem:[#allocation3 + $0x20] sm:$0xff] %vm908, %v887
      %914 = vst.msk [vmem:[#allocation3 + $0x28] sm:$0xff] %vm908, %v889
      %915 = vst.msk [vmem:[#allocation3 + $0x30] sm:$0xff] %vm908, %v891
      %916 = vst.msk [vmem:[#allocation3 + $0x38] sm:$0xff] %vm908, %v893
      %917 = vst.msk [vmem:[#allocation3 + $0x40] sm:$0xff] %vm908, %v895
      %918 = vst.msk [vmem:[#allocation3 + $0x48] sm:$0xff] %vm908, %v897
      %s919 = scalar_lea.vmem %s273, 12
      %v920 = vld [vmem:[%s919] sm:$0xf]
      %v921 = vld [vmem:[%s919 + $0x4] sm:$0xf]
      %v922 = vld [vmem:[%s919 + $0xc] sm:$0xf]
      %v923 = vld [vmem:[%s919 + $0x10] sm:$0xf]
      %v924 = vld [vmem:[%s919 + $0x18] sm:$0xf]
      %v925 = vld [vmem:[%s919 + $0x1c] sm:$0xf]
      %v926 = vld [vmem:[%s919 + $0x24] sm:$0xf]
      %v927 = vld [vmem:[%s919 + $0x28] sm:$0xf]
      %v928 = vld [vmem:[%s919 + $0x30] sm:$0xf]
      %v929 = vld [vmem:[%s919 + $0x34] sm:$0xf]
      %v930 = vld [vmem:[%s919 + $0x3c] sm:$0xf]
      %v931 = vld [vmem:[%s919 + $0x40] sm:$0xf]
      %v932 = vld [vmem:[%s919 + $0x48] sm:$0xf]
      %v933 = vld [vmem:[%s919 + $0x4c] sm:$0xf]
      %v934 = vld [vmem:[%s919 + $0x54] sm:$0xf]
      %v935 = vld [vmem:[%s919 + $0x58] sm:$0xf]
      %v936 = vld [vmem:[%s919 + $0x60] sm:$0xf]
      %v937 = vld [vmem:[%s919 + $0x64] sm:$0xf]
      %v938 = vld [vmem:[%s919 + $0x6c] sm:$0xf]
      %v939 = vld [vmem:[%s919 + $0x70] sm:$0xf]
      %v960 = vunpack.c.l.b16 %v920
      %v961 = vunpack.c.l.b16 %v921
      %v962 = vunpack.c.l.b16 %v922
      %v963 = vunpack.c.l.b16 %v923
      %v964 = vunpack.c.l.b16 %v924
      %v965 = vunpack.c.l.b16 %v925
      %v966 = vunpack.c.l.b16 %v926
      %v967 = vunpack.c.l.b16 %v927
      %v968 = vunpack.c.l.b16 %v928
      %v969 = vunpack.c.l.b16 %v929
      %v970 = vunpack.c.l.b16 %v930
      %v971 = vunpack.c.l.b16 %v931
      %v972 = vunpack.c.l.b16 %v932
      %v973 = vunpack.c.l.b16 %v933
      %v974 = vunpack.c.l.b16 %v934
      %v975 = vunpack.c.l.b16 %v935
      %v976 = vunpack.c.l.b16 %v936
      %v977 = vunpack.c.l.b16 %v937
      %v978 = vunpack.c.l.b16 %v938
      %v979 = vunpack.c.l.b16 %v939
      %v980 = vpack.c.b16 %v961, %v960
      %v981 = vpack.c.b16 %v963, %v962
      %v982 = vpack.c.b16 %v965, %v964
      %v983 = vpack.c.b16 %v967, %v966
      %v984 = vpack.c.b16 %v969, %v968
      %v985 = vpack.c.b16 %v971, %v970
      %v986 = vpack.c.b16 %v973, %v972
      %v987 = vpack.c.b16 %v975, %v974
      %v988 = vpack.c.b16 %v977, %v976
      %v989 = vpack.c.b16 %v979, %v978
      %990 = vrot.lane.b32.xlu0 %v980, 12
      %v991 = vpop.permute.xlu0 %990
      %992 = vrot.lane.b32.xlu0 %v981, 12
      %v993 = vpop.permute.xlu0 %992
      %994 = vrot.lane.b32.xlu0 %v982, 12
      %v995 = vpop.permute.xlu0 %994
      %996 = vrot.lane.b32.xlu0 %v983, 12
      %v997 = vpop.permute.xlu0 %996
      %998 = vrot.lane.b32.xlu0 %v984, 12
      %v999 = vpop.permute.xlu0 %998
      %1000 = vrot.lane.b32.xlu0 %v985, 12
      %v1001 = vpop.permute.xlu0 %1000
      %1002 = vrot.lane.b32.xlu0 %v986, 12
      %v1003 = vpop.permute.xlu0 %1002
      %1004 = vrot.lane.b32.xlu0 %v987, 12
      %v1005 = vpop.permute.xlu0 %1004
      %1006 = vrot.lane.b32.xlu0 %v988, 12
      %v1007 = vpop.permute.xlu0 %1006
      %1008 = vrot.lane.b32.xlu0 %v989, 12
      %v1009 = vpop.permute.xlu0 %1008
      %vm1020 = vcmask 130144
      %1021 = vst.msk [vmem:[#allocation3] sm:$0xff] %vm1020, %v991
      %1022 = vst.msk [vmem:[#allocation3 + $0x8] sm:$0xff] %vm1020, %v993
      %1023 = vst.msk [vmem:[#allocation3 + $0x10] sm:$0xff] %vm1020, %v995
      %1024 = vst.msk [vmem:[#allocation3 + $0x18] sm:$0xff] %vm1020, %v997
      %1025 = vst.msk [vmem:[#allocation3 + $0x20] sm:$0xff] %vm1020, %v999
      %1026 = vst.msk [vmem:[#allocation3 + $0x28] sm:$0xff] %vm1020, %v1001
      %1027 = vst.msk [vmem:[#allocation3 + $0x30] sm:$0xff] %vm1020, %v1003
      %1028 = vst.msk [vmem:[#allocation3 + $0x38] sm:$0xff] %vm1020, %v1005
      %1029 = vst.msk [vmem:[#allocation3 + $0x40] sm:$0xff] %vm1020, %v1007
      %1030 = vst.msk [vmem:[#allocation3 + $0x48] sm:$0xff] %vm1020, %v1009
      %v1031 = vld [vmem:[%s919] sm:$0xf]
      %v1032 = vld [vmem:[%s919 + $0x4] sm:$0xf]
      %v1033 = vld [vmem:[%s919 + $0x8] sm:$0x1]
      %v1034 = vld [vmem:[%s919 + $0xc] sm:$0xf]
      %v1035 = vld [vmem:[%s919 + $0x10] sm:$0xf]
      %v1036 = vld [vmem:[%s919 + $0x14] sm:$0x1]
      %v1037 = vld [vmem:[%s919 + $0x18] sm:$0xf]
      %v1038 = vld [vmem:[%s919 + $0x1c] sm:$0xf]
      %v1039 = vld [vmem:[%s919 + $0x20] sm:$0x1]
      %v1040 = vld [vmem:[%s919 + $0x24] sm:$0xf]
      %v1041 = vld [vmem:[%s919 + $0x28] sm:$0xf]
      %v1042 = vld [vmem:[%s919 + $0x2c] sm:$0x1]
      %v1043 = vld [vmem:[%s919 + $0x30] sm:$0xf]
      %v1044 = vld [vmem:[%s919 + $0x34] sm:$0xf]
      %v1045 = vld [vmem:[%s919 + $0x38] sm:$0x1]
      %v1046 = vld [vmem:[%s919 + $0x3c] sm:$0xf]
      %v1047 = vld [vmem:[%s919 + $0x40] sm:$0xf]
      %v1048 = vld [vmem:[%s919 + $0x44] sm:$0x1]
      %v1049 = vld [vmem:[%s919 + $0x48] sm:$0xf]
      %v1050 = vld [vmem:[%s919 + $0x4c] sm:$0xf]
      %v1051 = vld [vmem:[%s919 + $0x50] sm:$0x1]
      %v1052 = vld [vmem:[%s919 + $0x54] sm:$0xf]
      %v1053 = vld [vmem:[%s919 + $0x58] sm:$0xf]
      %v1054 = vld [vmem:[%s919 + $0x5c] sm:$0x1]
      %v1055 = vld [vmem:[%s919 + $0x60] sm:$0xf]
      %v1056 = vld [vmem:[%s919 + $0x64] sm:$0xf]
      %v1057 = vld [vmem:[%s919 + $0x68] sm:$0x1]
      %v1058 = vld [vmem:[%s919 + $0x6c] sm:$0xf]
      %v1059 = vld [vmem:[%s919 + $0x70] sm:$0xf]
      %v1060 = vld [vmem:[%s919 + $0x74] sm:$0x1]
      %v1062 = vshrl.u32 %v1031, 16
      %v1064 = vrot.slane %v1062, 4
      %v1065 = vshll.u32 %v1031, 16
      %v1067 = vrot.slane %v1065, 5
      %v1068 = vor.u32 %v1064, %v1067
      %v1069 = vrot.slane %v1068, 4
      %v1071 = vshll.u32 %v1032, 16
      %v1073 = vrot.slane %v1071, 5
      %v1074 = vsel %vm403, %v1069, %v1073
      %v1075 = vshrl.u32 %v1032, 16
      %v1077 = vrot.slane %v1075, 4
      %v1078 = vor.u32 %v1077, %v1073
      %v1079 = vrot.slane %v1078, 4
      %v1081 = vshll.u32 %v1033, 16
      %v1083 = vrot.slane %v1081, 5
      %v1084 = vsel %vm403, %v1079, %v1083
      %v1086 = vshrl.u32 %v1034, 16
      %v1088 = vrot.slane %v1086, 4
      %v1089 = vshll.u32 %v1034, 16
      %v1091 = vrot.slane %v1089, 5
      %v1092 = vor.u32 %v1088, %v1091
      %v1093 = vrot.slane %v1092, 4
      %v1095 = vshll.u32 %v1035, 16
      %v1097 = vrot.slane %v1095, 5
      %v1098 = vsel %vm403, %v1093, %v1097
      %v1099 = vshrl.u32 %v1035, 16
      %v1101 = vrot.slane %v1099, 4
      %v1102 = vor.u32 %v1101, %v1097
      %v1103 = vrot.slane %v1102, 4
      %v1105 = vshll.u32 %v1036, 16
      %v1107 = vrot.slane %v1105, 5
      %v1108 = vsel %vm403, %v1103, %v1107
      %v1110 = vshrl.u32 %v1037, 16
      %v1112 = vrot.slane %v1110, 4
      %v1113 = vshll.u32 %v1037, 16
      %v1115 = vrot.slane %v1113, 5
      %v1116 = vor.u32 %v1112, %v1115
      %v1117 = vrot.slane %v1116, 4
      %v1119 = vshll.u32 %v1038, 16
      %v1121 = vrot.slane %v1119, 5
      %v1122 = vsel %vm403, %v1117, %v1121
      %v1123 = vshrl.u32 %v1038, 16
      %v1125 = vrot.slane %v1123, 4
      %v1126 = vor.u32 %v1125, %v1121
      %v1127 = vrot.slane %v1126, 4
      %v1129 = vshll.u32 %v1039, 16
      %v1131 = vrot.slane %v1129, 5
      %v1132 = vsel %vm403, %v1127, %v1131
      %v1134 = vshrl.u32 %v1040, 16
      %v1136 = vrot.slane %v1134, 4
      %v1137 = vshll.u32 %v1040, 16
      %v1139 = vrot.slane %v1137, 5
      %v1140 = vor.u32 %v1136, %v1139
      %v1141 = vrot.slane %v1140, 4
      %v1143 = vshll.u32 %v1041, 16
      %v1145 = vrot.slane %v1143, 5
      %v1146 = vsel %vm403, %v1141, %v1145
      %v1147 = vshrl.u32 %v1041, 16
      %v1149 = vrot.slane %v1147, 4
      %v1150 = vor.u32 %v1149, %v1145
      %v1151 = vrot.slane %v1150, 4
      %v1153 = vshll.u32 %v1042, 16
      %v1155 = vrot.slane %v1153, 5
      %v1156 = vsel %vm403, %v1151, %v1155
      %v1158 = vshrl.u32 %v1043, 16
      %v1160 = vrot.slane %v1158, 4
      %v1161 = vshll.u32 %v1043, 16
      %v1163 = vrot.slane %v1161, 5
      %v1164 = vor.u32 %v1160, %v1163
      %v1165 = vrot.slane %v1164, 4
      %v1167 = vshll.u32 %v1044, 16
      %v1169 = vrot.slane %v1167, 5
      %v1170 = vsel %vm403, %v1165, %v1169
      %v1171 = vshrl.u32 %v1044, 16
      %v1173 = vrot.slane %v1171, 4
      %v1174 = vor.u32 %v1173, %v1169
      %v1175 = vrot.slane %v1174, 4
      %v1177 = vshll.u32 %v1045, 16
      %v1179 = vrot.slane %v1177, 5
      %v1180 = vsel %vm403, %v1175, %v1179
      %v1182 = vshrl.u32 %v1046, 16
      %v1184 = vrot.slane %v1182, 4
      %v1185 = vshll.u32 %v1046, 16
      %v1187 = vrot.slane %v1185, 5
      %v1188 = vor.u32 %v1184, %v1187
      %v1189 = vrot.slane %v1188, 4
      %v1191 = vshll.u32 %v1047, 16
      %v1193 = vrot.slane %v1191, 5
      %v1194 = vsel %vm403, %v1189, %v1193
      %v1195 = vshrl.u32 %v1047, 16
      %v1197 = vrot.slane %v1195, 4
      %v1198 = vor.u32 %v1197, %v1193
      %v1199 = vrot.slane %v1198, 4
      %v1201 = vshll.u32 %v1048, 16
      %v1203 = vrot.slane %v1201, 5
      %v1204 = vsel %vm403, %v1199, %v1203
      %v1206 = vshrl.u32 %v1049, 16
      %v1208 = vrot.slane %v1206, 4
      %v1209 = vshll.u32 %v1049, 16
      %v1211 = vrot.slane %v1209, 5
      %v1212 = vor.u32 %v1208, %v1211
      %v1213 = vrot.slane %v1212, 4
      %v1215 = vshll.u32 %v1050, 16
      %v1217 = vrot.slane %v1215, 5
      %v1218 = vsel %vm403, %v1213, %v1217
      %v1219 = vshrl.u32 %v1050, 16
      %v1221 = vrot.slane %v1219, 4
      %v1222 = vor.u32 %v1221, %v1217
      %v1223 = vrot.slane %v1222, 4
      %v1225 = vshll.u32 %v1051, 16
      %v1227 = vrot.slane %v1225, 5
      %v1228 = vsel %vm403, %v1223, %v1227
      %v1230 = vshrl.u32 %v1052, 16
      %v1232 = vrot.slane %v1230, 4
      %v1233 = vshll.u32 %v1052, 16
      %v1235 = vrot.slane %v1233, 5
      %v1236 = vor.u32 %v1232, %v1235
      %v1237 = vrot.slane %v1236, 4
      %v1239 = vshll.u32 %v1053, 16
      %v1241 = vrot.slane %v1239, 5
      %v1242 = vsel %vm403, %v1237, %v1241
      %v1243 = vshrl.u32 %v1053, 16
      %v1245 = vrot.slane %v1243, 4
      %v1246 = vor.u32 %v1245, %v1241
      %v1247 = vrot.slane %v1246, 4
      %v1249 = vshll.u32 %v1054, 16
      %v1251 = vrot.slane %v1249, 5
      %v1252 = vsel %vm403, %v1247, %v1251
      %v1254 = vshrl.u32 %v1055, 16
      %v1256 = vrot.slane %v1254, 4
      %v1257 = vshll.u32 %v1055, 16
      %v1259 = vrot.slane %v1257, 5
      %v1260 = vor.u32 %v1256, %v1259
      %v1261 = vrot.slane %v1260, 4
      %v1263 = vshll.u32 %v1056, 16
      %v1265 = vrot.slane %v1263, 5
      %v1266 = vsel %vm403, %v1261, %v1265
      %v1267 = vshrl.u32 %v1056, 16
      %v1269 = vrot.slane %v1267, 4
      %v1270 = vor.u32 %v1269, %v1265
      %v1271 = vrot.slane %v1270, 4
      %v1273 = vshll.u32 %v1057, 16
      %v1275 = vrot.slane %v1273, 5
      %v1276 = vsel %vm403, %v1271, %v1275
      %v1278 = vshrl.u32 %v1058, 16
      %v1280 = vrot.slane %v1278, 4
      %v1281 = vshll.u32 %v1058, 16
      %v1283 = vrot.slane %v1281, 5
      %v1284 = vor.u32 %v1280, %v1283
      %v1285 = vrot.slane %v1284, 4
      %v1287 = vshll.u32 %v1059, 16
      %v1289 = vrot.slane %v1287, 5
      %v1290 = vsel %vm403, %v1285, %v1289
      %v1291 = vshrl.u32 %v1059, 16
      %v1293 = vrot.slane %v1291, 4
      %v1294 = vor.u32 %v1293, %v1289
      %v1295 = vrot.slane %v1294, 4
      %v1297 = vshll.u32 %v1060, 16
      %v1299 = vrot.slane %v1297, 5
      %v1300 = vsel %vm403, %v1295, %v1299
      %v1301 = vunpack.c.l.b16 %v1074
      %v1302 = vunpack.c.l.b16 %v1084
      %v1303 = vunpack.c.l.b16 %v1098
      %v1304 = vunpack.c.l.b16 %v1108
      %v1305 = vunpack.c.l.b16 %v1122
      %v1306 = vunpack.c.l.b16 %v1132
      %v1307 = vunpack.c.l.b16 %v1146
      %v1308 = vunpack.c.l.b16 %v1156
      %v1309 = vunpack.c.l.b16 %v1170
      %v1310 = vunpack.c.l.b16 %v1180
      %v1311 = vunpack.c.l.b16 %v1194
      %v1312 = vunpack.c.l.b16 %v1204
      %v1313 = vunpack.c.l.b16 %v1218
      %v1314 = vunpack.c.l.b16 %v1228
      %v1315 = vunpack.c.l.b16 %v1242
      %v1316 = vunpack.c.l.b16 %v1252
      %v1317 = vunpack.c.l.b16 %v1266
      %v1318 = vunpack.c.l.b16 %v1276
      %v1319 = vunpack.c.l.b16 %v1290
      %v1320 = vunpack.c.l.b16 %v1300
      %v1321 = vpack.c.b16 %v1302, %v1301
      %v1322 = vpack.c.b16 %v1304, %v1303
      %v1323 = vpack.c.b16 %v1306, %v1305
      %v1324 = vpack.c.b16 %v1308, %v1307
      %v1325 = vpack.c.b16 %v1310, %v1309
      %v1326 = vpack.c.b16 %v1312, %v1311
      %v1327 = vpack.c.b16 %v1314, %v1313
      %v1328 = vpack.c.b16 %v1316, %v1315
      %v1329 = vpack.c.b16 %v1318, %v1317
      %v1330 = vpack.c.b16 %v1320, %v1319
      %1331 = vrot.lane.b32.xlu0 %v1321, 16
      %v1332 = vpop.permute.xlu0 %1331
      %1333 = vrot.lane.b32.xlu0 %v1322, 16
      %v1334 = vpop.permute.xlu0 %1333
      %1335 = vrot.lane.b32.xlu0 %v1323, 16
      %v1336 = vpop.permute.xlu0 %1335
      %1337 = vrot.lane.b32.xlu0 %v1324, 16
      %v1338 = vpop.permute.xlu0 %1337
      %1339 = vrot.lane.b32.xlu0 %v1325, 16
      %v1340 = vpop.permute.xlu0 %1339
      %1341 = vrot.lane.b32.xlu0 %v1326, 16
      %v1342 = vpop.permute.xlu0 %1341
      %1343 = vrot.lane.b32.xlu0 %v1327, 16
      %v1344 = vpop.permute.xlu0 %1343
      %1345 = vrot.lane.b32.xlu0 %v1328, 16
      %v1346 = vpop.permute.xlu0 %1345
      %1347 = vrot.lane.b32.xlu0 %v1329, 16
      %v1348 = vpop.permute.xlu0 %1347
      %1349 = vrot.lane.b32.xlu0 %v1330, 16
      %v1350 = vpop.permute.xlu0 %1349
      %vm1361 = vcmask 162944
      %1362 = vst.msk [vmem:[#allocation3] sm:$0xff] %vm1361, %v1332
      %1363 = vst.msk [vmem:[#allocation3 + $0x8] sm:$0xff] %vm1361, %v1334
      %1364 = vst.msk [vmem:[#allocation3 + $0x10] sm:$0xff] %vm1361, %v1336
      %1365 = vst.msk [vmem:[#allocation3 + $0x18] sm:$0xff] %vm1361, %v1338
      %1366 = vst.msk [vmem:[#allocation3 + $0x20] sm:$0xff] %vm1361, %v1340
      %1367 = vst.msk [vmem:[#allocation3 + $0x28] sm:$0xff] %vm1361, %v1342
      %1368 = vst.msk [vmem:[#allocation3 + $0x30] sm:$0xff] %vm1361, %v1344
      %1369 = vst.msk [vmem:[#allocation3 + $0x38] sm:$0xff] %vm1361, %v1346
      %1370 = vst.msk [vmem:[#allocation3 + $0x40] sm:$0xff] %vm1361, %v1348
      %1371 = vst.msk [vmem:[#allocation3 + $0x48] sm:$0xff] %vm1361, %v1350
      %v1372 = vld [vmem:[%s919] sm:$0xe]
      %v1373 = vld [vmem:[%s919 + $0x4] sm:$0xf]
      %v1374 = vld [vmem:[%s919 + $0x8] sm:$0x1]
      %v1375 = vld [vmem:[%s919 + $0xc] sm:$0xe]
      %v1376 = vld [vmem:[%s919 + $0x10] sm:$0xf]
      %v1377 = vld [vmem:[%s919 + $0x14] sm:$0x1]
      %v1378 = vld [vmem:[%s919 + $0x18] sm:$0xe]
      %v1379 = vld [vmem:[%s919 + $0x1c] sm:$0xf]
      %v1380 = vld [vmem:[%s919 + $0x20] sm:$0x1]
      %v1381 = vld [vmem:[%s919 + $0x24] sm:$0xe]
      %v1382 = vld [vmem:[%s919 + $0x28] sm:$0xf]
      %v1383 = vld [vmem:[%s919 + $0x2c] sm:$0x1]
      %v1384 = vld [vmem:[%s919 + $0x30] sm:$0xe]
      %v1385 = vld [vmem:[%s919 + $0x34] sm:$0xf]
      %v1386 = vld [vmem:[%s919 + $0x38] sm:$0x1]
      %v1387 = vld [vmem:[%s919 + $0x3c] sm:$0xe]
      %v1388 = vld [vmem:[%s919 + $0x40] sm:$0xf]
      %v1389 = vld [vmem:[%s919 + $0x44] sm:$0x1]
      %v1390 = vld [vmem:[%s919 + $0x48] sm:$0xe]
      %v1391 = vld [vmem:[%s919 + $0x4c] sm:$0xf]
      %v1392 = vld [vmem:[%s919 + $0x50] sm:$0x1]
      %v1393 = vld [vmem:[%s919 + $0x54] sm:$0xe]
      %v1394 = vld [vmem:[%s919 + $0x58] sm:$0xf]
      %v1395 = vld [vmem:[%s919 + $0x5c] sm:$0x1]
      %v1396 = vld [vmem:[%s919 + $0x60] sm:$0xe]
      %v1397 = vld [vmem:[%s919 + $0x64] sm:$0xf]
      %v1398 = vld [vmem:[%s919 + $0x68] sm:$0x1]
      %v1399 = vld [vmem:[%s919 + $0x6c] sm:$0xe]
      %v1400 = vld [vmem:[%s919 + $0x70] sm:$0xf]
      %v1401 = vld [vmem:[%s919 + $0x74] sm:$0x1]
      %v1432 = vrot.slane %v1372, 5
      %v1433 = vrot.slane %v1432, 4
      %v1434 = vrot.slane %v1373, 5
      %v1435 = vsel %vm777, %v1433, %v1434
      %v1436 = vrot.slane %v1434, 4
      %v1437 = vrot.slane %v1374, 5
      %v1438 = vsel %vm777, %v1436, %v1437
      %v1439 = vrot.slane %v1375, 5
      %v1440 = vrot.slane %v1439, 4
      %v1441 = vrot.slane %v1376, 5
      %v1442 = vsel %vm777, %v1440, %v1441
      %v1443 = vrot.slane %v1441, 4
      %v1444 = vrot.slane %v1377, 5
      %v1445 = vsel %vm777, %v1443, %v1444
      %v1446 = vrot.slane %v1378, 5
      %v1447 = vrot.slane %v1446, 4
      %v1448 = vrot.slane %v1379, 5
      %v1449 = vsel %vm777, %v1447, %v1448
      %v1450 = vrot.slane %v1448, 4
      %v1451 = vrot.slane %v1380, 5
      %v1452 = vsel %vm777, %v1450, %v1451
      %v1453 = vrot.slane %v1381, 5
      %v1454 = vrot.slane %v1453, 4
      %v1455 = vrot.slane %v1382, 5
      %v1456 = vsel %vm777, %v1454, %v1455
      %v1457 = vrot.slane %v1455, 4
      %v1458 = vrot.slane %v1383, 5
      %v1459 = vsel %vm777, %v1457, %v1458
      %v1460 = vrot.slane %v1384, 5
      %v1461 = vrot.slane %v1460, 4
      %v1462 = vrot.slane %v1385, 5
      %v1463 = vsel %vm777, %v1461, %v1462
      %v1464 = vrot.slane %v1462, 4
      %v1465 = vrot.slane %v1386, 5
      %v1466 = vsel %vm777, %v1464, %v1465
      %v1467 = vrot.slane %v1387, 5
      %v1468 = vrot.slane %v1467, 4
      %v1469 = vrot.slane %v1388, 5
      %v1470 = vsel %vm777, %v1468, %v1469
      %v1471 = vrot.slane %v1469, 4
      %v1472 = vrot.slane %v1389, 5
      %v1473 = vsel %vm777, %v1471, %v1472
      %v1474 = vrot.slane %v1390, 5
      %v1475 = vrot.slane %v1474, 4
      %v1476 = vrot.slane %v1391, 5
      %v1477 = vsel %vm777, %v1475, %v1476
      %v1478 = vrot.slane %v1476, 4
      %v1479 = vrot.slane %v1392, 5
      %v1480 = vsel %vm777, %v1478, %v1479
      %v1481 = vrot.slane %v1393, 5
      %v1482 = vrot.slane %v1481, 4
      %v1483 = vrot.slane %v1394, 5
      %v1484 = vsel %vm777, %v1482, %v1483
      %v1485 = vrot.slane %v1483, 4
      %v1486 = vrot.slane %v1395, 5
      %v1487 = vsel %vm777, %v1485, %v1486
      %v1488 = vrot.slane %v1396, 5
      %v1489 = vrot.slane %v1488, 4
      %v1490 = vrot.slane %v1397, 5
      %v1491 = vsel %vm777, %v1489, %v1490
      %v1492 = vrot.slane %v1490, 4
      %v1493 = vrot.slane %v1398, 5
      %v1494 = vsel %vm777, %v1492, %v1493
      %v1495 = vrot.slane %v1399, 5
      %v1496 = vrot.slane %v1495, 4
      %v1497 = vrot.slane %v1400, 5
      %v1498 = vsel %vm777, %v1496, %v1497
      %v1499 = vrot.slane %v1497, 4
      %v1500 = vrot.slane %v1401, 5
      %v1501 = vsel %vm777, %v1499, %v1500
      %v1502 = vunpack.c.l.b16 %v1435
      %v1503 = vunpack.c.l.b16 %v1438
      %v1504 = vunpack.c.l.b16 %v1442
      %v1505 = vunpack.c.l.b16 %v1445
      %v1506 = vunpack.c.l.b16 %v1449
      %v1507 = vunpack.c.l.b16 %v1452
      %v1508 = vunpack.c.l.b16 %v1456
      %v1509 = vunpack.c.l.b16 %v1459
      %v1510 = vunpack.c.l.b16 %v1463
      %v1511 = vunpack.c.l.b16 %v1466
      %v1512 = vunpack.c.l.b16 %v1470
      %v1513 = vunpack.c.l.b16 %v1473
      %v1514 = vunpack.c.l.b16 %v1477
      %v1515 = vunpack.c.l.b16 %v1480
      %v1516 = vunpack.c.l.b16 %v1484
      %v1517 = vunpack.c.l.b16 %v1487
      %v1518 = vunpack.c.l.b16 %v1491
      %v1519 = vunpack.c.l.b16 %v1494
      %v1520 = vunpack.c.l.b16 %v1498
      %v1521 = vunpack.c.l.b16 %v1501
      %v1522 = vpack.c.b16 %v1503, %v1502
      %v1523 = vpack.c.b16 %v1505, %v1504
      %v1524 = vpack.c.b16 %v1507, %v1506
      %v1525 = vpack.c.b16 %v1509, %v1508
      %v1526 = vpack.c.b16 %v1511, %v1510
      %v1527 = vpack.c.b16 %v1513, %v1512
      %v1528 = vpack.c.b16 %v1515, %v1514
      %v1529 = vpack.c.b16 %v1517, %v1516
      %v1530 = vpack.c.b16 %v1519, %v1518
      %v1531 = vpack.c.b16 %v1521, %v1520
      %1532 = vrot.lane.b32.xlu0 %v1522, 20
      %v1533 = vpop.permute.xlu0 %1532
      %1534 = vrot.lane.b32.xlu0 %v1523, 20
      %v1535 = vpop.permute.xlu0 %1534
      %1536 = vrot.lane.b32.xlu0 %v1524, 20
      %v1537 = vpop.permute.xlu0 %1536
      %1538 = vrot.lane.b32.xlu0 %v1525, 20
      %v1539 = vpop.permute.xlu0 %1538
      %1540 = vrot.lane.b32.xlu0 %v1526, 20
      %v1541 = vpop.permute.xlu0 %1540
      %1542 = vrot.lane.b32.xlu0 %v1527, 20
      %v1543 = vpop.permute.xlu0 %1542
      %1544 = vrot.lane.b32.xlu0 %v1528, 20
      %v1545 = vpop.permute.xlu0 %1544
      %1546 = vrot.lane.b32.xlu0 %v1529, 20
      %v1547 = vpop.permute.xlu0 %1546
      %1548 = vrot.lane.b32.xlu0 %v1530, 20
      %v1549 = vpop.permute.xlu0 %1548
      %1550 = vrot.lane.b32.xlu0 %v1531, 20
      %v1551 = vpop.permute.xlu0 %1550
      %vm1562 = vcmask 195744
      %1563 = vst.msk [vmem:[#allocation3] sm:$0xff] %vm1562, %v1533
      %1564 = vst.msk [vmem:[#allocation3 + $0x8] sm:$0xff] %vm1562, %v1535
      %1565 = vst.msk [vmem:[#allocation3 + $0x10] sm:$0xff] %vm1562, %v1537
      %1566 = vst.msk [vmem:[#allocation3 + $0x18] sm:$0xff] %vm1562, %v1539
      %1567 = vst.msk [vmem:[#allocation3 + $0x20] sm:$0xff] %vm1562, %v1541
      %1568 = vst.msk [vmem:[#allocation3 + $0x28] sm:$0xff] %vm1562, %v1543
      %1569 = vst.msk [vmem:[#allocation3 + $0x30] sm:$0xff] %vm1562, %v1545
      %1570 = vst.msk [vmem:[#allocation3 + $0x38] sm:$0xff] %vm1562, %v1547
      %1571 = vst.msk [vmem:[#allocation3 + $0x40] sm:$0xff] %vm1562, %v1549
      %1572 = vst.msk [vmem:[#allocation3 + $0x48] sm:$0xff] %vm1562, %v1551
      %s1573 = scalar_lea.vmem %s273, 24
      %v1574 = vld [vmem:[%s1573] sm:$0xf]
      %v1575 = vld [vmem:[%s1573 + $0x4] sm:$0xf]
      %v1576 = vld [vmem:[%s1573 + $0xc] sm:$0xf]
      %v1577 = vld [vmem:[%s1573 + $0x10] sm:$0xf]
      %v1578 = vld [vmem:[%s1573 + $0x18] sm:$0xf]
      %v1579 = vld [vmem:[%s1573 + $0x1c] sm:$0xf]
      %v1580 = vld [vmem:[%s1573 + $0x24] sm:$0xf]
      %v1581 = vld [vmem:[%s1573 + $0x28] sm:$0xf]
      %v1582 = vld [vmem:[%s1573 + $0x30] sm:$0xf]
      %v1583 = vld [vmem:[%s1573 + $0x34] sm:$0xf]
      %v1584 = vld [vmem:[%s1573 + $0x3c] sm:$0xf]
      %v1585 = vld [vmem:[%s1573 + $0x40] sm:$0xf]
      %v1586 = vld [vmem:[%s1573 + $0x48] sm:$0xf]
      %v1587 = vld [vmem:[%s1573 + $0x4c] sm:$0xf]
      %v1588 = vld [vmem:[%s1573 + $0x54] sm:$0xf]
      %v1589 = vld [vmem:[%s1573 + $0x58] sm:$0xf]
      %v1590 = vld [vmem:[%s1573 + $0x60] sm:$0xf]
      %v1591 = vld [vmem:[%s1573 + $0x64] sm:$0xf]
      %v1592 = vld [vmem:[%s1573 + $0x6c] sm:$0xf]
      %v1593 = vld [vmem:[%s1573 + $0x70] sm:$0xf]
      %v1614 = vunpack.c.l.b16 %v1574
      %v1615 = vunpack.c.l.b16 %v1575
      %v1616 = vunpack.c.l.b16 %v1576
      %v1617 = vunpack.c.l.b16 %v1577
      %v1618 = vunpack.c.l.b16 %v1578
      %v1619 = vunpack.c.l.b16 %v1579
      %v1620 = vunpack.c.l.b16 %v1580
      %v1621 = vunpack.c.l.b16 %v1581
      %v1622 = vunpack.c.l.b16 %v1582
      %v1623 = vunpack.c.l.b16 %v1583
      %v1624 = vunpack.c.l.b16 %v1584
      %v1625 = vunpack.c.l.b16 %v1585
      %v1626 = vunpack.c.l.b16 %v1586
      %v1627 = vunpack.c.l.b16 %v1587
      %v1628 = vunpack.c.l.b16 %v1588
      %v1629 = vunpack.c.l.b16 %v1589
      %v1630 = vunpack.c.l.b16 %v1590
      %v1631 = vunpack.c.l.b16 %v1591
      %v1632 = vunpack.c.l.b16 %v1592
      %v1633 = vunpack.c.l.b16 %v1593
      %v1634 = vpack.c.b16 %v1615, %v1614
      %v1635 = vpack.c.b16 %v1617, %v1616
      %v1636 = vpack.c.b16 %v1619, %v1618
      %v1637 = vpack.c.b16 %v1621, %v1620
      %v1638 = vpack.c.b16 %v1623, %v1622
      %v1639 = vpack.c.b16 %v1625, %v1624
      %v1640 = vpack.c.b16 %v1627, %v1626
      %v1641 = vpack.c.b16 %v1629, %v1628
      %v1642 = vpack.c.b16 %v1631, %v1630
      %v1643 = vpack.c.b16 %v1633, %v1632
      %1644 = vrot.lane.b32.xlu0 %v1634, 24
      %v1645 = vpop.permute.xlu0 %1644
      %1646 = vrot.lane.b32.xlu0 %v1635, 24
      %v1647 = vpop.permute.xlu0 %1646
      %1648 = vrot.lane.b32.xlu0 %v1636, 24
      %v1649 = vpop.permute.xlu0 %1648
      %1650 = vrot.lane.b32.xlu0 %v1637, 24
      %v1651 = vpop.permute.xlu0 %1650
      %1652 = vrot.lane.b32.xlu0 %v1638, 24
      %v1653 = vpop.permute.xlu0 %1652
      %1654 = vrot.lane.b32.xlu0 %v1639, 24
      %v1655 = vpop.permute.xlu0 %1654
      %1656 = vrot.lane.b32.xlu0 %v1640, 24
      %v1657 = vpop.permute.xlu0 %1656
      %1658 = vrot.lane.b32.xlu0 %v1641, 24
      %v1659 = vpop.permute.xlu0 %1658
      %1660 = vrot.lane.b32.xlu0 %v1642, 24
      %v1661 = vpop.permute.xlu0 %1660
      %1662 = vrot.lane.b32.xlu0 %v1643, 24
      %v1663 = vpop.permute.xlu0 %1662
      %vm1674 = vcmask 228544
      %1675 = vst.msk [vmem:[#allocation3] sm:$0xff] %vm1674, %v1645
      %1676 = vst.msk [vmem:[#allocation3 + $0x8] sm:$0xff] %vm1674, %v1647
      %1677 = vst.msk [vmem:[#allocation3 + $0x10] sm:$0xff] %vm1674, %v1649
      %1678 = vst.msk [vmem:[#allocation3 + $0x18] sm:$0xff] %vm1674, %v1651
      %1679 = vst.msk [vmem:[#allocation3 + $0x20] sm:$0xff] %vm1674, %v1653
      %1680 = vst.msk [vmem:[#allocation3 + $0x28] sm:$0xff] %vm1674, %v1655
      %1681 = vst.msk [vmem:[#allocation3 + $0x30] sm:$0xff] %vm1674, %v1657
      %1682 = vst.msk [vmem:[#allocation3 + $0x38] sm:$0xff] %vm1674, %v1659
      %1683 = vst.msk [vmem:[#allocation3 + $0x40] sm:$0xff] %vm1674, %v1661
      %1684 = vst.msk [vmem:[#allocation3 + $0x48] sm:$0xff] %vm1674, %v1663
      %v1685 = vld [vmem:[%s1573] sm:$0xf]
      %v1686 = vld [vmem:[%s1573 + $0x4] sm:$0xf]
      %v1687 = vld [vmem:[%s1573 + $0x8] sm:$0x1]
      %v1688 = vld [vmem:[%s1573 + $0xc] sm:$0xf]
      %v1689 = vld [vmem:[%s1573 + $0x10] sm:$0xf]
      %v1690 = vld [vmem:[%s1573 + $0x14] sm:$0x1]
      %v1691 = vld [vmem:[%s1573 + $0x18] sm:$0xf]
      %v1692 = vld [vmem:[%s1573 + $0x1c] sm:$0xf]
      %v1693 = vld [vmem:[%s1573 + $0x20] sm:$0x1]
      %v1694 = vld [vmem:[%s1573 + $0x24] sm:$0xf]
      %v1695 = vld [vmem:[%s1573 + $0x28] sm:$0xf]
      %v1696 = vld [vmem:[%s1573 + $0x2c] sm:$0x1]
      %v1697 = vld [vmem:[%s1573 + $0x30] sm:$0xf]
      %v1698 = vld [vmem:[%s1573 + $0x34] sm:$0xf]
      %v1699 = vld [vmem:[%s1573 + $0x38] sm:$0x1]
      %v1700 = vld [vmem:[%s1573 + $0x3c] sm:$0xf]
      %v1701 = vld [vmem:[%s1573 + $0x40] sm:$0xf]
      %v1702 = vld [vmem:[%s1573 + $0x44] sm:$0x1]
      %v1703 = vld [vmem:[%s1573 + $0x48] sm:$0xf]
      %v1704 = vld [vmem:[%s1573 + $0x4c] sm:$0xf]
      %v1705 = vld [vmem:[%s1573 + $0x50] sm:$0x1]
      %v1706 = vld [vmem:[%s1573 + $0x54] sm:$0xf]
      %v1707 = vld [vmem:[%s1573 + $0x58] sm:$0xf]
      %v1708 = vld [vmem:[%s1573 + $0x5c] sm:$0x1]
      %v1709 = vld [vmem:[%s1573 + $0x60] sm:$0xf]
      %v1710 = vld [vmem:[%s1573 + $0x64] sm:$0xf]
      %v1711 = vld [vmem:[%s1573 + $0x68] sm:$0x1]
      %v1712 = vld [vmem:[%s1573 + $0x6c] sm:$0xf]
      %v1713 = vld [vmem:[%s1573 + $0x70] sm:$0xf]
      %v1714 = vld [vmem:[%s1573 + $0x74] sm:$0x1]
      %v1716 = vshrl.u32 %v1685, 16
      %v1718 = vrot.slane %v1716, 4
      %v1719 = vshll.u32 %v1685, 16
      %v1721 = vrot.slane %v1719, 5
      %v1722 = vor.u32 %v1718, %v1721
      %v1723 = vrot.slane %v1722, 4
      %v1725 = vshll.u32 %v1686, 16
      %v1727 = vrot.slane %v1725, 5
      %v1728 = vsel %vm403, %v1723, %v1727
      %v1729 = vshrl.u32 %v1686, 16
      %v1731 = vrot.slane %v1729, 4
      %v1732 = vor.u32 %v1731, %v1727
      %v1733 = vrot.slane %v1732, 4
      %v1735 = vshll.u32 %v1687, 16
      %v1737 = vrot.slane %v1735, 5
      %v1738 = vsel %vm403, %v1733, %v1737
      %v1740 = vshrl.u32 %v1688, 16
      %v1742 = vrot.slane %v1740, 4
      %v1743 = vshll.u32 %v1688, 16
      %v1745 = vrot.slane %v1743, 5
      %v1746 = vor.u32 %v1742, %v1745
      %v1747 = vrot.slane %v1746, 4
      %v1749 = vshll.u32 %v1689, 16
      %v1751 = vrot.slane %v1749, 5
      %v1752 = vsel %vm403, %v1747, %v1751
      %v1753 = vshrl.u32 %v1689, 16
      %v1755 = vrot.slane %v1753, 4
      %v1756 = vor.u32 %v1755, %v1751
      %v1757 = vrot.slane %v1756, 4
      %v1759 = vshll.u32 %v1690, 16
      %v1761 = vrot.slane %v1759, 5
      %v1762 = vsel %vm403, %v1757, %v1761
      %v1764 = vshrl.u32 %v1691, 16
      %v1766 = vrot.slane %v1764, 4
      %v1767 = vshll.u32 %v1691, 16
      %v1769 = vrot.slane %v1767, 5
      %v1770 = vor.u32 %v1766, %v1769
      %v1771 = vrot.slane %v1770, 4
      %v1773 = vshll.u32 %v1692, 16
      %v1775 = vrot.slane %v1773, 5
      %v1776 = vsel %vm403, %v1771, %v1775
      %v1777 = vshrl.u32 %v1692, 16
      %v1779 = vrot.slane %v1777, 4
      %v1780 = vor.u32 %v1779, %v1775
      %v1781 = vrot.slane %v1780, 4
      %v1783 = vshll.u32 %v1693, 16
      %v1785 = vrot.slane %v1783, 5
      %v1786 = vsel %vm403, %v1781, %v1785
      %v1788 = vshrl.u32 %v1694, 16
      %v1790 = vrot.slane %v1788, 4
      %v1791 = vshll.u32 %v1694, 16
      %v1793 = vrot.slane %v1791, 5
      %v1794 = vor.u32 %v1790, %v1793
      %v1795 = vrot.slane %v1794, 4
      %v1797 = vshll.u32 %v1695, 16
      %v1799 = vrot.slane %v1797, 5
      %v1800 = vsel %vm403, %v1795, %v1799
      %v1801 = vshrl.u32 %v1695, 16
      %v1803 = vrot.slane %v1801, 4
      %v1804 = vor.u32 %v1803, %v1799
      %v1805 = vrot.slane %v1804, 4
      %v1807 = vshll.u32 %v1696, 16
      %v1809 = vrot.slane %v1807, 5
      %v1810 = vsel %vm403, %v1805, %v1809
      %v1812 = vshrl.u32 %v1697, 16
      %v1814 = vrot.slane %v1812, 4
      %v1815 = vshll.u32 %v1697, 16
      %v1817 = vrot.slane %v1815, 5
      %v1818 = vor.u32 %v1814, %v1817
      %v1819 = vrot.slane %v1818, 4
      %v1821 = vshll.u32 %v1698, 16
      %v1823 = vrot.slane %v1821, 5
      %v1824 = vsel %vm403, %v1819, %v1823
      %v1825 = vshrl.u32 %v1698, 16
      %v1827 = vrot.slane %v1825, 4
      %v1828 = vor.u32 %v1827, %v1823
      %v1829 = vrot.slane %v1828, 4
      %v1831 = vshll.u32 %v1699, 16
      %v1833 = vrot.slane %v1831, 5
      %v1834 = vsel %vm403, %v1829, %v1833
      %v1836 = vshrl.u32 %v1700, 16
      %v1838 = vrot.slane %v1836, 4
      %v1839 = vshll.u32 %v1700, 16
      %v1841 = vrot.slane %v1839, 5
      %v1842 = vor.u32 %v1838, %v1841
      %v1843 = vrot.slane %v1842, 4
      %v1845 = vshll.u32 %v1701, 16
      %v1847 = vrot.slane %v1845, 5
      %v1848 = vsel %vm403, %v1843, %v1847
      %v1849 = vshrl.u32 %v1701, 16
      %v1851 = vrot.slane %v1849, 4
      %v1852 = vor.u32 %v1851, %v1847
      %v1853 = vrot.slane %v1852, 4
      %v1855 = vshll.u32 %v1702, 16
      %v1857 = vrot.slane %v1855, 5
      %v1858 = vsel %vm403, %v1853, %v1857
      %v1860 = vshrl.u32 %v1703, 16
      %v1862 = vrot.slane %v1860, 4
      %v1863 = vshll.u32 %v1703, 16
      %v1865 = vrot.slane %v1863, 5
      %v1866 = vor.u32 %v1862, %v1865
      %v1867 = vrot.slane %v1866, 4
      %v1869 = vshll.u32 %v1704, 16
      %v1871 = vrot.slane %v1869, 5
      %v1872 = vsel %vm403, %v1867, %v1871
      %v1873 = vshrl.u32 %v1704, 16
      %v1875 = vrot.slane %v1873, 4
      %v1876 = vor.u32 %v1875, %v1871
      %v1877 = vrot.slane %v1876, 4
      %v1879 = vshll.u32 %v1705, 16
      %v1881 = vrot.slane %v1879, 5
      %v1882 = vsel %vm403, %v1877, %v1881
      %v1884 = vshrl.u32 %v1706, 16
      %v1886 = vrot.slane %v1884, 4
      %v1887 = vshll.u32 %v1706, 16
      %v1889 = vrot.slane %v1887, 5
      %v1890 = vor.u32 %v1886, %v1889
      %v1891 = vrot.slane %v1890, 4
      %v1893 = vshll.u32 %v1707, 16
      %v1895 = vrot.slane %v1893, 5
      %v1896 = vsel %vm403, %v1891, %v1895
      %v1897 = vshrl.u32 %v1707, 16
      %v1899 = vrot.slane %v1897, 4
      %v1900 = vor.u32 %v1899, %v1895
      %v1901 = vrot.slane %v1900, 4
      %v1903 = vshll.u32 %v1708, 16
      %v1905 = vrot.slane %v1903, 5
      %v1906 = vsel %vm403, %v1901, %v1905
      %v1908 = vshrl.u32 %v1709, 16
      %v1910 = vrot.slane %v1908, 4
      %v1911 = vshll.u32 %v1709, 16
      %v1913 = vrot.slane %v1911, 5
      %v1914 = vor.u32 %v1910, %v1913
      %v1915 = vrot.slane %v1914, 4
      %v1917 = vshll.u32 %v1710, 16
      %v1919 = vrot.slane %v1917, 5
      %v1920 = vsel %vm403, %v1915, %v1919
      %v1921 = vshrl.u32 %v1710, 16
      %v1923 = vrot.slane %v1921, 4
      %v1924 = vor.u32 %v1923, %v1919
      %v1925 = vrot.slane %v1924, 4
      %v1927 = vshll.u32 %v1711, 16
      %v1929 = vrot.slane %v1927, 5
      %v1930 = vsel %vm403, %v1925, %v1929
      %v1932 = vshrl.u32 %v1712, 16
      %v1934 = vrot.slane %v1932, 4
      %v1935 = vshll.u32 %v1712, 16
      %v1937 = vrot.slane %v1935, 5
      %v1938 = vor.u32 %v1934, %v1937
      %v1939 = vrot.slane %v1938, 4
      %v1941 = vshll.u32 %v1713, 16
      %v1943 = vrot.slane %v1941, 5
      %v1944 = vsel %vm403, %v1939, %v1943
      %v1945 = vshrl.u32 %v1713, 16
      %v1947 = vrot.slane %v1945, 4
      %v1948 = vor.u32 %v1947, %v1943
      %v1949 = vrot.slane %v1948, 4
      %v1951 = vshll.u32 %v1714, 16
      %v1953 = vrot.slane %v1951, 5
      %v1954 = vsel %vm403, %v1949, %v1953
      %v1955 = vunpack.c.l.b16 %v1728
      %v1956 = vunpack.c.l.b16 %v1738
      %v1957 = vunpack.c.l.b16 %v1752
      %v1958 = vunpack.c.l.b16 %v1762
      %v1959 = vunpack.c.l.b16 %v1776
      %v1960 = vunpack.c.l.b16 %v1786
      %v1961 = vunpack.c.l.b16 %v1800
      %v1962 = vunpack.c.l.b16 %v1810
      %v1963 = vunpack.c.l.b16 %v1824
      %v1964 = vunpack.c.l.b16 %v1834
      %v1965 = vunpack.c.l.b16 %v1848
      %v1966 = vunpack.c.l.b16 %v1858
      %v1967 = vunpack.c.l.b16 %v1872
      %v1968 = vunpack.c.l.b16 %v1882
      %v1969 = vunpack.c.l.b16 %v1896
      %v1970 = vunpack.c.l.b16 %v1906
      %v1971 = vunpack.c.l.b16 %v1920
      %v1972 = vunpack.c.l.b16 %v1930
      %v1973 = vunpack.c.l.b16 %v1944
      %v1974 = vunpack.c.l.b16 %v1954
      %v1975 = vpack.c.b16 %v1956, %v1955
      %v1976 = vpack.c.b16 %v1958, %v1957
      %v1977 = vpack.c.b16 %v1960, %v1959
      %v1978 = vpack.c.b16 %v1962, %v1961
      %v1979 = vpack.c.b16 %v1964, %v1963
      %v1980 = vpack.c.b16 %v1966, %v1965
      %v1981 = vpack.c.b16 %v1968, %v1967
      %v1982 = vpack.c.b16 %v1970, %v1969
      %v1983 = vpack.c.b16 %v1972, %v1971
      %v1984 = vpack.c.b16 %v1974, %v1973
      %1985 = vrot.lane.b32.xlu0 %v1975, 28
      %v1986 = vpop.permute.xlu0 %1985
      %1987 = vrot.lane.b32.xlu0 %v1976, 28
      %v1988 = vpop.permute.xlu0 %1987
      %1989 = vrot.lane.b32.xlu0 %v1977, 28
      %v1990 = vpop.permute.xlu0 %1989
      %1991 = vrot.lane.b32.xlu0 %v1978, 28
      %v1992 = vpop.permute.xlu0 %1991
      %1993 = vrot.lane.b32.xlu0 %v1979, 28
      %v1994 = vpop.permute.xlu0 %1993
      %1995 = vrot.lane.b32.xlu0 %v1980, 28
      %v1996 = vpop.permute.xlu0 %1995
      %1997 = vrot.lane.b32.xlu0 %v1981, 28
      %v1998 = vpop.permute.xlu0 %1997
      %1999 = vrot.lane.b32.xlu0 %v1982, 28
      %v2000 = vpop.permute.xlu0 %1999
      %2001 = vrot.lane.b32.xlu0 %v1983, 28
      %v2002 = vpop.permute.xlu0 %2001
      %2003 = vrot.lane.b32.xlu0 %v1984, 28
      %v2004 = vpop.permute.xlu0 %2003
      %vm2015 = vcmask 261344
      %2016 = vst.msk [vmem:[#allocation3] sm:$0xff] %vm2015, %v1986
      %2017 = vst.msk [vmem:[#allocation3 + $0x8] sm:$0xff] %vm2015, %v1988
      %2018 = vst.msk [vmem:[#allocation3 + $0x10] sm:$0xff] %vm2015, %v1990
      %2019 = vst.msk [vmem:[#allocation3 + $0x18] sm:$0xff] %vm2015, %v1992
      %2020 = vst.msk [vmem:[#allocation3 + $0x20] sm:$0xff] %vm2015, %v1994
      %2021 = vst.msk [vmem:[#allocation3 + $0x28] sm:$0xff] %vm2015, %v1996
      %2022 = vst.msk [vmem:[#allocation3 + $0x30] sm:$0xff] %vm2015, %v1998
      %2023 = vst.msk [vmem:[#allocation3 + $0x38] sm:$0xff] %vm2015, %v2000
      %2024 = vst.msk [vmem:[#allocation3 + $0x40] sm:$0xff] %vm2015, %v2002
      %2025 = vst.msk [vmem:[#allocation3 + $0x48] sm:$0xff] %vm2015, %v2004
      %v2026 = vld [vmem:[%s1573] sm:$0xe]
      %v2027 = vld [vmem:[%s1573 + $0x4] sm:$0xf]
      %v2028 = vld [vmem:[%s1573 + $0x8] sm:$0x1]
      %v2029 = vld [vmem:[%s1573 + $0xc] sm:$0xe]
      %v2030 = vld [vmem:[%s1573 + $0x10] sm:$0xf]
      %v2031 = vld [vmem:[%s1573 + $0x14] sm:$0x1]
      %v2032 = vld [vmem:[%s1573 + $0x18] sm:$0xe]
      %v2033 = vld [vmem:[%s1573 + $0x1c] sm:$0xf]
      %v2034 = vld [vmem:[%s1573 + $0x20] sm:$0x1]
      %v2035 = vld [vmem:[%s1573 + $0x24] sm:$0xe]
      %v2036 = vld [vmem:[%s1573 + $0x28] sm:$0xf]
      %v2037 = vld [vmem:[%s1573 + $0x2c] sm:$0x1]
      %v2038 = vld [vmem:[%s1573 + $0x30] sm:$0xe]
      %v2039 = vld [vmem:[%s1573 + $0x34] sm:$0xf]
      %v2040 = vld [vmem:[%s1573 + $0x38] sm:$0x1]
      %v2041 = vld [vmem:[%s1573 + $0x3c] sm:$0xe]
      %v2042 = vld [vmem:[%s1573 + $0x40] sm:$0xf]
      %v2043 = vld [vmem:[%s1573 + $0x44] sm:$0x1]
      %v2044 = vld [vmem:[%s1573 + $0x48] sm:$0xe]
      %v2045 = vld [vmem:[%s1573 + $0x4c] sm:$0xf]
      %v2046 = vld [vmem:[%s1573 + $0x50] sm:$0x1]
      %v2047 = vld [vmem:[%s1573 + $0x54] sm:$0xe]
      %v2048 = vld [vmem:[%s1573 + $0x58] sm:$0xf]
      %v2049 = vld [vmem:[%s1573 + $0x5c] sm:$0x1]
      %v2050 = vld [vmem:[%s1573 + $0x60] sm:$0xe]
      %v2051 = vld [vmem:[%s1573 + $0x64] sm:$0xf]
      %v2052 = vld [vmem:[%s1573 + $0x68] sm:$0x1]
      %v2053 = vld [vmem:[%s1573 + $0x6c] sm:$0xe]
      %v2054 = vld [vmem:[%s1573 + $0x70] sm:$0xf]
      %v2055 = vld [vmem:[%s1573 + $0x74] sm:$0x1]
      %v2086 = vrot.slane %v2026, 5
      %v2087 = vrot.slane %v2086, 4
      %v2088 = vrot.slane %v2027, 5
      %v2089 = vsel %vm777, %v2087, %v2088
      %v2090 = vrot.slane %v2088, 4
      %v2091 = vrot.slane %v2028, 5
      %v2092 = vsel %vm777, %v2090, %v2091
      %v2093 = vrot.slane %v2029, 5
      %v2094 = vrot.slane %v2093, 4
      %v2095 = vrot.slane %v2030, 5
      %v2096 = vsel %vm777, %v2094, %v2095
      %v2097 = vrot.slane %v2095, 4
      %v2098 = vrot.slane %v2031, 5
      %v2099 = vsel %vm777, %v2097, %v2098
      %v2100 = vrot.slane %v2032, 5
      %v2101 = vrot.slane %v2100, 4
      %v2102 = vrot.slane %v2033, 5
      %v2103 = vsel %vm777, %v2101, %v2102
      %v2104 = vrot.slane %v2102, 4
      %v2105 = vrot.slane %v2034, 5
      %v2106 = vsel %vm777, %v2104, %v2105
      %v2107 = vrot.slane %v2035, 5
      %v2108 = vrot.slane %v2107, 4
      %v2109 = vrot.slane %v2036, 5
      %v2110 = vsel %vm777, %v2108, %v2109
      %v2111 = vrot.slane %v2109, 4
      %v2112 = vrot.slane %v2037, 5
      %v2113 = vsel %vm777, %v2111, %v2112
      %v2114 = vrot.slane %v2038, 5
      %v2115 = vrot.slane %v2114, 4
      %v2116 = vrot.slane %v2039, 5
      %v2117 = vsel %vm777, %v2115, %v2116
      %v2118 = vrot.slane %v2116, 4
      %v2119 = vrot.slane %v2040, 5
      %v2120 = vsel %vm777, %v2118, %v2119
      %v2121 = vrot.slane %v2041, 5
      %v2122 = vrot.slane %v2121, 4
      %v2123 = vrot.slane %v2042, 5
      %v2124 = vsel %vm777, %v2122, %v2123
      %v2125 = vrot.slane %v2123, 4
      %v2126 = vrot.slane %v2043, 5
      %v2127 = vsel %vm777, %v2125, %v2126
      %v2128 = vrot.slane %v2044, 5
      %v2129 = vrot.slane %v2128, 4
      %v2130 = vrot.slane %v2045, 5
      %v2131 = vsel %vm777, %v2129, %v2130
      %v2132 = vrot.slane %v2130, 4
      %v2133 = vrot.slane %v2046, 5
      %v2134 = vsel %vm777, %v2132, %v2133
      %v2135 = vrot.slane %v2047, 5
      %v2136 = vrot.slane %v2135, 4
      %v2137 = vrot.slane %v2048, 5
      %v2138 = vsel %vm777, %v2136, %v2137
      %v2139 = vrot.slane %v2137, 4
      %v2140 = vrot.slane %v2049, 5
      %v2141 = vsel %vm777, %v2139, %v2140
      %v2142 = vrot.slane %v2050, 5
      %v2143 = vrot.slane %v2142, 4
      %v2144 = vrot.slane %v2051, 5
      %v2145 = vsel %vm777, %v2143, %v2144
      %v2146 = vrot.slane %v2144, 4
      %v2147 = vrot.slane %v2052, 5
      %v2148 = vsel %vm777, %v2146, %v2147
      %v2149 = vrot.slane %v2053, 5
      %v2150 = vrot.slane %v2149, 4
      %v2151 = vrot.slane %v2054, 5
      %v2152 = vsel %vm777, %v2150, %v2151
      %v2153 = vrot.slane %v2151, 4
      %v2154 = vrot.slane %v2055, 5
      %v2155 = vsel %vm777, %v2153, %v2154
      %v2156 = vunpack.c.l.b16 %v2089
      %v2157 = vunpack.c.l.b16 %v2092
      %v2158 = vunpack.c.l.b16 %v2096
      %v2159 = vunpack.c.l.b16 %v2099
      %v2160 = vunpack.c.l.b16 %v2103
      %v2161 = vunpack.c.l.b16 %v2106
      %v2162 = vunpack.c.l.b16 %v2110
      %v2163 = vunpack.c.l.b16 %v2113
      %v2164 = vunpack.c.l.b16 %v2117
      %v2165 = vunpack.c.l.b16 %v2120
      %v2166 = vunpack.c.l.b16 %v2124
      %v2167 = vunpack.c.l.b16 %v2127
      %v2168 = vunpack.c.l.b16 %v2131
      %v2169 = vunpack.c.l.b16 %v2134
      %v2170 = vunpack.c.l.b16 %v2138
      %v2171 = vunpack.c.l.b16 %v2141
      %v2172 = vunpack.c.l.b16 %v2145
      %v2173 = vunpack.c.l.b16 %v2148
      %v2174 = vunpack.c.l.b16 %v2152
      %v2175 = vunpack.c.l.b16 %v2155
      %v2176 = vpack.c.b16 %v2157, %v2156
      %v2177 = vpack.c.b16 %v2159, %v2158
      %v2178 = vpack.c.b16 %v2161, %v2160
      %v2179 = vpack.c.b16 %v2163, %v2162
      %v2180 = vpack.c.b16 %v2165, %v2164
      %v2181 = vpack.c.b16 %v2167, %v2166
      %v2182 = vpack.c.b16 %v2169, %v2168
      %v2183 = vpack.c.b16 %v2171, %v2170
      %v2184 = vpack.c.b16 %v2173, %v2172
      %v2185 = vpack.c.b16 %v2175, %v2174
      %2186 = vrot.lane.b32.xlu0 %v2176, 32
      %v2187 = vpop.permute.xlu0 %2186
      %2188 = vrot.lane.b32.xlu0 %v2177, 32
      %v2189 = vpop.permute.xlu0 %2188
      %2190 = vrot.lane.b32.xlu0 %v2178, 32
      %v2191 = vpop.permute.xlu0 %2190
      %2192 = vrot.lane.b32.xlu0 %v2179, 32
      %v2193 = vpop.permute.xlu0 %2192
      %2194 = vrot.lane.b32.xlu0 %v2180, 32
      %v2195 = vpop.permute.xlu0 %2194
      %2196 = vrot.lane.b32.xlu0 %v2181, 32
      %v2197 = vpop.permute.xlu0 %2196
      %2198 = vrot.lane.b32.xlu0 %v2182, 32
      %v2199 = vpop.permute.xlu0 %2198
      %2200 = vrot.lane.b32.xlu0 %v2183, 32
      %v2201 = vpop.permute.xlu0 %2200
      %2202 = vrot.lane.b32.xlu0 %v2184, 32
      %v2203 = vpop.permute.xlu0 %2202
      %2204 = vrot.lane.b32.xlu0 %v2185, 32
      %v2205 = vpop.permute.xlu0 %2204
      %vm2216 = vcmask 294144
      %2217 = vst.msk [vmem:[#allocation3] sm:$0xff] %vm2216, %v2187
      %2218 = vst.msk [vmem:[#allocation3 + $0x8] sm:$0xff] %vm2216, %v2189
      %2219 = vst.msk [vmem:[#allocation3 + $0x10] sm:$0xff] %vm2216, %v2191
      %2220 = vst.msk [vmem:[#allocation3 + $0x18] sm:$0xff] %vm2216, %v2193
      %2221 = vst.msk [vmem:[#allocation3 + $0x20] sm:$0xff] %vm2216, %v2195
      %2222 = vst.msk [vmem:[#allocation3 + $0x28] sm:$0xff] %vm2216, %v2197
      %2223 = vst.msk [vmem:[#allocation3 + $0x30] sm:$0xff] %vm2216, %v2199
      %2224 = vst.msk [vmem:[#allocation3 + $0x38] sm:$0xff] %vm2216, %v2201
      %2225 = vst.msk [vmem:[#allocation3 + $0x40] sm:$0xff] %vm2216, %v2203
      %2226 = vst.msk [vmem:[#allocation3 + $0x48] sm:$0xff] %vm2216, %v2205
      %v2227 = vld [vmem:[#allocation3] sm:$0xff]
      %v2228 = vld [vmem:[#allocation3 + $0x8] sm:$0xff]
      %v2229 = vld [vmem:[#allocation3 + $0x10] sm:$0xff]
      %v2230 = vld [vmem:[#allocation3 + $0x18] sm:$0xff]
      %v2231 = vld [vmem:[#allocation3 + $0x20] sm:$0xff]
      %v2232 = vld [vmem:[#allocation3 + $0x28] sm:$0xff]
      %v2233 = vld [vmem:[#allocation3 + $0x30] sm:$0xff]
      %v2234 = vld [vmem:[#allocation3 + $0x38] sm:$0xff]
      %v2235 = vld [vmem:[#allocation3 + $0x40] sm:$0xff]
      %v2236 = vld [vmem:[#allocation3 + $0x48] sm:$0xff]
      %v2237 = vld [vmem:[%s1] sm:$0xf]
      %v2238 = vld [vmem:[%s1 + $0x4] sm:$0xf]
      %v2239 = vld [vmem:[%s1 + $0x8] sm:$0xf]
      %v2240 = vld [vmem:[%s1 + $0xc] sm:$0xf]
      %v2241 = vld [vmem:[%s1 + $0x10] sm:$0x3]
      %v2242 = vld [vmem:[%s2] sm:$0x1]
      %v2244 = vlaneseq
      %v2245 = vshrl.u32 %v2244, 7
      %v2246 = vsub.s32 0, %v2245
      %v2247 = vrot.slane %v2242, %v2246
      %v2254 = vunpack.c.l.b16 %v2237
      %v2255 = vunpack.c.l.b16 %v2238
      %v2256 = vunpack.c.l.b16 %v2239
      %v2257 = vunpack.c.l.b16 %v2240
      %v2258 = vunpack.c.l.b16 %v2241
      %v2259 = vpack.c.b16 %v2255, %v2254
      %v2260 = vpack.c.b16 %v2257, %v2256
      %v2261 = vpack.c.b16 %v2258, %v2258
      %vm2264 = vcmask 293888
      %v2266 = vsel %vm2264, %v2227, 0
      %v2269 = vsel %vm2264, %v2228, 0
      %v2272 = vsel %vm2264, %v2229, 0
      %v2275 = vsel %vm2264, %v2230, 0
      %v2278 = vsel %vm2264, %v2231, 0
      %v2281 = vsel %vm2264, %v2232, 0
      %v2284 = vsel %vm2264, %v2233, 0
      %v2287 = vsel %vm2264, %v2234, 0
      %v2290 = vsel %vm2264, %v2235, 0
      %v2293 = vsel %vm2264, %v2236, 0
      %vm2295 = vcmask 1041408
      %v2297 = vsel %vm2295, %v2261, 0
      %2299 = vmatprep.subr.bf16.mxu0 0
      %2300 = vmatpush1.bf16.msra.mxu0 %v2259
      %2301 = vmatprep.subr.bf16.mxu0 0
      %2302 = vmatpush1.bf16.msra.mxu0 %v2260
      %2303 = vmatprep.subr.bf16.mxu0 0
      %2304 = vmatpush1.bf16.msra.mxu0 %v2297
      %2305 = vmatprep.subr.bf16.mxu0 0
      %2306 = vmatpush1.bf16.msra.mxu0 0
      %2307 = vmatprep.subr.bf16.mxu0 0
      %2308 = vmatpush1.bf16.msra.mxu0 0
      %2309 = vmatprep.subr.bf16.mxu0 0
      %2310 = vmatpush1.bf16.msra.mxu0 0
      %2311 = vmatprep.subr.bf16.mxu0 0
      %2312 = vmatpush1.bf16.msra.mxu0 0
      %2313 = vmatprep.subr.bf16.mxu0 0
      %2314 = vmatpush1.bf16.msra.mxu0 0
      %2315 = vmatprep.subr.bf16.mxu0 0
      %2316 = vmatpush1.bf16.msra.mxu0 0
      %2317 = vmatprep.subr.bf16.mxu0 0
      %2318 = vmatpush1.bf16.msra.mxu0 0
      %2319 = vmatprep.subr.bf16.mxu0 0
      %2320 = vmatpush1.bf16.msra.mxu0 0
      %2321 = vmatprep.subr.bf16.mxu0 0
      %2322 = vmatpush1.bf16.msra.mxu0 0
      %2323 = vmatprep.subr.bf16.mxu0 0
      %2324 = vmatpush1.bf16.msra.mxu0 0
      %2325 = vmatprep.subr.bf16.mxu0 0
      %2326 = vmatpush1.bf16.msra.mxu0 0
      %2327 = vmatprep.subr.bf16.mxu0 0
      %2328 = vmatpush1.bf16.msra.mxu0 0
      %2329 = vmatprep.subr.bf16.mxu0 0
      %2330 = vmatpush1.bf16.msra.mxu0 0
      %2331 = vmatprep.mubr.bf16.mxu0 0
      %2332 = vmatmul.mubr.bf16.gmra.mrb[0].mxu0 %v2266
      %v2333 = vpop.f32.mrb[0].mxu0
      %v2334 = vadd.f32 %v2247, %v2333
      %v2335 = vpop.f32.mrb[0].mxu0
      %v2336 = vpop.f32.mrb[0].mxu0
      %v2337 = vadd.f32 %v2247, %v2336
      %v2338 = vpop.f32.mrb[0].mxu0
      %2339 = vmatprep.mubr.bf16.mxu0 0
      %2340 = vmatmul.mubr.bf16.gmra.mrb[0].mxu0 %v2269
      %v2341 = vpop.f32.mrb[0].mxu0
      %v2342 = vadd.f32 %v2247, %v2341
      %v2343 = vpop.f32.mrb[0].mxu0
      %v2344 = vpop.f32.mrb[0].mxu0
      %v2345 = vadd.f32 %v2247, %v2344
      %v2346 = vpop.f32.mrb[0].mxu0
      %2347 = vmatprep.mubr.bf16.mxu0 0
      %2348 = vmatmul.mubr.bf16.gmra.mrb[0].mxu0 %v2272
      %v2349 = vpop.f32.mrb[0].mxu0
      %v2350 = vadd.f32 %v2247, %v2349
      %v2351 = vpop.f32.mrb[0].mxu0
      %v2352 = vpop.f32.mrb[0].mxu0
      %v2353 = vadd.f32 %v2247, %v2352
      %v2354 = vpop.f32.mrb[0].mxu0
      %2355 = vmatprep.mubr.bf16.mxu0 0
      %2356 = vmatmul.mubr.bf16.gmra.mrb[0].mxu0 %v2275
      %v2357 = vpop.f32.mrb[0].mxu0
      %v2358 = vadd.f32 %v2247, %v2357
      %v2359 = vpop.f32.mrb[0].mxu0
      %v2360 = vpop.f32.mrb[0].mxu0
      %v2361 = vadd.f32 %v2247, %v2360
      %v2362 = vpop.f32.mrb[0].mxu0
      %2363 = vmatprep.mubr.bf16.mxu0 0
      %2364 = vmatmul.mubr.bf16.gmra.mrb[0].mxu0 %v2278
      %v2365 = vpop.f32.mrb[0].mxu0
      %v2366 = vadd.f32 %v2247, %v2365
      %v2367 = vpop.f32.mrb[0].mxu0
      %v2368 = vpop.f32.mrb[0].mxu0
      %v2369 = vadd.f32 %v2247, %v2368
      %v2370 = vpop.f32.mrb[0].mxu0
      %2371 = vmatprep.mubr.bf16.mxu0 0
      %2372 = vmatmul.mubr.bf16.gmra.mrb[0].mxu0 %v2281
      %v2373 = vpop.f32.mrb[0].mxu0
      %v2374 = vadd.f32 %v2247, %v2373
      %v2375 = vpop.f32.mrb[0].mxu0
      %v2376 = vpop.f32.mrb[0].mxu0
      %v2377 = vadd.f32 %v2247, %v2376
      %v2378 = vpop.f32.mrb[0].mxu0
      %2379 = vmatprep.mubr.bf16.mxu0 0
      %2380 = vmatmul.mubr.bf16.gmra.mrb[0].mxu0 %v2284
      %v2381 = vpop.f32.mrb[0].mxu0
      %v2382 = vadd.f32 %v2247, %v2381
      %v2383 = vpop.f32.mrb[0].mxu0
      %v2384 = vpop.f32.mrb[0].mxu0
      %v2385 = vadd.f32 %v2247, %v2384
      %v2386 = vpop.f32.mrb[0].mxu0
      %2387 = vmatprep.mubr.bf16.mxu0 0
      %2388 = vmatmul.mubr.bf16.gmra.mrb[0].mxu0 %v2287
      %v2389 = vpop.f32.mrb[0].mxu0
      %v2390 = vadd.f32 %v2247, %v2389
      %v2391 = vpop.f32.mrb[0].mxu0
      %v2392 = vpop.f32.mrb[0].mxu0
      %v2393 = vadd.f32 %v2247, %v2392
      %v2394 = vpop.f32.mrb[0].mxu0
      %2395 = vmatprep.mubr.bf16.mxu0 0
      %2396 = vmatmul.mubr.bf16.gmra.mrb[0].mxu0 %v2290
      %v2397 = vpop.f32.mrb[0].mxu0
      %v2398 = vadd.f32 %v2247, %v2397
      %v2399 = vpop.f32.mrb[0].mxu0
      %v2400 = vpop.f32.mrb[0].mxu0
      %v2401 = vadd.f32 %v2247, %v2400
      %v2402 = vpop.f32.mrb[0].mxu0
      %2403 = vmatprep.mubr.bf16.mxu0 0
      %2404 = vmatmul.mubr.bf16.gmra.mrb[0].mxu0 %v2293
      %v2405 = vpop.f32.mrb[0].mxu0
      %v2406 = vadd.f32 %v2247, %v2405
      %v2407 = vpop.f32.mrb[0].mxu0
      %v2408 = vpop.f32.mrb[0].mxu0
      %v2409 = vadd.f32 %v2247, %v2408
      %v2410 = vpop.f32.mrb[0].mxu0
      %2411 = vdwg.mxu0
      %v2412 = vmax.f32 %v2334, 0.0
      %v2413 = vmax.f32 %v2337, 0.0
      %v2414 = vmax.f32 %v2342, 0.0
      %v2415 = vmax.f32 %v2345, 0.0
      %v2416 = vmax.f32 %v2350, 0.0
      %v2417 = vmax.f32 %v2353, 0.0
      %v2418 = vmax.f32 %v2358, 0.0
      %v2419 = vmax.f32 %v2361, 0.0
      %v2420 = vmax.f32 %v2366, 0.0
      %v2421 = vmax.f32 %v2369, 0.0
      %v2422 = vmax.f32 %v2374, 0.0
      %v2423 = vmax.f32 %v2377, 0.0
      %v2424 = vmax.f32 %v2382, 0.0
      %v2425 = vmax.f32 %v2385, 0.0
      %v2426 = vmax.f32 %v2390, 0.0
      %v2427 = vmax.f32 %v2393, 0.0
      %v2428 = vmax.f32 %v2398, 0.0
      %v2429 = vmax.f32 %v2401, 0.0
      %v2430 = vmax.f32 %v2406, 0.0
      %v2431 = vmax.f32 %v2409, 0.0
      %v2432 = vpack.c.bf16 %v2413, %v2412
      %v2433 = vpack.c.bf16 %v2415, %v2414
      %v2434 = vpack.c.bf16 %v2417, %v2416
      %v2435 = vpack.c.bf16 %v2419, %v2418
      %v2436 = vpack.c.bf16 %v2421, %v2420
      %v2437 = vpack.c.bf16 %v2423, %v2422
      %v2438 = vpack.c.bf16 %v2425, %v2424
      %v2439 = vpack.c.bf16 %v2427, %v2426
      %v2440 = vpack.c.bf16 %v2429, %v2428
      %v2441 = vpack.c.bf16 %v2431, %v2430
      %p2442 = scmp.lt.s32.totalorder %s18, 0
      %s2443 = ssub.s32 0, %s18
      %s2444 = scalar_select %p2442, %s2443, %s18
      %s2445 = sand.u32 %s2444, 1
      %s2446 = ssub.s32 0, %s2445
      %s2447 = scalar_select %p2442, %s2446, %s2445
      %p2448 = scmp.ne.s32.totalorder %s2447, 0
      %p2449 = scmp.lt.s32.totalorder %s2447, 0
      %p2450 = pnand %p2449, %p2448
      %p2451 = pneg %p2450
      %s2452 = sadd.s32 %s2447, 2
      %s2453 = scalar_select %p2451, %s2452, %s2447
      %v2464 = vunpack.c.l.b16 %v2432
      %v2465 = vunpack.c.h.b16 %v2432
      %v2466 = vunpack.c.l.b16 %v2433
      %v2467 = vunpack.c.h.b16 %v2433
      %v2468 = vunpack.c.l.b16 %v2434
      %v2469 = vunpack.c.h.b16 %v2434
      %v2470 = vunpack.c.l.b16 %v2435
      %v2471 = vunpack.c.h.b16 %v2435
      %v2472 = vunpack.c.l.b16 %v2436
      %v2473 = vunpack.c.h.b16 %v2436
      %v2474 = vunpack.c.l.b16 %v2437
      %v2475 = vunpack.c.h.b16 %v2437
      %v2476 = vunpack.c.l.b16 %v2438
      %v2477 = vunpack.c.h.b16 %v2438
      %v2478 = vunpack.c.l.b16 %v2439
      %v2479 = vunpack.c.h.b16 %v2439
      %v2480 = vunpack.c.l.b16 %v2440
      %v2481 = vunpack.c.h.b16 %v2440
      %v2482 = vunpack.c.l.b16 %v2441
      %v2483 = vunpack.c.h.b16 %v2441
      %v2484 = vpack.c.b16 %v2464, %v2464
      %v2485 = vpack.c.b16 %v2465, %v2465
      %v2486 = vpack.c.b16 %v2466, %v2466
      %v2487 = vpack.c.b16 %v2467, %v2467
      %v2488 = vpack.c.b16 %v2468, %v2468
      %v2489 = vpack.c.b16 %v2469, %v2469
      %v2490 = vpack.c.b16 %v2470, %v2470
      %v2491 = vpack.c.b16 %v2471, %v2471
      %v2492 = vpack.c.b16 %v2472, %v2472
      %v2493 = vpack.c.b16 %v2473, %v2473
      %v2494 = vpack.c.b16 %v2474, %v2474
      %v2495 = vpack.c.b16 %v2475, %v2475
      %v2496 = vpack.c.b16 %v2476, %v2476
      %v2497 = vpack.c.b16 %v2477, %v2477
      %v2498 = vpack.c.b16 %v2478, %v2478
      %v2499 = vpack.c.b16 %v2479, %v2479
      %v2500 = vpack.c.b16 %v2480, %v2480
      %v2501 = vpack.c.b16 %v2481, %v2481
      %v2502 = vpack.c.b16 %v2482, %v2482
      %v2503 = vpack.c.b16 %v2483, %v2483
      %vm2504 = vsmask.f32 256
      %vm2505 = vsmask.f32 4368
      %vm2506 = vmor %vm2504, %vm2505
      %v2508 = vshrl.u32 %v2484, 16
      %v2510 = vrot.slane %v2508, 7
      %v2511 = vshll.u32 %v2484, 16
      %v2513 = vor.u32 %v2510, %v2511
      %v2514 = vrot.slane %v2510, 4
      %v2516 = vshrl.u32 %v2485, 16
      %v2518 = vrot.slane %v2516, 7
      %v2519 = vshll.u32 %v2485, 16
      %v2521 = vor.u32 %v2518, %v2519
      %v2522 = vsel %vm2506, %v2514, %v2521
      %v2523 = vrot.slane %v2518, 4
      %v2525 = vshrl.u32 %v2486, 16
      %v2527 = vrot.slane %v2525, 7
      %v2528 = vshll.u32 %v2486, 16
      %v2530 = vor.u32 %v2527, %v2528
      %v2531 = vrot.slane %v2527, 4
      %v2533 = vshrl.u32 %v2487, 16
      %v2535 = vrot.slane %v2533, 7
      %v2536 = vshll.u32 %v2487, 16
      %v2538 = vor.u32 %v2535, %v2536
      %v2539 = vsel %vm2506, %v2531, %v2538
      %v2540 = vrot.slane %v2535, 4
      %v2542 = vshrl.u32 %v2488, 16
      %v2544 = vrot.slane %v2542, 7
      %v2545 = vshll.u32 %v2488, 16
      %v2547 = vor.u32 %v2544, %v2545
      %v2548 = vrot.slane %v2544, 4
      %v2550 = vshrl.u32 %v2489, 16
      %v2552 = vrot.slane %v2550, 7
      %v2553 = vshll.u32 %v2489, 16
      %v2555 = vor.u32 %v2552, %v2553
      %v2556 = vsel %vm2506, %v2548, %v2555
      %v2557 = vrot.slane %v2552, 4
      %v2559 = vshrl.u32 %v2490, 16
      %v2561 = vrot.slane %v2559, 7
      %v2562 = vshll.u32 %v2490, 16
      %v2564 = vor.u32 %v2561, %v2562
      %v2565 = vrot.slane %v2561, 4
      %v2567 = vshrl.u32 %v2491, 16
      %v2569 = vrot.slane %v2567, 7
      %v2570 = vshll.u32 %v2491, 16
      %v2572 = vor.u32 %v2569, %v2570
      %v2573 = vsel %vm2506, %v2565, %v2572
      %v2574 = vrot.slane %v2569, 4
      %v2576 = vshrl.u32 %v2492, 16
      %v2578 = vrot.slane %v2576, 7
      %v2579 = vshll.u32 %v2492, 16
      %v2581 = vor.u32 %v2578, %v2579
      %v2582 = vrot.slane %v2578, 4
      %v2584 = vshrl.u32 %v2493, 16
      %v2586 = vrot.slane %v2584, 7
      %v2587 = vshll.u32 %v2493, 16
      %v2589 = vor.u32 %v2586, %v2587
      %v2590 = vsel %vm2506, %v2582, %v2589
      %v2591 = vrot.slane %v2586, 4
      %v2593 = vshrl.u32 %v2494, 16
      %v2595 = vrot.slane %v2593, 7
      %v2596 = vshll.u32 %v2494, 16
      %v2598 = vor.u32 %v2595, %v2596
      %v2599 = vrot.slane %v2595, 4
      %v2601 = vshrl.u32 %v2495, 16
      %v2603 = vrot.slane %v2601, 7
      %v2604 = vshll.u32 %v2495, 16
      %v2606 = vor.u32 %v2603, %v2604
      %v2607 = vsel %vm2506, %v2599, %v2606
      %v2608 = vrot.slane %v2603, 4
      %v2610 = vshrl.u32 %v2496, 16
      %v2612 = vrot.slane %v2610, 7
      %v2613 = vshll.u32 %v2496, 16
      %v2615 = vor.u32 %v2612, %v2613
      %v2616 = vrot.slane %v2612, 4
      %v2618 = vshrl.u32 %v2497, 16
      %v2620 = vrot.slane %v2618, 7
      %v2621 = vshll.u32 %v2497, 16
      %v2623 = vor.u32 %v2620, %v2621
      %v2624 = vsel %vm2506, %v2616, %v2623
      %v2625 = vrot.slane %v2620, 4
      %v2627 = vshrl.u32 %v2498, 16
      %v2629 = vrot.slane %v2627, 7
      %v2630 = vshll.u32 %v2498, 16
      %v2632 = vor.u32 %v2629, %v2630
      %v2633 = vrot.slane %v2629, 4
      %v2635 = vshrl.u32 %v2499, 16
      %v2637 = vrot.slane %v2635, 7
      %v2638 = vshll.u32 %v2499, 16
      %v2640 = vor.u32 %v2637, %v2638
      %v2641 = vsel %vm2506, %v2633, %v2640
      %v2642 = vrot.slane %v2637, 4
      %v2644 = vshrl.u32 %v2500, 16
      %v2646 = vrot.slane %v2644, 7
      %v2647 = vshll.u32 %v2500, 16
      %v2649 = vor.u32 %v2646, %v2647
      %v2650 = vrot.slane %v2646, 4
      %v2652 = vshrl.u32 %v2501, 16
      %v2654 = vrot.slane %v2652, 7
      %v2655 = vshll.u32 %v2501, 16
      %v2657 = vor.u32 %v2654, %v2655
      %v2658 = vsel %vm2506, %v2650, %v2657
      %v2659 = vrot.slane %v2654, 4
      %v2661 = vshrl.u32 %v2502, 16
      %v2663 = vrot.slane %v2661, 7
      %v2664 = vshll.u32 %v2502, 16
      %v2666 = vor.u32 %v2663, %v2664
      %v2667 = vrot.slane %v2663, 4
      %v2669 = vshrl.u32 %v2503, 16
      %v2671 = vrot.slane %v2669, 7
      %v2672 = vshll.u32 %v2503, 16
      %v2674 = vor.u32 %v2671, %v2672
      %v2675 = vsel %vm2506, %v2667, %v2674
      %v2676 = vrot.slane %v2671, 4
      %vm2707 = vcmask 60416
      %vm2708 = vsmask.f32 7938
      %vm2709 = vmand %vm2707, %vm2708
      %v2710 = vld [vmem:[#allocation2] sm:$0xf]
      %v2711 = vsel %vm2709, %v2513, %v2710
      %2712 = vst [vmem:[#allocation2] sm:$0xf] %v2711
      %vm2713 = vcmask 60416
      %2714 = vst.msk [vmem:[#allocation2 + $0x4] sm:$0xf] %vm2713, %v2522
      %vm2715 = vcmask 57344
      %vm2716 = vmand %vm2715, %vm2504
      %v2717 = vld [vmem:[#allocation2 + $0x8] sm:$0x1]
      %v2718 = vsel %vm2716, %v2523, %v2717
      %2719 = vst [vmem:[#allocation2 + $0x8] sm:$0x1] %v2718
      %v2720 = vld [vmem:[#allocation2 + $0xc] sm:$0xf]
      %v2721 = vsel %vm2709, %v2530, %v2720
      %2722 = vst [vmem:[#allocation2 + $0xc] sm:$0xf] %v2721
      %2723 = vst.msk [vmem:[#allocation2 + $0x10] sm:$0xf] %vm2713, %v2539
      %v2724 = vld [vmem:[#allocation2 + $0x14] sm:$0x1]
      %v2725 = vsel %vm2716, %v2540, %v2724
      %2726 = vst [vmem:[#allocation2 + $0x14] sm:$0x1] %v2725
      %v2727 = vld [vmem:[#allocation2 + $0x18] sm:$0xf]
      %v2728 = vsel %vm2709, %v2547, %v2727
      %2729 = vst [vmem:[#allocation2 + $0x18] sm:$0xf] %v2728
      %2730 = vst.msk [vmem:[#allocation2 + $0x1c] sm:$0xf] %vm2713, %v2556
      %v2731 = vld [vmem:[#allocation2 + $0x20] sm:$0x1]
      %v2732 = vsel %vm2716, %v2557, %v2731
      %2733 = vst [vmem:[#allocation2 + $0x20] sm:$0x1] %v2732
      %v2734 = vld [vmem:[#allocation2 + $0x24] sm:$0xf]
      %v2735 = vsel %vm2709, %v2564, %v2734
      %2736 = vst [vmem:[#allocation2 + $0x24] sm:$0xf] %v2735
      %2737 = vst.msk [vmem:[#allocation2 + $0x28] sm:$0xf] %vm2713, %v2573
      %v2738 = vld [vmem:[#allocation2 + $0x2c] sm:$0x1]
      %v2739 = vsel %vm2716, %v2574, %v2738
      %2740 = vst [vmem:[#allocation2 + $0x2c] sm:$0x1] %v2739
      %v2741 = vld [vmem:[#allocation2 + $0x30] sm:$0xf]
      %v2742 = vsel %vm2709, %v2581, %v2741
      %2743 = vst [vmem:[#allocation2 + $0x30] sm:$0xf] %v2742
      %2744 = vst.msk [vmem:[#allocation2 + $0x34] sm:$0xf] %vm2713, %v2590
      %v2745 = vld [vmem:[#allocation2 + $0x38] sm:$0x1]
      %v2746 = vsel %vm2716, %v2591, %v2745
      %2747 = vst [vmem:[#allocation2 + $0x38] sm:$0x1] %v2746
      %v2748 = vld [vmem:[#allocation2 + $0x3c] sm:$0xf]
      %v2749 = vsel %vm2709, %v2598, %v2748
      %2750 = vst [vmem:[#allocation2 + $0x3c] sm:$0xf] %v2749
      %2751 = vst.msk [vmem:[#allocation2 + $0x40] sm:$0xf] %vm2713, %v2607
      %v2752 = vld [vmem:[#allocation2 + $0x44] sm:$0x1]
      %v2753 = vsel %vm2716, %v2608, %v2752
      %2754 = vst [vmem:[#allocation2 + $0x44] sm:$0x1] %v2753
      %v2755 = vld [vmem:[#allocation2 + $0x48] sm:$0xf]
      %v2756 = vsel %vm2709, %v2615, %v2755
      %2757 = vst [vmem:[#allocation2 + $0x48] sm:$0xf] %v2756
      %2758 = vst.msk [vmem:[#allocation2 + $0x4c] sm:$0xf] %vm2713, %v2624
      %v2759 = vld [vmem:[#allocation2 + $0x50] sm:$0x1]
      %v2760 = vsel %vm2716, %v2625, %v2759
      %2761 = vst [vmem:[#allocation2 + $0x50] sm:$0x1] %v2760
      %v2762 = vld [vmem:[#allocation2 + $0x54] sm:$0xf]
      %v2763 = vsel %vm2709, %v2632, %v2762
      %2764 = vst [vmem:[#allocation2 + $0x54] sm:$0xf] %v2763
      %2765 = vst.msk [vmem:[#allocation2 + $0x58] sm:$0xf] %vm2713, %v2641
      %v2766 = vld [vmem:[#allocation2 + $0x5c] sm:$0x1]
      %v2767 = vsel %vm2716, %v2642, %v2766
      %2768 = vst [vmem:[#allocation2 + $0x5c] sm:$0x1] %v2767
      %v2769 = vld [vmem:[#allocation2 + $0x60] sm:$0xf]
      %v2770 = vsel %vm2709, %v2649, %v2769
      %2771 = vst [vmem:[#allocation2 + $0x60] sm:$0xf] %v2770
      %2772 = vst.msk [vmem:[#allocation2 + $0x64] sm:$0xf] %vm2713, %v2658
      %v2773 = vld [vmem:[#allocation2 + $0x68] sm:$0x1]
      %v2774 = vsel %vm2716, %v2659, %v2773
      %2775 = vst [vmem:[#allocation2 + $0x68] sm:$0x1] %v2774
      %v2776 = vld [vmem:[#allocation2 + $0x6c] sm:$0xf]
      %v2777 = vsel %vm2709, %v2666, %v2776
      %2778 = vst [vmem:[#allocation2 + $0x6c] sm:$0xf] %v2777
      %2779 = vst.msk [vmem:[#allocation2 + $0x70] sm:$0xf] %vm2713, %v2675
      %v2780 = vld [vmem:[#allocation2 + $0x74] sm:$0x1]
      %v2781 = vsel %vm2716, %v2676, %v2780
      %2782 = vst [vmem:[#allocation2 + $0x74] sm:$0x1] %v2781
      %p2783 = scmp.eq.s32.totalorder %s2453, 0
      // Predicated region
      $region49: #{up_forward.1} parent=47 // pred_check
        %p2784 = pneg %p2783
      $region50: #{up_forward.1} parent=47 // pred_check_branch
        %2786 = sbr.rel (%p2784) target = $region52
      $region51: #{up_forward.1} parent=47 // pred_region
        %v2787 = vld [vmem:[#allocation2] sm:$0xf]
        %v2788 = vsel %vm2709, %v2547, %v2787
        %2789 = vst [vmem:[#allocation2] sm:$0xf] %v2788
        %2790 = vst.msk [vmem:[#allocation2 + $0x4] sm:$0xf] %vm2713, %v2556
        %v2791 = vld [vmem:[#allocation2 + $0x8] sm:$0x1]
        %v2792 = vsel %vm2716, %v2557, %v2791
        %2793 = vst [vmem:[#allocation2 + $0x8] sm:$0x1] %v2792
      $region52: #{up_forward.1} parent=47 // pred_fallthru
        _
      %p2794 = scmp.eq.s32.totalorder %s2453, 1
      // Predicated region
      $region53: #{up_forward.1} parent=47 // pred_check
        %p2795 = pneg %p2794
      $region54: #{up_forward.1} parent=47 // pred_check_branch
        %2797 = sbr.rel (%p2795) target = $region56
      $region55: #{up_forward.1} parent=47 // pred_region
        %s2798 = scalar_lea.vmem [#allocation2], 108
        %v2799 = vld [vmem:[%s2798] sm:$0xf]
        %v2800 = vsel %vm2709, %v2632, %v2799
        %2801 = vst [vmem:[%s2798] sm:$0xf] %v2800
        %2802 = vst.msk [vmem:[%s2798 + $0x4] sm:$0xf] %vm2713, %v2641
        %v2803 = vld [vmem:[%s2798 + $0x8] sm:$0x1]
        %v2804 = vsel %vm2716, %v2642, %v2803
        %2805 = vst [vmem:[%s2798 + $0x8] sm:$0x1] %v2804
      $region56: #{up_forward.1} parent=47 // pred_fallthru
        _
      %v2806 = vld [vmem:[#allocation2] sm:$0x2]
      %v2807 = vld [vmem:[#allocation2 + $0xc] sm:$0x2]
      %v2808 = vld [vmem:[#allocation2 + $0x18] sm:$0x2]
      %v2809 = vld [vmem:[#allocation2 + $0x24] sm:$0x2]
      %v2810 = vld [vmem:[#allocation2 + $0x30] sm:$0x2]
      %v2811 = vld [vmem:[#allocation2 + $0x3c] sm:$0x2]
      %v2812 = vld [vmem:[#allocation2 + $0x48] sm:$0x2]
      %v2813 = vld [vmem:[#allocation2 + $0x54] sm:$0x2]
      %v2814 = vld [vmem:[#allocation2 + $0x60] sm:$0x2]
      %v2815 = vld [vmem:[#allocation2 + $0x6c] sm:$0x2]
      %v2826 = vrot.slane %v2806, 5
      %v2827 = vrot.slane %v2826, 4
      %v2828 = vrot.slane %v2807, 5
      %v2829 = vrot.slane %v2828, 4
      %v2830 = vrot.slane %v2808, 5
      %v2831 = vrot.slane %v2830, 4
      %v2832 = vrot.slane %v2809, 5
      %v2833 = vrot.slane %v2832, 4
      %v2834 = vrot.slane %v2810, 5
      %v2835 = vrot.slane %v2834, 4
      %v2836 = vrot.slane %v2811, 5
      %v2837 = vrot.slane %v2836, 4
      %v2838 = vrot.slane %v2812, 5
      %v2839 = vrot.slane %v2838, 4
      %v2840 = vrot.slane %v2813, 5
      %v2841 = vrot.slane %v2840, 4
      %v2842 = vrot.slane %v2814, 5
      %v2843 = vrot.slane %v2842, 4
      %v2844 = vrot.slane %v2815, 5
      %v2845 = vrot.slane %v2844, 4
      %v2856 = vld [vmem:[#allocation2] sm:$0x1]
      %v2857 = vsel %vm2716, %v2827, %v2856
      %2858 = vst [vmem:[#allocation2] sm:$0x1] %v2857
      %v2859 = vld [vmem:[#allocation2 + $0xc] sm:$0x1]
      %v2860 = vsel %vm2716, %v2829, %v2859
      %2861 = vst [vmem:[#allocation2 + $0xc] sm:$0x1] %v2860
      %v2862 = vld [vmem:[#allocation2 + $0x18] sm:$0x1]
      %v2863 = vsel %vm2716, %v2831, %v2862
      %2864 = vst [vmem:[#allocation2 + $0x18] sm:$0x1] %v2863
      %v2865 = vld [vmem:[#allocation2 + $0x24] sm:$0x1]
      %v2866 = vsel %vm2716, %v2833, %v2865
      %2867 = vst [vmem:[#allocation2 + $0x24] sm:$0x1] %v2866
      %v2868 = vld [vmem:[#allocation2 + $0x30] sm:$0x1]
      %v2869 = vsel %vm2716, %v2835, %v2868
      %2870 = vst [vmem:[#allocation2 + $0x30] sm:$0x1] %v2869
      %v2871 = vld [vmem:[#allocation2 + $0x3c] sm:$0x1]
      %v2872 = vsel %vm2716, %v2837, %v2871
      %2873 = vst [vmem:[#allocation2 + $0x3c] sm:$0x1] %v2872
      %v2874 = vld [vmem:[#allocation2 + $0x48] sm:$0x1]
      %v2875 = vsel %vm2716, %v2839, %v2874
      %2876 = vst [vmem:[#allocation2 + $0x48] sm:$0x1] %v2875
      %v2877 = vld [vmem:[#allocation2 + $0x54] sm:$0x1]
      %v2878 = vsel %vm2716, %v2841, %v2877
      %2879 = vst [vmem:[#allocation2 + $0x54] sm:$0x1] %v2878
      %v2880 = vld [vmem:[#allocation2 + $0x60] sm:$0x1]
      %v2881 = vsel %vm2716, %v2843, %v2880
      %2882 = vst [vmem:[#allocation2 + $0x60] sm:$0x1] %v2881
      %v2883 = vld [vmem:[#allocation2 + $0x6c] sm:$0x1]
      %v2884 = vsel %vm2716, %v2845, %v2883
      %2885 = vst [vmem:[#allocation2 + $0x6c] sm:$0x1] %v2884
      %v2886 = vld [vmem:[#allocation2 + $0x4] sm:$0x8]
      %v2887 = vld [vmem:[#allocation2 + $0x10] sm:$0x8]
      %v2888 = vld [vmem:[#allocation2 + $0x1c] sm:$0x8]
      %v2889 = vld [vmem:[#allocation2 + $0x28] sm:$0x8]
      %v2890 = vld [vmem:[#allocation2 + $0x34] sm:$0x8]
      %v2891 = vld [vmem:[#allocation2 + $0x40] sm:$0x8]
      %v2892 = vld [vmem:[#allocation2 + $0x4c] sm:$0x8]
      %v2893 = vld [vmem:[#allocation2 + $0x58] sm:$0x8]
      %v2894 = vld [vmem:[#allocation2 + $0x64] sm:$0x8]
      %v2895 = vld [vmem:[#allocation2 + $0x70] sm:$0x8]
      %v2906 = vrot.slane %v2886, 7
      %v2907 = vrot.slane %v2906, 4
      %v2908 = vrot.slane %v2887, 7
      %v2909 = vrot.slane %v2908, 4
      %v2910 = vrot.slane %v2888, 7
      %v2911 = vrot.slane %v2910, 4
      %v2912 = vrot.slane %v2889, 7
      %v2913 = vrot.slane %v2912, 4
      %v2914 = vrot.slane %v2890, 7
      %v2915 = vrot.slane %v2914, 4
      %v2916 = vrot.slane %v2891, 7
      %v2917 = vrot.slane %v2916, 4
      %v2918 = vrot.slane %v2892, 7
      %v2919 = vrot.slane %v2918, 4
      %v2920 = vrot.slane %v2893, 7
      %v2921 = vrot.slane %v2920, 4
      %v2922 = vrot.slane %v2894, 7
      %v2923 = vrot.slane %v2922, 4
      %v2924 = vrot.slane %v2895, 7
      %v2925 = vrot.slane %v2924, 4
      %vm2936 = vmand %vm2715, %vm2708
      %v2937 = vld [vmem:[#allocation2 + $0x8] sm:$0x1]
      %v2938 = vsel %vm2936, %v2907, %v2937
      %2939 = vst [vmem:[#allocation2 + $0x8] sm:$0x1] %v2938
      %v2940 = vld [vmem:[#allocation2 + $0x14] sm:$0x1]
      %v2941 = vsel %vm2936, %v2909, %v2940
      %2942 = vst [vmem:[#allocation2 + $0x14] sm:$0x1] %v2941
      %v2943 = vld [vmem:[#allocation2 + $0x20] sm:$0x1]
      %v2944 = vsel %vm2936, %v2911, %v2943
      %2945 = vst [vmem:[#allocation2 + $0x20] sm:$0x1] %v2944
      %v2946 = vld [vmem:[#allocation2 + $0x2c] sm:$0x1]
      %v2947 = vsel %vm2936, %v2913, %v2946
      %2948 = vst [vmem:[#allocation2 + $0x2c] sm:$0x1] %v2947
      %v2949 = vld [vmem:[#allocation2 + $0x38] sm:$0x1]
      %v2950 = vsel %vm2936, %v2915, %v2949
      %2951 = vst [vmem:[#allocation2 + $0x38] sm:$0x1] %v2950
      %v2952 = vld [vmem:[#allocation2 + $0x44] sm:$0x1]
      %v2953 = vsel %vm2936, %v2917, %v2952
      %2954 = vst [vmem:[#allocation2 + $0x44] sm:$0x1] %v2953
      %v2955 = vld [vmem:[#allocation2 + $0x50] sm:$0x1]
      %v2956 = vsel %vm2936, %v2919, %v2955
      %2957 = vst [vmem:[#allocation2 + $0x50] sm:$0x1] %v2956
      %v2958 = vld [vmem:[#allocation2 + $0x5c] sm:$0x1]
      %v2959 = vsel %vm2936, %v2921, %v2958
      %2960 = vst [vmem:[#allocation2 + $0x5c] sm:$0x1] %v2959
      %v2961 = vld [vmem:[#allocation2 + $0x68] sm:$0x1]
      %v2962 = vsel %vm2936, %v2923, %v2961
      %2963 = vst [vmem:[#allocation2 + $0x68] sm:$0x1] %v2962
      %v2964 = vld [vmem:[#allocation2 + $0x74] sm:$0x1]
      %v2965 = vsel %vm2936, %v2925, %v2964
      %2966 = vst [vmem:[#allocation2 + $0x74] sm:$0x1] %v2965
      %v2967 = vld [vmem:[#allocation2] sm:$0xf]
      %v2968 = vld [vmem:[#allocation2 + $0x4] sm:$0xf]
      %v2969 = vld [vmem:[#allocation2 + $0xc] sm:$0xf]
      %v2970 = vld [vmem:[#allocation2 + $0x10] sm:$0xf]
      %v2971 = vld [vmem:[#allocation2 + $0x18] sm:$0xf]
      %v2972 = vld [vmem:[#allocation2 + $0x1c] sm:$0xf]
      %v2973 = vld [vmem:[#allocation2 + $0x24] sm:$0xf]
      %v2974 = vld [vmem:[#allocation2 + $0x28] sm:$0xf]
      %v2975 = vld [vmem:[#allocation2 + $0x30] sm:$0xf]
      %v2976 = vld [vmem:[#allocation2 + $0x34] sm:$0xf]
      %v2977 = vld [vmem:[#allocation2 + $0x3c] sm:$0xf]
      %v2978 = vld [vmem:[#allocation2 + $0x40] sm:$0xf]
      %v2979 = vld [vmem:[#allocation2 + $0x48] sm:$0xf]
      %v2980 = vld [vmem:[#allocation2 + $0x4c] sm:$0xf]
      %v2981 = vld [vmem:[#allocation2 + $0x54] sm:$0xf]
      %v2982 = vld [vmem:[#allocation2 + $0x58] sm:$0xf]
      %v2999 = vunpack.c.l.b16 %v2967
      %v3000 = vunpack.c.l.b16 %v2968
      %v3001 = vunpack.c.l.b16 %v2969
      %v3002 = vunpack.c.l.b16 %v2970
      %v3003 = vunpack.c.l.b16 %v2971
      %v3004 = vunpack.c.l.b16 %v2972
      %v3005 = vunpack.c.l.b16 %v2973
      %v3006 = vunpack.c.l.b16 %v2974
      %v3007 = vunpack.c.l.b16 %v2975
      %v3008 = vunpack.c.l.b16 %v2976
      %v3009 = vunpack.c.l.b16 %v2977
      %v3010 = vunpack.c.l.b16 %v2978
      %v3011 = vunpack.c.l.b16 %v2979
      %v3012 = vunpack.c.l.b16 %v2980
      %v3013 = vunpack.c.l.b16 %v2981
      %v3014 = vunpack.c.l.b16 %v2982
      %v3015 = vpack.c.b16 %v3000, %v2999
      %v3016 = vpack.c.b16 %v3002, %v3001
      %v3017 = vpack.c.b16 %v3004, %v3003
      %v3018 = vpack.c.b16 %v3006, %v3005
      %v3019 = vpack.c.b16 %v3008, %v3007
      %v3020 = vpack.c.b16 %v3010, %v3009
      %v3021 = vpack.c.b16 %v3012, %v3011
      %v3022 = vpack.c.b16 %v3014, %v3013
      %vm3031 = vcmask 64512
      %3032 = vst.msk [vmem:[#allocation4] sm:$0xff] %vm3031, %v3015
      %3033 = vst.msk [vmem:[#allocation4 + $0x8] sm:$0xff] %vm3031, %v3016
      %3034 = vst.msk [vmem:[#allocation4 + $0x10] sm:$0xff] %vm3031, %v3017
      %3035 = vst.msk [vmem:[#allocation4 + $0x18] sm:$0xff] %vm3031, %v3018
      %3036 = vst.msk [vmem:[#allocation4 + $0x20] sm:$0xff] %vm3031, %v3019
      %3037 = vst.msk [vmem:[#allocation4 + $0x28] sm:$0xff] %vm3031, %v3020
      %3038 = vst.msk [vmem:[#allocation4 + $0x30] sm:$0xff] %vm3031, %v3021
      %3039 = vst.msk [vmem:[#allocation4 + $0x38] sm:$0xff] %vm3031, %v3022
      %v3040 = vld [vmem:[#allocation2] sm:$0xf]
      %v3041 = vld [vmem:[#allocation2 + $0x4] sm:$0xf]
      %v3042 = vld [vmem:[#allocation2 + $0x8] sm:$0x1]
      %v3043 = vld [vmem:[#allocation2 + $0xc] sm:$0xf]
      %v3044 = vld [vmem:[#allocation2 + $0x10] sm:$0xf]
      %v3045 = vld [vmem:[#allocation2 + $0x14] sm:$0x1]
      %v3046 = vld [vmem:[#allocation2 + $0x18] sm:$0xf]
      %v3047 = vld [vmem:[#allocation2 + $0x1c] sm:$0xf]
      %v3048 = vld [vmem:[#allocation2 + $0x20] sm:$0x1]
      %v3049 = vld [vmem:[#allocation2 + $0x24] sm:$0xf]
      %v3050 = vld [vmem:[#allocation2 + $0x28] sm:$0xf]
      %v3051 = vld [vmem:[#allocation2 + $0x2c] sm:$0x1]
      %v3052 = vld [vmem:[#allocation2 + $0x30] sm:$0xf]
      %v3053 = vld [vmem:[#allocation2 + $0x34] sm:$0xf]
      %v3054 = vld [vmem:[#allocation2 + $0x38] sm:$0x1]
      %v3055 = vld [vmem:[#allocation2 + $0x3c] sm:$0xf]
      %v3056 = vld [vmem:[#allocation2 + $0x40] sm:$0xf]
      %v3057 = vld [vmem:[#allocation2 + $0x44] sm:$0x1]
      %v3058 = vld [vmem:[#allocation2 + $0x48] sm:$0xf]
      %v3059 = vld [vmem:[#allocation2 + $0x4c] sm:$0xf]
      %v3060 = vld [vmem:[#allocation2 + $0x50] sm:$0x1]
      %v3061 = vld [vmem:[#allocation2 + $0x54] sm:$0xf]
      %v3062 = vld [vmem:[#allocation2 + $0x58] sm:$0xf]
      %v3063 = vld [vmem:[#allocation2 + $0x5c] sm:$0x1]
      %v3065 = vshrl.u32 %v3040, 16
      %v3067 = vrot.slane %v3065, 4
      %v3068 = vshll.u32 %v3040, 16
      %v3070 = vrot.slane %v3068, 5
      %v3071 = vor.u32 %v3067, %v3070
      %v3072 = vrot.slane %v3071, 4
      %v3074 = vshll.u32 %v3041, 16
      %v3076 = vrot.slane %v3074, 5
      %v3077 = vsel %vm403, %v3072, %v3076
      %v3078 = vshrl.u32 %v3041, 16
      %v3080 = vrot.slane %v3078, 4
      %v3081 = vor.u32 %v3080, %v3076
      %v3082 = vrot.slane %v3081, 4
      %v3084 = vshll.u32 %v3042, 16
      %v3086 = vrot.slane %v3084, 5
      %v3087 = vsel %vm403, %v3082, %v3086
      %v3089 = vshrl.u32 %v3043, 16
      %v3091 = vrot.slane %v3089, 4
      %v3092 = vshll.u32 %v3043, 16
      %v3094 = vrot.slane %v3092, 5
      %v3095 = vor.u32 %v3091, %v3094
      %v3096 = vrot.slane %v3095, 4
      %v3098 = vshll.u32 %v3044, 16
      %v3100 = vrot.slane %v3098, 5
      %v3101 = vsel %vm403, %v3096, %v3100
      %v3102 = vshrl.u32 %v3044, 16
      %v3104 = vrot.slane %v3102, 4
      %v3105 = vor.u32 %v3104, %v3100
      %v3106 = vrot.slane %v3105, 4
      %v3108 = vshll.u32 %v3045, 16
      %v3110 = vrot.slane %v3108, 5
      %v3111 = vsel %vm403, %v3106, %v3110
      %v3113 = vshrl.u32 %v3046, 16
      %v3115 = vrot.slane %v3113, 4
      %v3116 = vshll.u32 %v3046, 16
      %v3118 = vrot.slane %v3116, 5
      %v3119 = vor.u32 %v3115, %v3118
      %v3120 = vrot.slane %v3119, 4
      %v3122 = vshll.u32 %v3047, 16
      %v3124 = vrot.slane %v3122, 5
      %v3125 = vsel %vm403, %v3120, %v3124
      %v3126 = vshrl.u32 %v3047, 16
      %v3128 = vrot.slane %v3126, 4
      %v3129 = vor.u32 %v3128, %v3124
      %v3130 = vrot.slane %v3129, 4
      %v3132 = vshll.u32 %v3048, 16
      %v3134 = vrot.slane %v3132, 5
      %v3135 = vsel %vm403, %v3130, %v3134
      %v3137 = vshrl.u32 %v3049, 16
      %v3139 = vrot.slane %v3137, 4
      %v3140 = vshll.u32 %v3049, 16
      %v3142 = vrot.slane %v3140, 5
      %v3143 = vor.u32 %v3139, %v3142
      %v3144 = vrot.slane %v3143, 4
      %v3146 = vshll.u32 %v3050, 16
      %v3148 = vrot.slane %v3146, 5
      %v3149 = vsel %vm403, %v3144, %v3148
      %v3150 = vshrl.u32 %v3050, 16
      %v3152 = vrot.slane %v3150, 4
      %v3153 = vor.u32 %v3152, %v3148
      %v3154 = vrot.slane %v3153, 4
      %v3156 = vshll.u32 %v3051, 16
      %v3158 = vrot.slane %v3156, 5
      %v3159 = vsel %vm403, %v3154, %v3158
      %v3161 = vshrl.u32 %v3052, 16
      %v3163 = vrot.slane %v3161, 4
      %v3164 = vshll.u32 %v3052, 16
      %v3166 = vrot.slane %v3164, 5
      %v3167 = vor.u32 %v3163, %v3166
      %v3168 = vrot.slane %v3167, 4
      %v3170 = vshll.u32 %v3053, 16
      %v3172 = vrot.slane %v3170, 5
      %v3173 = vsel %vm403, %v3168, %v3172
      %v3174 = vshrl.u32 %v3053, 16
      %v3176 = vrot.slane %v3174, 4
      %v3177 = vor.u32 %v3176, %v3172
      %v3178 = vrot.slane %v3177, 4
      %v3180 = vshll.u32 %v3054, 16
      %v3182 = vrot.slane %v3180, 5
      %v3183 = vsel %vm403, %v3178, %v3182
      %v3185 = vshrl.u32 %v3055, 16
      %v3187 = vrot.slane %v3185, 4
      %v3188 = vshll.u32 %v3055, 16
      %v3190 = vrot.slane %v3188, 5
      %v3191 = vor.u32 %v3187, %v3190
      %v3192 = vrot.slane %v3191, 4
      %v3194 = vshll.u32 %v3056, 16
      %v3196 = vrot.slane %v3194, 5
      %v3197 = vsel %vm403, %v3192, %v3196
      %v3198 = vshrl.u32 %v3056, 16
      %v3200 = vrot.slane %v3198, 4
      %v3201 = vor.u32 %v3200, %v3196
      %v3202 = vrot.slane %v3201, 4
      %v3204 = vshll.u32 %v3057, 16
      %v3206 = vrot.slane %v3204, 5
      %v3207 = vsel %vm403, %v3202, %v3206
      %v3209 = vshrl.u32 %v3058, 16
      %v3211 = vrot.slane %v3209, 4
      %v3212 = vshll.u32 %v3058, 16
      %v3214 = vrot.slane %v3212, 5
      %v3215 = vor.u32 %v3211, %v3214
      %v3216 = vrot.slane %v3215, 4
      %v3218 = vshll.u32 %v3059, 16
      %v3220 = vrot.slane %v3218, 5
      %v3221 = vsel %vm403, %v3216, %v3220
      %v3222 = vshrl.u32 %v3059, 16
      %v3224 = vrot.slane %v3222, 4
      %v3225 = vor.u32 %v3224, %v3220
      %v3226 = vrot.slane %v3225, 4
      %v3228 = vshll.u32 %v3060, 16
      %v3230 = vrot.slane %v3228, 5
      %v3231 = vsel %vm403, %v3226, %v3230
      %v3233 = vshrl.u32 %v3061, 16
      %v3235 = vrot.slane %v3233, 4
      %v3236 = vshll.u32 %v3061, 16
      %v3238 = vrot.slane %v3236, 5
      %v3239 = vor.u32 %v3235, %v3238
      %v3240 = vrot.slane %v3239, 4
      %v3242 = vshll.u32 %v3062, 16
      %v3244 = vrot.slane %v3242, 5
      %v3245 = vsel %vm403, %v3240, %v3244
      %v3246 = vshrl.u32 %v3062, 16
      %v3248 = vrot.slane %v3246, 4
      %v3249 = vor.u32 %v3248, %v3244
      %v3250 = vrot.slane %v3249, 4
      %v3252 = vshll.u32 %v3063, 16
      %v3254 = vrot.slane %v3252, 5
      %v3255 = vsel %vm403, %v3250, %v3254
      %v3256 = vunpack.c.l.b16 %v3077
      %v3257 = vunpack.c.l.b16 %v3087
      %v3258 = vunpack.c.l.b16 %v3101
      %v3259 = vunpack.c.l.b16 %v3111
      %v3260 = vunpack.c.l.b16 %v3125
      %v3261 = vunpack.c.l.b16 %v3135
      %v3262 = vunpack.c.l.b16 %v3149
      %v3263 = vunpack.c.l.b16 %v3159
      %v3264 = vunpack.c.l.b16 %v3173
      %v3265 = vunpack.c.l.b16 %v3183
      %v3266 = vunpack.c.l.b16 %v3197
      %v3267 = vunpack.c.l.b16 %v3207
      %v3268 = vunpack.c.l.b16 %v3221
      %v3269 = vunpack.c.l.b16 %v3231
      %v3270 = vunpack.c.l.b16 %v3245
      %v3271 = vunpack.c.l.b16 %v3255
      %v3272 = vpack.c.b16 %v3257, %v3256
      %v3273 = vpack.c.b16 %v3259, %v3258
      %v3274 = vpack.c.b16 %v3261, %v3260
      %v3275 = vpack.c.b16 %v3263, %v3262
      %v3276 = vpack.c.b16 %v3265, %v3264
      %v3277 = vpack.c.b16 %v3267, %v3266
      %v3278 = vpack.c.b16 %v3269, %v3268
      %v3279 = vpack.c.b16 %v3271, %v3270
      %3280 = vrot.lane.b32.xlu0 %v3272, 8
      %v3281 = vpop.permute.xlu0 %3280
      %3282 = vrot.lane.b32.xlu0 %v3273, 8
      %v3283 = vpop.permute.xlu0 %3282
      %3284 = vrot.lane.b32.xlu0 %v3274, 8
      %v3285 = vpop.permute.xlu0 %3284
      %3286 = vrot.lane.b32.xlu0 %v3275, 8
      %v3287 = vpop.permute.xlu0 %3286
      %3288 = vrot.lane.b32.xlu0 %v3276, 8
      %v3289 = vpop.permute.xlu0 %3288
      %3290 = vrot.lane.b32.xlu0 %v3277, 8
      %v3291 = vpop.permute.xlu0 %3290
      %3292 = vrot.lane.b32.xlu0 %v3278, 8
      %v3293 = vpop.permute.xlu0 %3292
      %3294 = vrot.lane.b32.xlu0 %v3279, 8
      %v3295 = vpop.permute.xlu0 %3294
      %vm3304 = vcmask 130112
      %3305 = vst.msk [vmem:[#allocation4] sm:$0xff] %vm3304, %v3281
      %3306 = vst.msk [vmem:[#allocation4 + $0x8] sm:$0xff] %vm3304, %v3283
      %3307 = vst.msk [vmem:[#allocation4 + $0x10] sm:$0xff] %vm3304, %v3285
      %3308 = vst.msk [vmem:[#allocation4 + $0x18] sm:$0xff] %vm3304, %v3287
      %3309 = vst.msk [vmem:[#allocation4 + $0x20] sm:$0xff] %vm3304, %v3289
      %3310 = vst.msk [vmem:[#allocation4 + $0x28] sm:$0xff] %vm3304, %v3291
      %3311 = vst.msk [vmem:[#allocation4 + $0x30] sm:$0xff] %vm3304, %v3293
      %3312 = vst.msk [vmem:[#allocation4 + $0x38] sm:$0xff] %vm3304, %v3295
      %v3313 = vld [vmem:[#allocation2] sm:$0xe]
      %v3314 = vld [vmem:[#allocation2 + $0x4] sm:$0xf]
      %v3315 = vld [vmem:[#allocation2 + $0x8] sm:$0x1]
      %v3316 = vld [vmem:[#allocation2 + $0xc] sm:$0xe]
      %v3317 = vld [vmem:[#allocation2 + $0x10] sm:$0xf]
      %v3318 = vld [vmem:[#allocation2 + $0x14] sm:$0x1]
      %v3319 = vld [vmem:[#allocation2 + $0x18] sm:$0xe]
      %v3320 = vld [vmem:[#allocation2 + $0x1c] sm:$0xf]
      %v3321 = vld [vmem:[#allocation2 + $0x20] sm:$0x1]
      %v3322 = vld [vmem:[#allocation2 + $0x24] sm:$0xe]
      %v3323 = vld [vmem:[#allocation2 + $0x28] sm:$0xf]
      %v3324 = vld [vmem:[#allocation2 + $0x2c] sm:$0x1]
      %v3325 = vld [vmem:[#allocation2 + $0x30] sm:$0xe]
      %v3326 = vld [vmem:[#allocation2 + $0x34] sm:$0xf]
      %v3327 = vld [vmem:[#allocation2 + $0x38] sm:$0x1]
      %v3328 = vld [vmem:[#allocation2 + $0x3c] sm:$0xe]
      %v3329 = vld [vmem:[#allocation2 + $0x40] sm:$0xf]
      %v3330 = vld [vmem:[#allocation2 + $0x44] sm:$0x1]
      %v3331 = vld [vmem:[#allocation2 + $0x48] sm:$0xe]
      %v3332 = vld [vmem:[#allocation2 + $0x4c] sm:$0xf]
      %v3333 = vld [vmem:[#allocation2 + $0x50] sm:$0x1]
      %v3334 = vld [vmem:[#allocation2 + $0x54] sm:$0xe]
      %v3335 = vld [vmem:[#allocation2 + $0x58] sm:$0xf]
      %v3336 = vld [vmem:[#allocation2 + $0x5c] sm:$0x1]
      %v3361 = vrot.slane %v3313, 5
      %v3362 = vrot.slane %v3361, 4
      %v3363 = vrot.slane %v3314, 5
      %v3364 = vsel %vm777, %v3362, %v3363
      %v3365 = vrot.slane %v3363, 4
      %v3366 = vrot.slane %v3315, 5
      %v3367 = vsel %vm777, %v3365, %v3366
      %v3368 = vrot.slane %v3316, 5
      %v3369 = vrot.slane %v3368, 4
      %v3370 = vrot.slane %v3317, 5
      %v3371 = vsel %vm777, %v3369, %v3370
      %v3372 = vrot.slane %v3370, 4
      %v3373 = vrot.slane %v3318, 5
      %v3374 = vsel %vm777, %v3372, %v3373
      %v3375 = vrot.slane %v3319, 5
      %v3376 = vrot.slane %v3375, 4
      %v3377 = vrot.slane %v3320, 5
      %v3378 = vsel %vm777, %v3376, %v3377
      %v3379 = vrot.slane %v3377, 4
      %v3380 = vrot.slane %v3321, 5
      %v3381 = vsel %vm777, %v3379, %v3380
      %v3382 = vrot.slane %v3322, 5
      %v3383 = vrot.slane %v3382, 4
      %v3384 = vrot.slane %v3323, 5
      %v3385 = vsel %vm777, %v3383, %v3384
      %v3386 = vrot.slane %v3384, 4
      %v3387 = vrot.slane %v3324, 5
      %v3388 = vsel %vm777, %v3386, %v3387
      %v3389 = vrot.slane %v3325, 5
      %v3390 = vrot.slane %v3389, 4
      %v3391 = vrot.slane %v3326, 5
      %v3392 = vsel %vm777, %v3390, %v3391
      %v3393 = vrot.slane %v3391, 4
      %v3394 = vrot.slane %v3327, 5
      %v3395 = vsel %vm777, %v3393, %v3394
      %v3396 = vrot.slane %v3328, 5
      %v3397 = vrot.slane %v3396, 4
      %v3398 = vrot.slane %v3329, 5
      %v3399 = vsel %vm777, %v3397, %v3398
      %v3400 = vrot.slane %v3398, 4
      %v3401 = vrot.slane %v3330, 5
      %v3402 = vsel %vm777, %v3400, %v3401
      %v3403 = vrot.slane %v3331, 5
      %v3404 = vrot.slane %v3403, 4
      %v3405 = vrot.slane %v3332, 5
      %v3406 = vsel %vm777, %v3404, %v3405
      %v3407 = vrot.slane %v3405, 4
      %v3408 = vrot.slane %v3333, 5
      %v3409 = vsel %vm777, %v3407, %v3408
      %v3410 = vrot.slane %v3334, 5
      %v3411 = vrot.slane %v3410, 4
      %v3412 = vrot.slane %v3335, 5
      %v3413 = vsel %vm777, %v3411, %v3412
      %v3414 = vrot.slane %v3412, 4
      %v3415 = vrot.slane %v3336, 5
      %v3416 = vsel %vm777, %v3414, %v3415
      %v3417 = vunpack.c.l.b16 %v3364
      %v3418 = vunpack.c.l.b16 %v3367
      %v3419 = vunpack.c.l.b16 %v3371
      %v3420 = vunpack.c.l.b16 %v3374
      %v3421 = vunpack.c.l.b16 %v3378
      %v3422 = vunpack.c.l.b16 %v3381
      %v3423 = vunpack.c.l.b16 %v3385
      %v3424 = vunpack.c.l.b16 %v3388
      %v3425 = vunpack.c.l.b16 %v3392
      %v3426 = vunpack.c.l.b16 %v3395
      %v3427 = vunpack.c.l.b16 %v3399
      %v3428 = vunpack.c.l.b16 %v3402
      %v3429 = vunpack.c.l.b16 %v3406
      %v3430 = vunpack.c.l.b16 %v3409
      %v3431 = vunpack.c.l.b16 %v3413
      %v3432 = vunpack.c.l.b16 %v3416
      %v3433 = vpack.c.b16 %v3418, %v3417
      %v3434 = vpack.c.b16 %v3420, %v3419
      %v3435 = vpack.c.b16 %v3422, %v3421
      %v3436 = vpack.c.b16 %v3424, %v3423
      %v3437 = vpack.c.b16 %v3426, %v3425
      %v3438 = vpack.c.b16 %v3428, %v3427
      %v3439 = vpack.c.b16 %v3430, %v3429
      %v3440 = vpack.c.b16 %v3432, %v3431
      %3441 = vrot.lane.b32.xlu0 %v3433, 16
      %v3442 = vpop.permute.xlu0 %3441
      %3443 = vrot.lane.b32.xlu0 %v3434, 16
      %v3444 = vpop.permute.xlu0 %3443
      %3445 = vrot.lane.b32.xlu0 %v3435, 16
      %v3446 = vpop.permute.xlu0 %3445
      %3447 = vrot.lane.b32.xlu0 %v3436, 16
      %v3448 = vpop.permute.xlu0 %3447
      %3449 = vrot.lane.b32.xlu0 %v3437, 16
      %v3450 = vpop.permute.xlu0 %3449
      %3451 = vrot.lane.b32.xlu0 %v3438, 16
      %v3452 = vpop.permute.xlu0 %3451
      %3453 = vrot.lane.b32.xlu0 %v3439, 16
      %v3454 = vpop.permute.xlu0 %3453
      %3455 = vrot.lane.b32.xlu0 %v3440, 16
      %v3456 = vpop.permute.xlu0 %3455
      %vm3465 = vcmask 195712
      %3466 = vst.msk [vmem:[#allocation4] sm:$0xff] %vm3465, %v3442
      %3467 = vst.msk [vmem:[#allocation4 + $0x8] sm:$0xff] %vm3465, %v3444
      %3468 = vst.msk [vmem:[#allocation4 + $0x10] sm:$0xff] %vm3465, %v3446
      %3469 = vst.msk [vmem:[#allocation4 + $0x18] sm:$0xff] %vm3465, %v3448
      %3470 = vst.msk [vmem:[#allocation4 + $0x20] sm:$0xff] %vm3465, %v3450
      %3471 = vst.msk [vmem:[#allocation4 + $0x28] sm:$0xff] %vm3465, %v3452
      %3472 = vst.msk [vmem:[#allocation4 + $0x30] sm:$0xff] %vm3465, %v3454
      %3473 = vst.msk [vmem:[#allocation4 + $0x38] sm:$0xff] %vm3465, %v3456
      %s3474 = scalar_lea.vmem [#allocation2], 12
      %v3475 = vld [vmem:[%s3474] sm:$0xf]
      %v3476 = vld [vmem:[%s3474 + $0x4] sm:$0xf]
      %v3477 = vld [vmem:[%s3474 + $0xc] sm:$0xf]
      %v3478 = vld [vmem:[%s3474 + $0x10] sm:$0xf]
      %v3479 = vld [vmem:[%s3474 + $0x18] sm:$0xf]
      %v3480 = vld [vmem:[%s3474 + $0x1c] sm:$0xf]
      %v3481 = vld [vmem:[%s3474 + $0x24] sm:$0xf]
      %v3482 = vld [vmem:[%s3474 + $0x28] sm:$0xf]
      %v3483 = vld [vmem:[%s3474 + $0x30] sm:$0xf]
      %v3484 = vld [vmem:[%s3474 + $0x34] sm:$0xf]
      %v3485 = vld [vmem:[%s3474 + $0x3c] sm:$0xf]
      %v3486 = vld [vmem:[%s3474 + $0x40] sm:$0xf]
      %v3487 = vld [vmem:[%s3474 + $0x48] sm:$0xf]
      %v3488 = vld [vmem:[%s3474 + $0x4c] sm:$0xf]
      %v3489 = vld [vmem:[%s3474 + $0x54] sm:$0xf]
      %v3490 = vld [vmem:[%s3474 + $0x58] sm:$0xf]
      %v3507 = vunpack.c.l.b16 %v3475
      %v3508 = vunpack.c.l.b16 %v3476
      %v3509 = vunpack.c.l.b16 %v3477
      %v3510 = vunpack.c.l.b16 %v3478
      %v3511 = vunpack.c.l.b16 %v3479
      %v3512 = vunpack.c.l.b16 %v3480
      %v3513 = vunpack.c.l.b16 %v3481
      %v3514 = vunpack.c.l.b16 %v3482
      %v3515 = vunpack.c.l.b16 %v3483
      %v3516 = vunpack.c.l.b16 %v3484
      %v3517 = vunpack.c.l.b16 %v3485
      %v3518 = vunpack.c.l.b16 %v3486
      %v3519 = vunpack.c.l.b16 %v3487
      %v3520 = vunpack.c.l.b16 %v3488
      %v3521 = vunpack.c.l.b16 %v3489
      %v3522 = vunpack.c.l.b16 %v3490
      %v3523 = vpack.c.b16 %v3508, %v3507
      %v3524 = vpack.c.b16 %v3510, %v3509
      %v3525 = vpack.c.b16 %v3512, %v3511
      %v3526 = vpack.c.b16 %v3514, %v3513
      %v3527 = vpack.c.b16 %v3516, %v3515
      %v3528 = vpack.c.b16 %v3518, %v3517
      %v3529 = vpack.c.b16 %v3520, %v3519
      %v3530 = vpack.c.b16 %v3522, %v3521
      %3531 = vrot.lane.b32.xlu0 %v3523, 24
      %v3532 = vpop.permute.xlu0 %3531
      %3533 = vrot.lane.b32.xlu0 %v3524, 24
      %v3534 = vpop.permute.xlu0 %3533
      %3535 = vrot.lane.b32.xlu0 %v3525, 24
      %v3536 = vpop.permute.xlu0 %3535
      %3537 = vrot.lane.b32.xlu0 %v3526, 24
      %v3538 = vpop.permute.xlu0 %3537
      %3539 = vrot.lane.b32.xlu0 %v3527, 24
      %v3540 = vpop.permute.xlu0 %3539
      %3541 = vrot.lane.b32.xlu0 %v3528, 24
      %v3542 = vpop.permute.xlu0 %3541
      %3543 = vrot.lane.b32.xlu0 %v3529, 24
      %v3544 = vpop.permute.xlu0 %3543
      %3545 = vrot.lane.b32.xlu0 %v3530, 24
      %v3546 = vpop.permute.xlu0 %3545
      %vm3555 = vcmask 261312
      %3556 = vst.msk [vmem:[#allocation4] sm:$0xff] %vm3555, %v3532
      %3557 = vst.msk [vmem:[#allocation4 + $0x8] sm:$0xff] %vm3555, %v3534
      %3558 = vst.msk [vmem:[#allocation4 + $0x10] sm:$0xff] %vm3555, %v3536
      %3559 = vst.msk [vmem:[#allocation4 + $0x18] sm:$0xff] %vm3555, %v3538
      %3560 = vst.msk [vmem:[#allocation4 + $0x20] sm:$0xff] %vm3555, %v3540
      %3561 = vst.msk [vmem:[#allocation4 + $0x28] sm:$0xff] %vm3555, %v3542
      %3562 = vst.msk [vmem:[#allocation4 + $0x30] sm:$0xff] %vm3555, %v3544
      %3563 = vst.msk [vmem:[#allocation4 + $0x38] sm:$0xff] %vm3555, %v3546
      %v3564 = vld [vmem:[%s3474] sm:$0xf]
      %v3565 = vld [vmem:[%s3474 + $0x4] sm:$0xf]
      %v3566 = vld [vmem:[%s3474 + $0x8] sm:$0x1]
      %v3567 = vld [vmem:[%s3474 + $0xc] sm:$0xf]
      %v3568 = vld [vmem:[%s3474 + $0x10] sm:$0xf]
      %v3569 = vld [vmem:[%s3474 + $0x14] sm:$0x1]
      %v3570 = vld [vmem:[%s3474 + $0x18] sm:$0xf]
      %v3571 = vld [vmem:[%s3474 + $0x1c] sm:$0xf]
      %v3572 = vld [vmem:[%s3474 + $0x20] sm:$0x1]
      %v3573 = vld [vmem:[%s3474 + $0x24] sm:$0xf]
      %v3574 = vld [vmem:[%s3474 + $0x28] sm:$0xf]
      %v3575 = vld [vmem:[%s3474 + $0x2c] sm:$0x1]
      %v3576 = vld [vmem:[%s3474 + $0x30] sm:$0xf]
      %v3577 = vld [vmem:[%s3474 + $0x34] sm:$0xf]
      %v3578 = vld [vmem:[%s3474 + $0x38] sm:$0x1]
      %v3579 = vld [vmem:[%s3474 + $0x3c] sm:$0xf]
      %v3580 = vld [vmem:[%s3474 + $0x40] sm:$0xf]
      %v3581 = vld [vmem:[%s3474 + $0x44] sm:$0x1]
      %v3582 = vld [vmem:[%s3474 + $0x48] sm:$0xf]
      %v3583 = vld [vmem:[%s3474 + $0x4c] sm:$0xf]
      %v3584 = vld [vmem:[%s3474 + $0x50] sm:$0x1]
      %v3585 = vld [vmem:[%s3474 + $0x54] sm:$0xf]
      %v3586 = vld [vmem:[%s3474 + $0x58] sm:$0xf]
      %v3587 = vld [vmem:[%s3474 + $0x5c] sm:$0x1]
      %v3589 = vshrl.u32 %v3564, 16
      %v3591 = vrot.slane %v3589, 4
      %v3592 = vshll.u32 %v3564, 16
      %v3594 = vrot.slane %v3592, 5
      %v3595 = vor.u32 %v3591, %v3594
      %v3596 = vrot.slane %v3595, 4
      %v3598 = vshll.u32 %v3565, 16
      %v3600 = vrot.slane %v3598, 5
      %v3601 = vsel %vm403, %v3596, %v3600
      %v3602 = vshrl.u32 %v3565, 16
      %v3604 = vrot.slane %v3602, 4
      %v3605 = vor.u32 %v3604, %v3600
      %v3606 = vrot.slane %v3605, 4
      %v3608 = vshll.u32 %v3566, 16
      %v3610 = vrot.slane %v3608, 5
      %v3611 = vsel %vm403, %v3606, %v3610
      %v3613 = vshrl.u32 %v3567, 16
      %v3615 = vrot.slane %v3613, 4
      %v3616 = vshll.u32 %v3567, 16
      %v3618 = vrot.slane %v3616, 5
      %v3619 = vor.u32 %v3615, %v3618
      %v3620 = vrot.slane %v3619, 4
      %v3622 = vshll.u32 %v3568, 16
      %v3624 = vrot.slane %v3622, 5
      %v3625 = vsel %vm403, %v3620, %v3624
      %v3626 = vshrl.u32 %v3568, 16
      %v3628 = vrot.slane %v3626, 4
      %v3629 = vor.u32 %v3628, %v3624
      %v3630 = vrot.slane %v3629, 4
      %v3632 = vshll.u32 %v3569, 16
      %v3634 = vrot.slane %v3632, 5
      %v3635 = vsel %vm403, %v3630, %v3634
      %v3637 = vshrl.u32 %v3570, 16
      %v3639 = vrot.slane %v3637, 4
      %v3640 = vshll.u32 %v3570, 16
      %v3642 = vrot.slane %v3640, 5
      %v3643 = vor.u32 %v3639, %v3642
      %v3644 = vrot.slane %v3643, 4
      %v3646 = vshll.u32 %v3571, 16
      %v3648 = vrot.slane %v3646, 5
      %v3649 = vsel %vm403, %v3644, %v3648
      %v3650 = vshrl.u32 %v3571, 16
      %v3652 = vrot.slane %v3650, 4
      %v3653 = vor.u32 %v3652, %v3648
      %v3654 = vrot.slane %v3653, 4
      %v3656 = vshll.u32 %v3572, 16
      %v3658 = vrot.slane %v3656, 5
      %v3659 = vsel %vm403, %v3654, %v3658
      %v3661 = vshrl.u32 %v3573, 16
      %v3663 = vrot.slane %v3661, 4
      %v3664 = vshll.u32 %v3573, 16
      %v3666 = vrot.slane %v3664, 5
      %v3667 = vor.u32 %v3663, %v3666
      %v3668 = vrot.slane %v3667, 4
      %v3670 = vshll.u32 %v3574, 16
      %v3672 = vrot.slane %v3670, 5
      %v3673 = vsel %vm403, %v3668, %v3672
      %v3674 = vshrl.u32 %v3574, 16
      %v3676 = vrot.slane %v3674, 4
      %v3677 = vor.u32 %v3676, %v3672
      %v3678 = vrot.slane %v3677, 4
      %v3680 = vshll.u32 %v3575, 16
      %v3682 = vrot.slane %v3680, 5
      %v3683 = vsel %vm403, %v3678, %v3682
      %v3685 = vshrl.u32 %v3576, 16
      %v3687 = vrot.slane %v3685, 4
      %v3688 = vshll.u32 %v3576, 16
      %v3690 = vrot.slane %v3688, 5
      %v3691 = vor.u32 %v3687, %v3690
      %v3692 = vrot.slane %v3691, 4
      %v3694 = vshll.u32 %v3577, 16
      %v3696 = vrot.slane %v3694, 5
      %v3697 = vsel %vm403, %v3692, %v3696
      %v3698 = vshrl.u32 %v3577, 16
      %v3700 = vrot.slane %v3698, 4
      %v3701 = vor.u32 %v3700, %v3696
      %v3702 = vrot.slane %v3701, 4
      %v3704 = vshll.u32 %v3578, 16
      %v3706 = vrot.slane %v3704, 5
      %v3707 = vsel %vm403, %v3702, %v3706
      %v3709 = vshrl.u32 %v3579, 16
      %v3711 = vrot.slane %v3709, 4
      %v3712 = vshll.u32 %v3579, 16
      %v3714 = vrot.slane %v3712, 5
      %v3715 = vor.u32 %v3711, %v3714
      %v3716 = vrot.slane %v3715, 4
      %v3718 = vshll.u32 %v3580, 16
      %v3720 = vrot.slane %v3718, 5
      %v3721 = vsel %vm403, %v3716, %v3720
      %v3722 = vshrl.u32 %v3580, 16
      %v3724 = vrot.slane %v3722, 4
      %v3725 = vor.u32 %v3724, %v3720
      %v3726 = vrot.slane %v3725, 4
      %v3728 = vshll.u32 %v3581, 16
      %v3730 = vrot.slane %v3728, 5
      %v3731 = vsel %vm403, %v3726, %v3730
      %v3733 = vshrl.u32 %v3582, 16
      %v3735 = vrot.slane %v3733, 4
      %v3736 = vshll.u32 %v3582, 16
      %v3738 = vrot.slane %v3736, 5
      %v3739 = vor.u32 %v3735, %v3738
      %v3740 = vrot.slane %v3739, 4
      %v3742 = vshll.u32 %v3583, 16
      %v3744 = vrot.slane %v3742, 5
      %v3745 = vsel %vm403, %v3740, %v3744
      %v3746 = vshrl.u32 %v3583, 16
      %v3748 = vrot.slane %v3746, 4
      %v3749 = vor.u32 %v3748, %v3744
      %v3750 = vrot.slane %v3749, 4
      %v3752 = vshll.u32 %v3584, 16
      %v3754 = vrot.slane %v3752, 5
      %v3755 = vsel %vm403, %v3750, %v3754
      %v3757 = vshrl.u32 %v3585, 16
      %v3759 = vrot.slane %v3757, 4
      %v3760 = vshll.u32 %v3585, 16
      %v3762 = vrot.slane %v3760, 5
      %v3763 = vor.u32 %v3759, %v3762
      %v3764 = vrot.slane %v3763, 4
      %v3766 = vshll.u32 %v3586, 16
      %v3768 = vrot.slane %v3766, 5
      %v3769 = vsel %vm403, %v3764, %v3768
      %v3770 = vshrl.u32 %v3586, 16
      %v3772 = vrot.slane %v3770, 4
      %v3773 = vor.u32 %v3772, %v3768
      %v3774 = vrot.slane %v3773, 4
      %v3776 = vshll.u32 %v3587, 16
      %v3778 = vrot.slane %v3776, 5
      %v3779 = vsel %vm403, %v3774, %v3778
      %v3780 = vunpack.c.l.b16 %v3601
      %v3781 = vunpack.c.l.b16 %v3611
      %v3782 = vunpack.c.l.b16 %v3625
      %v3783 = vunpack.c.l.b16 %v3635
      %v3784 = vunpack.c.l.b16 %v3649
      %v3785 = vunpack.c.l.b16 %v3659
      %v3786 = vunpack.c.l.b16 %v3673
      %v3787 = vunpack.c.l.b16 %v3683
      %v3788 = vunpack.c.l.b16 %v3697
      %v3789 = vunpack.c.l.b16 %v3707
      %v3790 = vunpack.c.l.b16 %v3721
      %v3791 = vunpack.c.l.b16 %v3731
      %v3792 = vunpack.c.l.b16 %v3745
      %v3793 = vunpack.c.l.b16 %v3755
      %v3794 = vunpack.c.l.b16 %v3769
      %v3795 = vunpack.c.l.b16 %v3779
      %v3796 = vpack.c.b16 %v3781, %v3780
      %v3797 = vpack.c.b16 %v3783, %v3782
      %v3798 = vpack.c.b16 %v3785, %v3784
      %v3799 = vpack.c.b16 %v3787, %v3786
      %v3800 = vpack.c.b16 %v3789, %v3788
      %v3801 = vpack.c.b16 %v3791, %v3790
      %v3802 = vpack.c.b16 %v3793, %v3792
      %v3803 = vpack.c.b16 %v3795, %v3794
      %3804 = vrot.lane.b32.xlu0 %v3796, 32
      %v3805 = vpop.permute.xlu0 %3804
      %3806 = vrot.lane.b32.xlu0 %v3797, 32
      %v3807 = vpop.permute.xlu0 %3806
      %3808 = vrot.lane.b32.xlu0 %v3798, 32
      %v3809 = vpop.permute.xlu0 %3808
      %3810 = vrot.lane.b32.xlu0 %v3799, 32
      %v3811 = vpop.permute.xlu0 %3810
      %3812 = vrot.lane.b32.xlu0 %v3800, 32
      %v3813 = vpop.permute.xlu0 %3812
      %3814 = vrot.lane.b32.xlu0 %v3801, 32
      %v3815 = vpop.permute.xlu0 %3814
      %3816 = vrot.lane.b32.xlu0 %v3802, 32
      %v3817 = vpop.permute.xlu0 %3816
      %3818 = vrot.lane.b32.xlu0 %v3803, 32
      %v3819 = vpop.permute.xlu0 %3818
      %vm3828 = vcmask 326912
      %3829 = vst.msk [vmem:[#allocation4] sm:$0xff] %vm3828, %v3805
      %3830 = vst.msk [vmem:[#allocation4 + $0x8] sm:$0xff] %vm3828, %v3807
      %3831 = vst.msk [vmem:[#allocation4 + $0x10] sm:$0xff] %vm3828, %v3809
      %3832 = vst.msk [vmem:[#allocation4 + $0x18] sm:$0xff] %vm3828, %v3811
      %3833 = vst.msk [vmem:[#allocation4 + $0x20] sm:$0xff] %vm3828, %v3813
      %3834 = vst.msk [vmem:[#allocation4 + $0x28] sm:$0xff] %vm3828, %v3815
      %3835 = vst.msk [vmem:[#allocation4 + $0x30] sm:$0xff] %vm3828, %v3817
      %3836 = vst.msk [vmem:[#allocation4 + $0x38] sm:$0xff] %vm3828, %v3819
      %v3837 = vld [vmem:[%s3474] sm:$0xe]
      %v3838 = vld [vmem:[%s3474 + $0x4] sm:$0xf]
      %v3839 = vld [vmem:[%s3474 + $0x8] sm:$0x1]
      %v3840 = vld [vmem:[%s3474 + $0xc] sm:$0xe]
      %v3841 = vld [vmem:[%s3474 + $0x10] sm:$0xf]
      %v3842 = vld [vmem:[%s3474 + $0x14] sm:$0x1]
      %v3843 = vld [vmem:[%s3474 + $0x18] sm:$0xe]
      %v3844 = vld [vmem:[%s3474 + $0x1c] sm:$0xf]
      %v3845 = vld [vmem:[%s3474 + $0x20] sm:$0x1]
      %v3846 = vld [vmem:[%s3474 + $0x24] sm:$0xe]
      %v3847 = vld [vmem:[%s3474 + $0x28] sm:$0xf]
      %v3848 = vld [vmem:[%s3474 + $0x2c] sm:$0x1]
      %v3849 = vld [vmem:[%s3474 + $0x30] sm:$0xe]
      %v3850 = vld [vmem:[%s3474 + $0x34] sm:$0xf]
      %v3851 = vld [vmem:[%s3474 + $0x38] sm:$0x1]
      %v3852 = vld [vmem:[%s3474 + $0x3c] sm:$0xe]
      %v3853 = vld [vmem:[%s3474 + $0x40] sm:$0xf]
      %v3854 = vld [vmem:[%s3474 + $0x44] sm:$0x1]
      %v3855 = vld [vmem:[%s3474 + $0x48] sm:$0xe]
      %v3856 = vld [vmem:[%s3474 + $0x4c] sm:$0xf]
      %v3857 = vld [vmem:[%s3474 + $0x50] sm:$0x1]
      %v3858 = vld [vmem:[%s3474 + $0x54] sm:$0xe]
      %v3859 = vld [vmem:[%s3474 + $0x58] sm:$0xf]
      %v3860 = vld [vmem:[%s3474 + $0x5c] sm:$0x1]
      %v3885 = vrot.slane %v3837, 5
      %v3886 = vrot.slane %v3885, 4
      %v3887 = vrot.slane %v3838, 5
      %v3888 = vsel %vm777, %v3886, %v3887
      %v3889 = vrot.slane %v3887, 4
      %v3890 = vrot.slane %v3839, 5
      %v3891 = vsel %vm777, %v3889, %v3890
      %v3892 = vrot.slane %v3840, 5
      %v3893 = vrot.slane %v3892, 4
      %v3894 = vrot.slane %v3841, 5
      %v3895 = vsel %vm777, %v3893, %v3894
      %v3896 = vrot.slane %v3894, 4
      %v3897 = vrot.slane %v3842, 5
      %v3898 = vsel %vm777, %v3896, %v3897
      %v3899 = vrot.slane %v3843, 5
      %v3900 = vrot.slane %v3899, 4
      %v3901 = vrot.slane %v3844, 5
      %v3902 = vsel %vm777, %v3900, %v3901
      %v3903 = vrot.slane %v3901, 4
      %v3904 = vrot.slane %v3845, 5
      %v3905 = vsel %vm777, %v3903, %v3904
      %v3906 = vrot.slane %v3846, 5
      %v3907 = vrot.slane %v3906, 4
      %v3908 = vrot.slane %v3847, 5
      %v3909 = vsel %vm777, %v3907, %v3908
      %v3910 = vrot.slane %v3908, 4
      %v3911 = vrot.slane %v3848, 5
      %v3912 = vsel %vm777, %v3910, %v3911
      %v3913 = vrot.slane %v3849, 5
      %v3914 = vrot.slane %v3913, 4
      %v3915 = vrot.slane %v3850, 5
      %v3916 = vsel %vm777, %v3914, %v3915
      %v3917 = vrot.slane %v3915, 4
      %v3918 = vrot.slane %v3851, 5
      %v3919 = vsel %vm777, %v3917, %v3918
      %v3920 = vrot.slane %v3852, 5
      %v3921 = vrot.slane %v3920, 4
      %v3922 = vrot.slane %v3853, 5
      %v3923 = vsel %vm777, %v3921, %v3922
      %v3924 = vrot.slane %v3922, 4
      %v3925 = vrot.slane %v3854, 5
      %v3926 = vsel %vm777, %v3924, %v3925
      %v3927 = vrot.slane %v3855, 5
      %v3928 = vrot.slane %v3927, 4
      %v3929 = vrot.slane %v3856, 5
      %v3930 = vsel %vm777, %v3928, %v3929
      %v3931 = vrot.slane %v3929, 4
      %v3932 = vrot.slane %v3857, 5
      %v3933 = vsel %vm777, %v3931, %v3932
      %v3934 = vrot.slane %v3858, 5
      %v3935 = vrot.slane %v3934, 4
      %v3936 = vrot.slane %v3859, 5
      %v3937 = vsel %vm777, %v3935, %v3936
      %v3938 = vrot.slane %v3936, 4
      %v3939 = vrot.slane %v3860, 5
      %v3940 = vsel %vm777, %v3938, %v3939
      %v3941 = vunpack.c.l.b16 %v3888
      %v3942 = vunpack.c.l.b16 %v3891
      %v3943 = vunpack.c.l.b16 %v3895
      %v3944 = vunpack.c.l.b16 %v3898
      %v3945 = vunpack.c.l.b16 %v3902
      %v3946 = vunpack.c.l.b16 %v3905
      %v3947 = vunpack.c.l.b16 %v3909
      %v3948 = vunpack.c.l.b16 %v3912
      %v3949 = vunpack.c.l.b16 %v3916
      %v3950 = vunpack.c.l.b16 %v3919
      %v3951 = vunpack.c.l.b16 %v3923
      %v3952 = vunpack.c.l.b16 %v3926
      %v3953 = vunpack.c.l.b16 %v3930
      %v3954 = vunpack.c.l.b16 %v3933
      %v3955 = vunpack.c.l.b16 %v3937
      %v3956 = vunpack.c.l.b16 %v3940
      %v3957 = vpack.c.b16 %v3942, %v3941
      %v3958 = vpack.c.b16 %v3944, %v3943
      %v3959 = vpack.c.b16 %v3946, %v3945
      %v3960 = vpack.c.b16 %v3948, %v3947
      %v3961 = vpack.c.b16 %v3950, %v3949
      %v3962 = vpack.c.b16 %v3952, %v3951
      %v3963 = vpack.c.b16 %v3954, %v3953
      %v3964 = vpack.c.b16 %v3956, %v3955
      %3965 = vrot.lane.b32.xlu0 %v3957, 40
      %v3966 = vpop.permute.xlu0 %3965
      %3967 = vrot.lane.b32.xlu0 %v3958, 40
      %v3968 = vpop.permute.xlu0 %3967
      %3969 = vrot.lane.b32.xlu0 %v3959, 40
      %v3970 = vpop.permute.xlu0 %3969
      %3971 = vrot.lane.b32.xlu0 %v3960, 40
      %v3972 = vpop.permute.xlu0 %3971
      %3973 = vrot.lane.b32.xlu0 %v3961, 40
      %v3974 = vpop.permute.xlu0 %3973
      %3975 = vrot.lane.b32.xlu0 %v3962, 40
      %v3976 = vpop.permute.xlu0 %3975
      %3977 = vrot.lane.b32.xlu0 %v3963, 40
      %v3978 = vpop.permute.xlu0 %3977
      %3979 = vrot.lane.b32.xlu0 %v3964, 40
      %v3980 = vpop.permute.xlu0 %3979
      %vm3989 = vcmask 392512
      %3990 = vst.msk [vmem:[#allocation4] sm:$0xff] %vm3989, %v3966
      %3991 = vst.msk [vmem:[#allocation4 + $0x8] sm:$0xff] %vm3989, %v3968
      %3992 = vst.msk [vmem:[#allocation4 + $0x10] sm:$0xff] %vm3989, %v3970
      %3993 = vst.msk [vmem:[#allocation4 + $0x18] sm:$0xff] %vm3989, %v3972
      %3994 = vst.msk [vmem:[#allocation4 + $0x20] sm:$0xff] %vm3989, %v3974
      %3995 = vst.msk [vmem:[#allocation4 + $0x28] sm:$0xff] %vm3989, %v3976
      %3996 = vst.msk [vmem:[#allocation4 + $0x30] sm:$0xff] %vm3989, %v3978
      %3997 = vst.msk [vmem:[#allocation4 + $0x38] sm:$0xff] %vm3989, %v3980
      %s3998 = scalar_lea.vmem [#allocation2], 24
      %v3999 = vld [vmem:[%s3998] sm:$0xf]
      %v4000 = vld [vmem:[%s3998 + $0x4] sm:$0xf]
      %v4001 = vld [vmem:[%s3998 + $0xc] sm:$0xf]
      %v4002 = vld [vmem:[%s3998 + $0x10] sm:$0xf]
      %v4003 = vld [vmem:[%s3998 + $0x18] sm:$0xf]
      %v4004 = vld [vmem:[%s3998 + $0x1c] sm:$0xf]
      %v4005 = vld [vmem:[%s3998 + $0x24] sm:$0xf]
      %v4006 = vld [vmem:[%s3998 + $0x28] sm:$0xf]
      %v4007 = vld [vmem:[%s3998 + $0x30] sm:$0xf]
      %v4008 = vld [vmem:[%s3998 + $0x34] sm:$0xf]
      %v4009 = vld [vmem:[%s3998 + $0x3c] sm:$0xf]
      %v4010 = vld [vmem:[%s3998 + $0x40] sm:$0xf]
      %v4011 = vld [vmem:[%s3998 + $0x48] sm:$0xf]
      %v4012 = vld [vmem:[%s3998 + $0x4c] sm:$0xf]
      %v4013 = vld [vmem:[%s3998 + $0x54] sm:$0xf]
      %v4014 = vld [vmem:[%s3998 + $0x58] sm:$0xf]
      %v4031 = vunpack.c.l.b16 %v3999
      %v4032 = vunpack.c.l.b16 %v4000
      %v4033 = vunpack.c.l.b16 %v4001
      %v4034 = vunpack.c.l.b16 %v4002
      %v4035 = vunpack.c.l.b16 %v4003
      %v4036 = vunpack.c.l.b16 %v4004
      %v4037 = vunpack.c.l.b16 %v4005
      %v4038 = vunpack.c.l.b16 %v4006
      %v4039 = vunpack.c.l.b16 %v4007
      %v4040 = vunpack.c.l.b16 %v4008
      %v4041 = vunpack.c.l.b16 %v4009
      %v4042 = vunpack.c.l.b16 %v4010
      %v4043 = vunpack.c.l.b16 %v4011
      %v4044 = vunpack.c.l.b16 %v4012
      %v4045 = vunpack.c.l.b16 %v4013
      %v4046 = vunpack.c.l.b16 %v4014
      %v4047 = vpack.c.b16 %v4032, %v4031
      %v4048 = vpack.c.b16 %v4034, %v4033
      %v4049 = vpack.c.b16 %v4036, %v4035
      %v4050 = vpack.c.b16 %v4038, %v4037
      %v4051 = vpack.c.b16 %v4040, %v4039
      %v4052 = vpack.c.b16 %v4042, %v4041
      %v4053 = vpack.c.b16 %v4044, %v4043
      %v4054 = vpack.c.b16 %v4046, %v4045
      %4055 = vrot.lane.b32.xlu0 %v4047, 48
      %v4056 = vpop.permute.xlu0 %4055
      %4057 = vrot.lane.b32.xlu0 %v4048, 48
      %v4058 = vpop.permute.xlu0 %4057
      %4059 = vrot.lane.b32.xlu0 %v4049, 48
      %v4060 = vpop.permute.xlu0 %4059
      %4061 = vrot.lane.b32.xlu0 %v4050, 48
      %v4062 = vpop.permute.xlu0 %4061
      %4063 = vrot.lane.b32.xlu0 %v4051, 48
      %v4064 = vpop.permute.xlu0 %4063
      %4065 = vrot.lane.b32.xlu0 %v4052, 48
      %v4066 = vpop.permute.xlu0 %4065
      %4067 = vrot.lane.b32.xlu0 %v4053, 48
      %v4068 = vpop.permute.xlu0 %4067
      %4069 = vrot.lane.b32.xlu0 %v4054, 48
      %v4070 = vpop.permute.xlu0 %4069
      %vm4079 = vcmask 458112
      %4080 = vst.msk [vmem:[#allocation4] sm:$0xff] %vm4079, %v4056
      %4081 = vst.msk [vmem:[#allocation4 + $0x8] sm:$0xff] %vm4079, %v4058
      %4082 = vst.msk [vmem:[#allocation4 + $0x10] sm:$0xff] %vm4079, %v4060
      %4083 = vst.msk [vmem:[#allocation4 + $0x18] sm:$0xff] %vm4079, %v4062
      %4084 = vst.msk [vmem:[#allocation4 + $0x20] sm:$0xff] %vm4079, %v4064
      %4085 = vst.msk [vmem:[#allocation4 + $0x28] sm:$0xff] %vm4079, %v4066
      %4086 = vst.msk [vmem:[#allocation4 + $0x30] sm:$0xff] %vm4079, %v4068
      %4087 = vst.msk [vmem:[#allocation4 + $0x38] sm:$0xff] %vm4079, %v4070
      %v4088 = vld [vmem:[%s3998] sm:$0xf]
      %v4089 = vld [vmem:[%s3998 + $0x4] sm:$0xf]
      %v4090 = vld [vmem:[%s3998 + $0x8] sm:$0x1]
      %v4091 = vld [vmem:[%s3998 + $0xc] sm:$0xf]
      %v4092 = vld [vmem:[%s3998 + $0x10] sm:$0xf]
      %v4093 = vld [vmem:[%s3998 + $0x14] sm:$0x1]
      %v4094 = vld [vmem:[%s3998 + $0x18] sm:$0xf]
      %v4095 = vld [vmem:[%s3998 + $0x1c] sm:$0xf]
      %v4096 = vld [vmem:[%s3998 + $0x20] sm:$0x1]
      %v4097 = vld [vmem:[%s3998 + $0x24] sm:$0xf]
      %v4098 = vld [vmem:[%s3998 + $0x28] sm:$0xf]
      %v4099 = vld [vmem:[%s3998 + $0x2c] sm:$0x1]
      %v4100 = vld [vmem:[%s3998 + $0x30] sm:$0xf]
      %v4101 = vld [vmem:[%s3998 + $0x34] sm:$0xf]
      %v4102 = vld [vmem:[%s3998 + $0x38] sm:$0x1]
      %v4103 = vld [vmem:[%s3998 + $0x3c] sm:$0xf]
      %v4104 = vld [vmem:[%s3998 + $0x40] sm:$0xf]
      %v4105 = vld [vmem:[%s3998 + $0x44] sm:$0x1]
      %v4106 = vld [vmem:[%s3998 + $0x48] sm:$0xf]
      %v4107 = vld [vmem:[%s3998 + $0x4c] sm:$0xf]
      %v4108 = vld [vmem:[%s3998 + $0x50] sm:$0x1]
      %v4109 = vld [vmem:[%s3998 + $0x54] sm:$0xf]
      %v4110 = vld [vmem:[%s3998 + $0x58] sm:$0xf]
      %v4111 = vld [vmem:[%s3998 + $0x5c] sm:$0x1]
      %v4113 = vshrl.u32 %v4088, 16
      %v4115 = vrot.slane %v4113, 4
      %v4116 = vshll.u32 %v4088, 16
      %v4118 = vrot.slane %v4116, 5
      %v4119 = vor.u32 %v4115, %v4118
      %v4120 = vrot.slane %v4119, 4
      %v4122 = vshll.u32 %v4089, 16
      %v4124 = vrot.slane %v4122, 5
      %v4125 = vsel %vm403, %v4120, %v4124
      %v4126 = vshrl.u32 %v4089, 16
      %v4128 = vrot.slane %v4126, 4
      %v4129 = vor.u32 %v4128, %v4124
      %v4130 = vrot.slane %v4129, 4
      %v4132 = vshll.u32 %v4090, 16
      %v4134 = vrot.slane %v4132, 5
      %v4135 = vsel %vm403, %v4130, %v4134
      %v4137 = vshrl.u32 %v4091, 16
      %v4139 = vrot.slane %v4137, 4
      %v4140 = vshll.u32 %v4091, 16
      %v4142 = vrot.slane %v4140, 5
      %v4143 = vor.u32 %v4139, %v4142
      %v4144 = vrot.slane %v4143, 4
      %v4146 = vshll.u32 %v4092, 16
      %v4148 = vrot.slane %v4146, 5
      %v4149 = vsel %vm403, %v4144, %v4148
      %v4150 = vshrl.u32 %v4092, 16
      %v4152 = vrot.slane %v4150, 4
      %v4153 = vor.u32 %v4152, %v4148
      %v4154 = vrot.slane %v4153, 4
      %v4156 = vshll.u32 %v4093, 16
      %v4158 = vrot.slane %v4156, 5
      %v4159 = vsel %vm403, %v4154, %v4158
      %v4161 = vshrl.u32 %v4094, 16
      %v4163 = vrot.slane %v4161, 4
      %v4164 = vshll.u32 %v4094, 16
      %v4166 = vrot.slane %v4164, 5
      %v4167 = vor.u32 %v4163, %v4166
      %v4168 = vrot.slane %v4167, 4
      %v4170 = vshll.u32 %v4095, 16
      %v4172 = vrot.slane %v4170, 5
      %v4173 = vsel %vm403, %v4168, %v4172
      %v4174 = vshrl.u32 %v4095, 16
      %v4176 = vrot.slane %v4174, 4
      %v4177 = vor.u32 %v4176, %v4172
      %v4178 = vrot.slane %v4177, 4
      %v4180 = vshll.u32 %v4096, 16
      %v4182 = vrot.slane %v4180, 5
      %v4183 = vsel %vm403, %v4178, %v4182
      %v4185 = vshrl.u32 %v4097, 16
      %v4187 = vrot.slane %v4185, 4
      %v4188 = vshll.u32 %v4097, 16
      %v4190 = vrot.slane %v4188, 5
      %v4191 = vor.u32 %v4187, %v4190
      %v4192 = vrot.slane %v4191, 4
      %v4194 = vshll.u32 %v4098, 16
      %v4196 = vrot.slane %v4194, 5
      %v4197 = vsel %vm403, %v4192, %v4196
      %v4198 = vshrl.u32 %v4098, 16
      %v4200 = vrot.slane %v4198, 4
      %v4201 = vor.u32 %v4200, %v4196
      %v4202 = vrot.slane %v4201, 4
      %v4204 = vshll.u32 %v4099, 16
      %v4206 = vrot.slane %v4204, 5
      %v4207 = vsel %vm403, %v4202, %v4206
      %v4209 = vshrl.u32 %v4100, 16
      %v4211 = vrot.slane %v4209, 4
      %v4212 = vshll.u32 %v4100, 16
      %v4214 = vrot.slane %v4212, 5
      %v4215 = vor.u32 %v4211, %v4214
      %v4216 = vrot.slane %v4215, 4
      %v4218 = vshll.u32 %v4101, 16
      %v4220 = vrot.slane %v4218, 5
      %v4221 = vsel %vm403, %v4216, %v4220
      %v4222 = vshrl.u32 %v4101, 16
      %v4224 = vrot.slane %v4222, 4
      %v4225 = vor.u32 %v4224, %v4220
      %v4226 = vrot.slane %v4225, 4
      %v4228 = vshll.u32 %v4102, 16
      %v4230 = vrot.slane %v4228, 5
      %v4231 = vsel %vm403, %v4226, %v4230
      %v4233 = vshrl.u32 %v4103, 16
      %v4235 = vrot.slane %v4233, 4
      %v4236 = vshll.u32 %v4103, 16
      %v4238 = vrot.slane %v4236, 5
      %v4239 = vor.u32 %v4235, %v4238
      %v4240 = vrot.slane %v4239, 4
      %v4242 = vshll.u32 %v4104, 16
      %v4244 = vrot.slane %v4242, 5
      %v4245 = vsel %vm403, %v4240, %v4244
      %v4246 = vshrl.u32 %v4104, 16
      %v4248 = vrot.slane %v4246, 4
      %v4249 = vor.u32 %v4248, %v4244
      %v4250 = vrot.slane %v4249, 4
      %v4252 = vshll.u32 %v4105, 16
      %v4254 = vrot.slane %v4252, 5
      %v4255 = vsel %vm403, %v4250, %v4254
      %v4257 = vshrl.u32 %v4106, 16
      %v4259 = vrot.slane %v4257, 4
      %v4260 = vshll.u32 %v4106, 16
      %v4262 = vrot.slane %v4260, 5
      %v4263 = vor.u32 %v4259, %v4262
      %v4264 = vrot.slane %v4263, 4
      %v4266 = vshll.u32 %v4107, 16
      %v4268 = vrot.slane %v4266, 5
      %v4269 = vsel %vm403, %v4264, %v4268
      %v4270 = vshrl.u32 %v4107, 16
      %v4272 = vrot.slane %v4270, 4
      %v4273 = vor.u32 %v4272, %v4268
      %v4274 = vrot.slane %v4273, 4
      %v4276 = vshll.u32 %v4108, 16
      %v4278 = vrot.slane %v4276, 5
      %v4279 = vsel %vm403, %v4274, %v4278
      %v4281 = vshrl.u32 %v4109, 16
      %v4283 = vrot.slane %v4281, 4
      %v4284 = vshll.u32 %v4109, 16
      %v4286 = vrot.slane %v4284, 5
      %v4287 = vor.u32 %v4283, %v4286
      %v4288 = vrot.slane %v4287, 4
      %v4290 = vshll.u32 %v4110, 16
      %v4292 = vrot.slane %v4290, 5
      %v4293 = vsel %vm403, %v4288, %v4292
      %v4294 = vshrl.u32 %v4110, 16
      %v4296 = vrot.slane %v4294, 4
      %v4297 = vor.u32 %v4296, %v4292
      %v4298 = vrot.slane %v4297, 4
      %v4300 = vshll.u32 %v4111, 16
      %v4302 = vrot.slane %v4300, 5
      %v4303 = vsel %vm403, %v4298, %v4302
      %v4304 = vunpack.c.l.b16 %v4125
      %v4305 = vunpack.c.l.b16 %v4135
      %v4306 = vunpack.c.l.b16 %v4149
      %v4307 = vunpack.c.l.b16 %v4159
      %v4308 = vunpack.c.l.b16 %v4173
      %v4309 = vunpack.c.l.b16 %v4183
      %v4310 = vunpack.c.l.b16 %v4197
      %v4311 = vunpack.c.l.b16 %v4207
      %v4312 = vunpack.c.l.b16 %v4221
      %v4313 = vunpack.c.l.b16 %v4231
      %v4314 = vunpack.c.l.b16 %v4245
      %v4315 = vunpack.c.l.b16 %v4255
      %v4316 = vunpack.c.l.b16 %v4269
      %v4317 = vunpack.c.l.b16 %v4279
      %v4318 = vunpack.c.l.b16 %v4293
      %v4319 = vunpack.c.l.b16 %v4303
      %v4320 = vpack.c.b16 %v4305, %v4304
      %v4321 = vpack.c.b16 %v4307, %v4306
      %v4322 = vpack.c.b16 %v4309, %v4308
      %v4323 = vpack.c.b16 %v4311, %v4310
      %v4324 = vpack.c.b16 %v4313, %v4312
      %v4325 = vpack.c.b16 %v4315, %v4314
      %v4326 = vpack.c.b16 %v4317, %v4316
      %v4327 = vpack.c.b16 %v4319, %v4318
      %4328 = vrot.lane.b32.xlu0 %v4320, 56
      %v4329 = vpop.permute.xlu0 %4328
      %4330 = vrot.lane.b32.xlu0 %v4321, 56
      %v4331 = vpop.permute.xlu0 %4330
      %4332 = vrot.lane.b32.xlu0 %v4322, 56
      %v4333 = vpop.permute.xlu0 %4332
      %4334 = vrot.lane.b32.xlu0 %v4323, 56
      %v4335 = vpop.permute.xlu0 %4334
      %4336 = vrot.lane.b32.xlu0 %v4324, 56
      %v4337 = vpop.permute.xlu0 %4336
      %4338 = vrot.lane.b32.xlu0 %v4325, 56
      %v4339 = vpop.permute.xlu0 %4338
      %4340 = vrot.lane.b32.xlu0 %v4326, 56
      %v4341 = vpop.permute.xlu0 %4340
      %4342 = vrot.lane.b32.xlu0 %v4327, 56
      %v4343 = vpop.permute.xlu0 %4342
      %vm4352 = vcmask 523712
      %4353 = vst.msk [vmem:[#allocation4] sm:$0xff] %vm4352, %v4329
      %4354 = vst.msk [vmem:[#allocation4 + $0x8] sm:$0xff] %vm4352, %v4331
      %4355 = vst.msk [vmem:[#allocation4 + $0x10] sm:$0xff] %vm4352, %v4333
      %4356 = vst.msk [vmem:[#allocation4 + $0x18] sm:$0xff] %vm4352, %v4335
      %4357 = vst.msk [vmem:[#allocation4 + $0x20] sm:$0xff] %vm4352, %v4337
      %4358 = vst.msk [vmem:[#allocation4 + $0x28] sm:$0xff] %vm4352, %v4339
      %4359 = vst.msk [vmem:[#allocation4 + $0x30] sm:$0xff] %vm4352, %v4341
      %4360 = vst.msk [vmem:[#allocation4 + $0x38] sm:$0xff] %vm4352, %v4343
      %v4361 = vld [vmem:[%s3998] sm:$0xe]
      %v4362 = vld [vmem:[%s3998 + $0x4] sm:$0xf]
      %v4363 = vld [vmem:[%s3998 + $0x8] sm:$0x1]
      %v4364 = vld [vmem:[%s3998 + $0xc] sm:$0xe]
      %v4365 = vld [vmem:[%s3998 + $0x10] sm:$0xf]
      %v4366 = vld [vmem:[%s3998 + $0x14] sm:$0x1]
      %v4367 = vld [vmem:[%s3998 + $0x18] sm:$0xe]
      %v4368 = vld [vmem:[%s3998 + $0x1c] sm:$0xf]
      %v4369 = vld [vmem:[%s3998 + $0x20] sm:$0x1]
      %v4370 = vld [vmem:[%s3998 + $0x24] sm:$0xe]
      %v4371 = vld [vmem:[%s3998 + $0x28] sm:$0xf]
      %v4372 = vld [vmem:[%s3998 + $0x2c] sm:$0x1]
      %v4373 = vld [vmem:[%s3998 + $0x30] sm:$0xe]
      %v4374 = vld [vmem:[%s3998 + $0x34] sm:$0xf]
      %v4375 = vld [vmem:[%s3998 + $0x38] sm:$0x1]
      %v4376 = vld [vmem:[%s3998 + $0x3c] sm:$0xe]
      %v4377 = vld [vmem:[%s3998 + $0x40] sm:$0xf]
      %v4378 = vld [vmem:[%s3998 + $0x44] sm:$0x1]
      %v4379 = vld [vmem:[%s3998 + $0x48] sm:$0xe]
      %v4380 = vld [vmem:[%s3998 + $0x4c] sm:$0xf]
      %v4381 = vld [vmem:[%s3998 + $0x50] sm:$0x1]
      %v4382 = vld [vmem:[%s3998 + $0x54] sm:$0xe]
      %v4383 = vld [vmem:[%s3998 + $0x58] sm:$0xf]
      %v4384 = vld [vmem:[%s3998 + $0x5c] sm:$0x1]
      %v4409 = vrot.slane %v4361, 5
      %v4410 = vrot.slane %v4409, 4
      %v4411 = vrot.slane %v4362, 5
      %v4412 = vsel %vm777, %v4410, %v4411
      %v4413 = vrot.slane %v4411, 4
      %v4414 = vrot.slane %v4363, 5
      %v4415 = vsel %vm777, %v4413, %v4414
      %v4416 = vrot.slane %v4364, 5
      %v4417 = vrot.slane %v4416, 4
      %v4418 = vrot.slane %v4365, 5
      %v4419 = vsel %vm777, %v4417, %v4418
      %v4420 = vrot.slane %v4418, 4
      %v4421 = vrot.slane %v4366, 5
      %v4422 = vsel %vm777, %v4420, %v4421
      %v4423 = vrot.slane %v4367, 5
      %v4424 = vrot.slane %v4423, 4
      %v4425 = vrot.slane %v4368, 5
      %v4426 = vsel %vm777, %v4424, %v4425
      %v4427 = vrot.slane %v4425, 4
      %v4428 = vrot.slane %v4369, 5
      %v4429 = vsel %vm777, %v4427, %v4428
      %v4430 = vrot.slane %v4370, 5
      %v4431 = vrot.slane %v4430, 4
      %v4432 = vrot.slane %v4371, 5
      %v4433 = vsel %vm777, %v4431, %v4432
      %v4434 = vrot.slane %v4432, 4
      %v4435 = vrot.slane %v4372, 5
      %v4436 = vsel %vm777, %v4434, %v4435
      %v4437 = vrot.slane %v4373, 5
      %v4438 = vrot.slane %v4437, 4
      %v4439 = vrot.slane %v4374, 5
      %v4440 = vsel %vm777, %v4438, %v4439
      %v4441 = vrot.slane %v4439, 4
      %v4442 = vrot.slane %v4375, 5
      %v4443 = vsel %vm777, %v4441, %v4442
      %v4444 = vrot.slane %v4376, 5
      %v4445 = vrot.slane %v4444, 4
      %v4446 = vrot.slane %v4377, 5
      %v4447 = vsel %vm777, %v4445, %v4446
      %v4448 = vrot.slane %v4446, 4
      %v4449 = vrot.slane %v4378, 5
      %v4450 = vsel %vm777, %v4448, %v4449
      %v4451 = vrot.slane %v4379, 5
      %v4452 = vrot.slane %v4451, 4
      %v4453 = vrot.slane %v4380, 5
      %v4454 = vsel %vm777, %v4452, %v4453
      %v4455 = vrot.slane %v4453, 4
      %v4456 = vrot.slane %v4381, 5
      %v4457 = vsel %vm777, %v4455, %v4456
      %v4458 = vrot.slane %v4382, 5
      %v4459 = vrot.slane %v4458, 4
      %v4460 = vrot.slane %v4383, 5
      %v4461 = vsel %vm777, %v4459, %v4460
      %v4462 = vrot.slane %v4460, 4
      %v4463 = vrot.slane %v4384, 5
      %v4464 = vsel %vm777, %v4462, %v4463
      %v4465 = vunpack.c.l.b16 %v4412
      %v4466 = vunpack.c.l.b16 %v4415
      %v4467 = vunpack.c.l.b16 %v4419
      %v4468 = vunpack.c.l.b16 %v4422
      %v4469 = vunpack.c.l.b16 %v4426
      %v4470 = vunpack.c.l.b16 %v4429
      %v4471 = vunpack.c.l.b16 %v4433
      %v4472 = vunpack.c.l.b16 %v4436
      %v4473 = vunpack.c.l.b16 %v4440
      %v4474 = vunpack.c.l.b16 %v4443
      %v4475 = vunpack.c.l.b16 %v4447
      %v4476 = vunpack.c.l.b16 %v4450
      %v4477 = vunpack.c.l.b16 %v4454
      %v4478 = vunpack.c.l.b16 %v4457
      %v4479 = vunpack.c.l.b16 %v4461
      %v4480 = vunpack.c.l.b16 %v4464
      %v4481 = vpack.c.b16 %v4466, %v4465
      %v4482 = vpack.c.b16 %v4468, %v4467
      %v4483 = vpack.c.b16 %v4470, %v4469
      %v4484 = vpack.c.b16 %v4472, %v4471
      %v4485 = vpack.c.b16 %v4474, %v4473
      %v4486 = vpack.c.b16 %v4476, %v4475
      %v4487 = vpack.c.b16 %v4478, %v4477
      %v4488 = vpack.c.b16 %v4480, %v4479
      %4489 = vrot.lane.b32.xlu0 %v4481, 64
      %v4490 = vpop.permute.xlu0 %4489
      %4491 = vrot.lane.b32.xlu0 %v4482, 64
      %v4492 = vpop.permute.xlu0 %4491
      %4493 = vrot.lane.b32.xlu0 %v4483, 64
      %v4494 = vpop.permute.xlu0 %4493
      %4495 = vrot.lane.b32.xlu0 %v4484, 64
      %v4496 = vpop.permute.xlu0 %4495
      %4497 = vrot.lane.b32.xlu0 %v4485, 64
      %v4498 = vpop.permute.xlu0 %4497
      %4499 = vrot.lane.b32.xlu0 %v4486, 64
      %v4500 = vpop.permute.xlu0 %4499
      %4501 = vrot.lane.b32.xlu0 %v4487, 64
      %v4502 = vpop.permute.xlu0 %4501
      %4503 = vrot.lane.b32.xlu0 %v4488, 64
      %v4504 = vpop.permute.xlu0 %4503
      %vm4513 = vcmask 589312
      %4514 = vst.msk [vmem:[#allocation4] sm:$0xff] %vm4513, %v4490
      %4515 = vst.msk [vmem:[#allocation4 + $0x8] sm:$0xff] %vm4513, %v4492
      %4516 = vst.msk [vmem:[#allocation4 + $0x10] sm:$0xff] %vm4513, %v4494
      %4517 = vst.msk [vmem:[#allocation4 + $0x18] sm:$0xff] %vm4513, %v4496
      %4518 = vst.msk [vmem:[#allocation4 + $0x20] sm:$0xff] %vm4513, %v4498
      %4519 = vst.msk [vmem:[#allocation4 + $0x28] sm:$0xff] %vm4513, %v4500
      %4520 = vst.msk [vmem:[#allocation4 + $0x30] sm:$0xff] %vm4513, %v4502
      %4521 = vst.msk [vmem:[#allocation4 + $0x38] sm:$0xff] %vm4513, %v4504
      %v4522 = vld [vmem:[#allocation4] sm:$0xff]
      %v4523 = vld [vmem:[#allocation4 + $0x8] sm:$0xff]
      %v4524 = vld [vmem:[#allocation4 + $0x10] sm:$0xff]
      %v4525 = vld [vmem:[#allocation4 + $0x18] sm:$0xff]
      %v4526 = vld [vmem:[#allocation4 + $0x20] sm:$0xff]
      %v4527 = vld [vmem:[#allocation4 + $0x28] sm:$0xff]
      %v4528 = vld [vmem:[#allocation4 + $0x30] sm:$0xff]
      %v4529 = vld [vmem:[#allocation4 + $0x38] sm:$0xff]
      %v4530 = vld [vmem:[%s3] sm:$0xf]
      %v4531 = vld [vmem:[%s3 + $0x4] sm:$0xf]
      %v4532 = vld [vmem:[%s3 + $0x8] sm:$0xf]
      %v4533 = vld [vmem:[%s3 + $0xc] sm:$0xf]
      %v4534 = vld [vmem:[%s3 + $0x10] sm:$0xf]
      %v4535 = vld [vmem:[%s3 + $0x14] sm:$0xf]
      %v4536 = vld [vmem:[%s3 + $0x18] sm:$0xf]
      %v4537 = vld [vmem:[%s3 + $0x1c] sm:$0xf]
      %v4538 = vld [vmem:[%s3 + $0x20] sm:$0xf]
      %v4539 = vld [vmem:[%s4] sm:$0x1]
      %v4541 = vlaneseq
      %v4542 = vshrl.u32 %v4541, 7
      %v4543 = vsub.s32 0, %v4542
      %v4544 = vrot.slane %v4539, %v4543
      %v4555 = vunpack.c.l.b16 %v4530
      %v4556 = vunpack.c.l.b16 %v4531
      %v4557 = vunpack.c.l.b16 %v4532
      %v4558 = vunpack.c.l.b16 %v4533
      %v4559 = vunpack.c.l.b16 %v4534
      %v4560 = vunpack.c.l.b16 %v4535
      %v4561 = vunpack.c.l.b16 %v4536
      %v4562 = vunpack.c.l.b16 %v4537
      %v4563 = vunpack.c.l.b16 %v4538
      %v4564 = vpack.c.b16 %v4556, %v4555
      %v4565 = vpack.c.b16 %v4558, %v4557
      %v4566 = vpack.c.b16 %v4560, %v4559
      %v4567 = vpack.c.b16 %v4562, %v4561
      %v4568 = vpack.c.b16 %v4563, %v4563
      %vm4573 = vcmask 588800
      %v4575 = vsel %vm4573, %v4522, 0
      %v4578 = vsel %vm4573, %v4523, 0
      %v4581 = vsel %vm4573, %v4524, 0
      %v4584 = vsel %vm4573, %v4525, 0
      %v4587 = vsel %vm4573, %v4526, 0
      %v4590 = vsel %vm4573, %v4527, 0
      %v4593 = vsel %vm4573, %v4528, 0
      %v4596 = vsel %vm4573, %v4529, 0
      %vm4598 = vcmask 1043456
      %v4600 = vsel %vm4598, %v4568, 0
      %4602 = vmatprep.subr.bf16.mxu0 0
      %4603 = vmatpush1.bf16.msra.mxu0 %v4564
      %4604 = vmatprep.subr.bf16.mxu0 0
      %4605 = vmatpush1.bf16.msra.mxu0 %v4565
      %4606 = vmatprep.subr.bf16.mxu0 0
      %4607 = vmatpush1.bf16.msra.mxu0 %v4566
      %4608 = vmatprep.subr.bf16.mxu0 0
      %4609 = vmatpush1.bf16.msra.mxu0 %v4567
      %4610 = vmatprep.subr.bf16.mxu0 0
      %4611 = vmatpush1.bf16.msra.mxu0 %v4600
      %4612 = vmatprep.subr.bf16.mxu0 0
      %4613 = vmatpush1.bf16.msra.mxu0 0
      %4614 = vmatprep.subr.bf16.mxu0 0
      %4615 = vmatpush1.bf16.msra.mxu0 0
      %4616 = vmatprep.subr.bf16.mxu0 0
      %4617 = vmatpush1.bf16.msra.mxu0 0
      %4618 = vmatprep.subr.bf16.mxu0 0
      %4619 = vmatpush1.bf16.msra.mxu0 0
      %4620 = vmatprep.subr.bf16.mxu0 0
      %4621 = vmatpush1.bf16.msra.mxu0 0
      %4622 = vmatprep.subr.bf16.mxu0 0
      %4623 = vmatpush1.bf16.msra.mxu0 0
      %4624 = vmatprep.subr.bf16.mxu0 0
      %4625 = vmatpush1.bf16.msra.mxu0 0
      %4626 = vmatprep.subr.bf16.mxu0 0
      %4627 = vmatpush1.bf16.msra.mxu0 0
      %4628 = vmatprep.subr.bf16.mxu0 0
      %4629 = vmatpush1.bf16.msra.mxu0 0
      %4630 = vmatprep.subr.bf16.mxu0 0
      %4631 = vmatpush1.bf16.msra.mxu0 0
      %4632 = vmatprep.subr.bf16.mxu0 0
      %4633 = vmatpush1.bf16.msra.mxu0 0
      %4634 = vmatprep.mubr.bf16.mxu0 0
      %4635 = vmatmul.mubr.bf16.gmra.mrb[0].mxu0 %v4575
      %v4636 = vpop.f32.mrb[0].mxu0
      %v4637 = vadd.f32 %v4544, %v4636
      %v4638 = vpop.f32.mrb[0].mxu0
      %v4639 = vpop.f32.mrb[0].mxu0
      %v4640 = vadd.f32 %v4544, %v4639
      %v4641 = vpop.f32.mrb[0].mxu0
      %4642 = vmatprep.mubr.bf16.mxu0 0
      %4643 = vmatmul.mubr.bf16.gmra.mrb[0].mxu0 %v4578
      %v4644 = vpop.f32.mrb[0].mxu0
      %v4645 = vadd.f32 %v4544, %v4644
      %v4646 = vpop.f32.mrb[0].mxu0
      %v4647 = vpop.f32.mrb[0].mxu0
      %v4648 = vadd.f32 %v4544, %v4647
      %v4649 = vpop.f32.mrb[0].mxu0
      %4650 = vmatprep.mubr.bf16.mxu0 0
      %4651 = vmatmul.mubr.bf16.gmra.mrb[0].mxu0 %v4581
      %v4652 = vpop.f32.mrb[0].mxu0
      %v4653 = vadd.f32 %v4544, %v4652
      %v4654 = vpop.f32.mrb[0].mxu0
      %v4655 = vpop.f32.mrb[0].mxu0
      %v4656 = vadd.f32 %v4544, %v4655
      %v4657 = vpop.f32.mrb[0].mxu0
      %4658 = vmatprep.mubr.bf16.mxu0 0
      %4659 = vmatmul.mubr.bf16.gmra.mrb[0].mxu0 %v4584
      %v4660 = vpop.f32.mrb[0].mxu0
      %v4661 = vadd.f32 %v4544, %v4660
      %v4662 = vpop.f32.mrb[0].mxu0
      %v4663 = vpop.f32.mrb[0].mxu0
      %v4664 = vadd.f32 %v4544, %v4663
      %v4665 = vpop.f32.mrb[0].mxu0
      %4666 = vmatprep.mubr.bf16.mxu0 0
      %4667 = vmatmul.mubr.bf16.gmra.mrb[0].mxu0 %v4587
      %v4668 = vpop.f32.mrb[0].mxu0
      %v4669 = vadd.f32 %v4544, %v4668
      %v4670 = vpop.f32.mrb[0].mxu0
      %v4671 = vpop.f32.mrb[0].mxu0
      %v4672 = vadd.f32 %v4544, %v4671
      %v4673 = vpop.f32.mrb[0].mxu0
      %4674 = vmatprep.mubr.bf16.mxu0 0
      %4675 = vmatmul.mubr.bf16.gmra.mrb[0].mxu0 %v4590
      %v4676 = vpop.f32.mrb[0].mxu0
      %v4677 = vadd.f32 %v4544, %v4676
      %v4678 = vpop.f32.mrb[0].mxu0
      %v4679 = vpop.f32.mrb[0].mxu0
      %v4680 = vadd.f32 %v4544, %v4679
      %v4681 = vpop.f32.mrb[0].mxu0
      %4682 = vmatprep.mubr.bf16.mxu0 0
      %4683 = vmatmul.mubr.bf16.gmra.mrb[0].mxu0 %v4593
      %v4684 = vpop.f32.mrb[0].mxu0
      %v4685 = vadd.f32 %v4544, %v4684
      %v4686 = vpop.f32.mrb[0].mxu0
      %v4687 = vpop.f32.mrb[0].mxu0
      %v4688 = vadd.f32 %v4544, %v4687
      %v4689 = vpop.f32.mrb[0].mxu0
      %4690 = vmatprep.mubr.bf16.mxu0 0
      %4691 = vmatmul.mubr.bf16.gmra.mrb[0].mxu0 %v4596
      %v4692 = vpop.f32.mrb[0].mxu0
      %v4693 = vadd.f32 %v4544, %v4692
      %v4694 = vpop.f32.mrb[0].mxu0
      %v4695 = vpop.f32.mrb[0].mxu0
      %v4696 = vadd.f32 %v4544, %v4695
      %v4697 = vpop.f32.mrb[0].mxu0
      %4698 = vdwg.mxu0
      %v4699 = vmax.f32 %v4637, 0.0
      %v4700 = vmax.f32 %v4640, 0.0
      %v4701 = vmax.f32 %v4645, 0.0
      %v4702 = vmax.f32 %v4648, 0.0
      %v4703 = vmax.f32 %v4653, 0.0
      %v4704 = vmax.f32 %v4656, 0.0
      %v4705 = vmax.f32 %v4661, 0.0
      %v4706 = vmax.f32 %v4664, 0.0
      %v4707 = vmax.f32 %v4669, 0.0
      %v4708 = vmax.f32 %v4672, 0.0
      %v4709 = vmax.f32 %v4677, 0.0
      %v4710 = vmax.f32 %v4680, 0.0
      %v4711 = vmax.f32 %v4685, 0.0
      %v4712 = vmax.f32 %v4688, 0.0
      %v4713 = vmax.f32 %v4693, 0.0
      %v4714 = vmax.f32 %v4696, 0.0
      %v4715 = vpack.c.bf16 %v4700, %v4699
      %v4716 = vpack.c.bf16 %v4702, %v4701
      %v4717 = vpack.c.bf16 %v4704, %v4703
      %v4718 = vpack.c.bf16 %v4706, %v4705
      %v4719 = vpack.c.bf16 %v4708, %v4707
      %v4720 = vpack.c.bf16 %v4710, %v4709
      %v4721 = vpack.c.bf16 %v4712, %v4711
      %v4722 = vpack.c.bf16 %v4714, %v4713
      %v4723 = vld [vmem:[%s5] sm:$0xf]
      %v4724 = vld [vmem:[%s5 + $0x4] sm:$0xf]
      %v4725 = vld [vmem:[%s6] sm:$0xff]
      %v4726 = vld [vmem:[%s6 + $0x8] sm:$0xff]
      %4728 = vset.pattern.permute.xlu0 0
      %4729 = vperm.xlu0 %4728, %v4725
      %v4730 = vpop.permute.xlu0 %4729
      %4733 = vset.pattern.permute.xlu0 0
      %4734 = vperm.xlu0 %4733, %v4726
      %v4735 = vpop.permute.xlu0 %4734
      %v4739 = vunpack.c.l.b16 %v4723
      %v4740 = vunpack.c.l.b16 %v4724
      %v4741 = vpack.c.b16 %v4740, %v4739
      %v4743 = vsel %vm3031, %v4741, 0
      %v4746 = vsel %vm3031, %v4715, 0
      %v4749 = vsel %vm3031, %v4716, 0
      %v4752 = vsel %vm3031, %v4717, 0
      %v4755 = vsel %vm3031, %v4718, 0
      %v4758 = vsel %vm3031, %v4719, 0
      %v4761 = vsel %vm3031, %v4720, 0
      %v4764 = vsel %vm3031, %v4721, 0
      %v4767 = vsel %vm3031, %v4722, 0
      %4769 = vmatprep.subr.bf16.mxu0 0
      %4770 = vmatpush1.bf16.xpose.msra.mxu0 %v4746
      %4771 = vmatprep.subr.bf16.mxu0 0
      %4772 = vmatpush1.bf16.xpose.msra.mxu0 %v4749
      %4773 = vmatprep.subr.bf16.mxu0 0
      %4774 = vmatpush1.bf16.xpose.msra.mxu0 %v4752
      %4775 = vmatprep.subr.bf16.mxu0 0
      %4776 = vmatpush1.bf16.xpose.msra.mxu0 %v4755
      %4777 = vmatprep.subr.bf16.mxu0 0
      %4778 = vmatpush1.bf16.xpose.msra.mxu0 %v4758
      %4779 = vmatprep.subr.bf16.mxu0 0
      %4780 = vmatpush1.bf16.xpose.msra.mxu0 %v4761
      %4781 = vmatprep.subr.bf16.mxu0 0
      %4782 = vmatpush1.bf16.xpose.msra.mxu0 %v4764
      %4783 = vmatprep.subr.bf16.mxu0 0
      %4784 = vmatpush1.bf16.xpose.msra.mxu0 %v4767
      %4785 = vmatprep.subr.bf16.mxu0 0
      %4786 = vmatpush1.bf16.xpose.msra.mxu0 0
      %4787 = vmatprep.subr.bf16.mxu0 0
      %4788 = vmatpush1.bf16.xpose.msra.mxu0 0
      %4789 = vmatprep.subr.bf16.mxu0 0
      %4790 = vmatpush1.bf16.xpose.msra.mxu0 0
      %4791 = vmatprep.subr.bf16.mxu0 0
      %4792 = vmatpush1.bf16.xpose.msra.mxu0 0
      %4793 = vmatprep.subr.bf16.mxu0 0
      %4794 = vmatpush1.bf16.xpose.msra.mxu0 0
      %4795 = vmatprep.subr.bf16.mxu0 0
      %4796 = vmatpush1.bf16.xpose.msra.mxu0 0
      %4797 = vmatprep.subr.bf16.mxu0 0
      %4798 = vmatpush1.bf16.xpose.msra.mxu0 0
      %4799 = vmatprep.subr.bf16.mxu0 0
      %4800 = vmatpush1.bf16.xpose.msra.mxu0 0
      %4801 = vmatprep.mubr.bf16.mxu0 0
      %4802 = vmatmul.mubr.bf16.gmra.mrb[0].mxu0 %v4743
      %v4803 = vpop.f32.mrb[0].mxu0
      %v4804 = vadd.f32 %v4730, %v4803
      %v4805 = vpop.f32.mrb[0].mxu0
      %v4806 = vpop.f32.mrb[0].mxu0
      %v4807 = vadd.f32 %v4735, %v4806
      %v4808 = vpop.f32.mrb[0].mxu0
      %4809 = vdwg.mxu0
      %4810 = vst [vmem:[%s278] sm:$0xff] %v4804
      %4811 = vst [vmem:[%s278 + $0x8] sm:$0xff] %v4807
      %p4812 = scmp.lt.s32.totalorder %s18, 3
      %s4813 = scalar_select %p4812, %s18, 3
      %s4814 = smul.addr %s4813, 2
      %s4815 = smul.addr %s4814, 8
      %s4816 = scalar_lea.vmem %s7, %s4815
      // Predicated region
      $region57: #{up_forward.1} parent=47 // pred_check
        %p4817 = pneg %p188
      $region58: #{up_forward.1} parent=47 // pred_check_branch
        %4819 = sbr.rel (%p4817) target = $region60
      $region59: #{up_forward.1} parent=47 // pred_region
        _
      $region60: #{up_forward.1} parent=47 // pred_fallthru
        _
    $region48: #{up_forward.1} parent=5 // pred_fallthru
      _
    %p4820 = scmp.le.s32.totalorder 2, %s13
    // Predicated region
    $region61: #{up_forward.1} parent=5 // pred_check
      %p4821 = pneg %p4820
    $region62: #{up_forward.1} parent=5 // pred_check_branch
      %4823 = sbr.rel (%p4821) target = $region64
    $region63: #{up_forward.1} parent=5 // pred_region
      %s4824 = ssub.s32 %s13, 2
      // Predicated region
      $region65: #{up_forward.1} parent=63 // pred_check
        %p4825 = pneg %p194
      $region66: #{up_forward.1} parent=63 // pred_check_branch
        %4827 = sbr.rel (%p4825) target = $region68
      $region67: #{up_forward.1} parent=63 // pred_region
        %p4828 = scmp.lt.s32.totalorder %s19, 3
        %s4829 = scalar_select %p4828, %s19, 3
        %s4830 = smul.addr %s4829, 2
        %s4831 = smul.addr %s4830, 8
        %s4832 = scalar_lea.vmem %s7, %s4831
      $region68: #{up_forward.1} parent=63 // pred_fallthru
        _
    $region64: #{up_forward.1} parent=5 // pred_fallthru
      _
  $region6: #{up_forward.1} parent=0 // loop_footer
    %s17 = sadd.s32 1, %s13
  $region7: #{up_forward.1} parent=0 // loop_footer_branch
    %12 = sbr.rel target = $region3
  $region8: #{up_forward.1} parent=0 // loop_exit
    _

</llo_original>
